<compile_context>
chip_gen: v7x
topology: tpu7x:2x2x1
jax: 0.10.0
libtpu: 0.0.40
codegen_flags: <defaults>
</compile_context>

<pallas_src>
import functools

import jax
import jax.numpy as jnp
from jax.experimental import pallas as pl
from jax.experimental.pallas import tpu as pltpu

LN_EPS = 1e-5                    # PyTorch nn.LayerNorm default eps
MATMUL_DTYPE = jnp.bfloat16      # MXU operand / weight-stream dtype
VMEM_LIMIT_BYTES = 64 * 1024 * 1024   # raise scoped-VMEM cap (v5e default is 16 MiB)


# ------------------------------------------------------------- utilities

def _divisor_tile(dim, target, quantum):
    """Largest multiple of `quantum` that divides `dim` and is <= target.

    Falls back to the full dim (block dim == array dim is always legal).
    # TODO(synk): a prime-ish dim falls back to the full extent which could
    #             exceed the VMEM budget for very large models; add padding
    #             support if such shapes ever show up."""
    if dim <= target:
        return dim
    t = (target // quantum) * quantum
    while t >= quantum:
        if dim % t == 0:
            return t
        t -= quantum
    return dim


def _ln_f32(x, g, b):
    """LayerNorm over the last axis with f32 statistics (x already f32)."""
    mu = jnp.mean(x, axis=-1, keepdims=True)
    xc = x - mu
    var = jnp.mean(xc * xc, axis=-1, keepdims=True)
    inv = jax.lax.rsqrt(var + LN_EPS)
    return xc * inv * g + b


# ---------------------------------------------------------------- kernels

def _ln_mm_kernel(x_ref, g_ref, be_ref, w_ref, b_ref, o_ref, xln_ref):
    # o = LayerNorm(x) @ w + b ; x: (tm, D) f32, w: (D, tn) bf16.
    # LN(x) is computed once per M-tile (at j == 0) into a bf16 scratch and
    # reused for every N tile of the same row block.
    j = pl.program_id(1)

    @pl.when(j == 0)
    def _():
        x = x_ref[...].astype(jnp.float32)
        xln_ref[...] = _ln_f32(
            x, g_ref[...].astype(jnp.float32),
            be_ref[...].astype(jnp.float32)).astype(xln_ref.dtype)

    y = jnp.dot(xln_ref[...], w_ref[...], preferred_element_type=jnp.float32)
    y = y + b_ref[...].astype(jnp.float32)
    o_ref[...] = y.astype(o_ref.dtype)


def _attn_block_kernel(qkv_ref, res_ref, wo_ref, bo_ref, o_ref, ao_ref,
                       *, num_heads, scale):
    # One batch element per grid step.
    #   qkv: (1, S, 3D) bf16   res: (1, S, D) f32   wo: (D, D) bf16
    #   ao_ref: (S, D) bf16 VMEM scratch holding the concatenated head outputs
    # Computes  res + concat_h(softmax(q_h k_h^T / sqrt(Dh)) v_h) @ wo + bo
    # with a single D-deep out-projection matmul (full MXU depth).
    # TODO(synk): for very long sequences this keeps the full (S, 3D) block in
    #             VMEM; a flash-style K/V tiling would be needed there.
    D = qkv_ref.shape[2] // 3
    Dh = D // num_heads

    for h in range(num_heads):
        # Slice per-head q/k/v directly from the bf16 ref (no f32 copy).
        q = qkv_ref[0, :, h * Dh:(h + 1) * Dh]                        # (S, Dh)
        k = qkv_ref[0, :, D + h * Dh:D + (h + 1) * Dh]                # (S, Dh)
        v = qkv_ref[0, :, 2 * D + h * Dh:2 * D + (h + 1) * Dh]        # (S, Dh)

        # Fold the 1/sqrt(Dh) scale into q (S*Dh work instead of S*S).
        q_s = (q.astype(jnp.float32) * scale).astype(MATMUL_DTYPE)

        # scores: q @ k^T without an explicit transpose
        s = jax.lax.dot_general(
            q_s, k, (((1,), (1,)), ((), ())),
            preferred_element_type=jnp.float32)                       # (S, S)

        m = jnp.max(s, axis=-1, keepdims=True)
        p = jnp.exp(s - m)
        p = p * pl.reciprocal(jnp.sum(p, axis=-1, keepdims=True), approx=True)

        ao = jnp.dot(p.astype(MATMUL_DTYPE), v,
                     preferred_element_type=jnp.float32)              # (S, Dh)
        ao_ref[:, h * Dh:(h + 1) * Dh] = ao.astype(ao_ref.dtype)

    out = (res_ref[0].astype(jnp.float32)
           + bo_ref[...].astype(jnp.float32)
           + jnp.dot(ao_ref[...], wo_ref[...],
                     preferred_element_type=jnp.float32))
    o_ref[0] = out.astype(o_ref.dtype)


def _ln_ffn_kernel(x_ref, g_ref, be_ref, w1_ref, b1_ref, w2_ref, b2_ref,
                   lnf_g_ref, lnf_b_ref, o_ref, xln_ref, acc_ref, *, final_ln):
    # Fused pre-norm FFN with residual, streaming the dff axis (grid axis 1):
    #   acc = x + b2 + sum_f relu(LN(x) @ w1[:, f] + b1[f]) @ w2[f, :]
    # If `final_ln`, the final encoder LayerNorm is applied in the epilogue.
    f = pl.program_id(1)

    @pl.when(f == 0)
    def _():
        x = x_ref[...].astype(jnp.float32)
        xln_ref[...] = _ln_f32(
            x, g_ref[...].astype(jnp.float32),
            be_ref[...].astype(jnp.float32)).astype(xln_ref.dtype)
        acc_ref[...] = x + b2_ref[...].astype(jnp.float32)   # residual + bias2

    h = jnp.dot(xln_ref[...], w1_ref[...], preferred_element_type=jnp.float32)
    h = jnp.maximum(h + b1_ref[...].astype(jnp.float32), 0.0)
    acc_ref[...] += jnp.dot(h.astype(MATMUL_DTYPE), w2_ref[...],
                            preferred_element_type=jnp.float32)

    @pl.when(f == pl.num_programs(1) - 1)
    def _():
        y = acc_ref[...]
        if final_ln:
            y = _ln_f32(y, lnf_g_ref[...].astype(jnp.float32),
                        lnf_b_ref[...].astype(jnp.float32))
        o_ref[...] = y.astype(o_ref.dtype)


# --------------------------------------------------------------- wrappers

def ln_matmul(x2d, g, be, w, b, *, out_dtype, tm_target=512, tn_target=512):
    """o = LayerNorm(x2d) @ w + b, tiled over (M, N); LN reused across N."""
    M, D = x2d.shape
    N = w.shape[1]
    tm = _divisor_tile(M, tm_target, 8)
    tn = _divisor_tile(N, tn_target, 128)
    return pl.pallas_call(
        _ln_mm_kernel,
        out_shape=jax.ShapeDtypeStruct((M, N), out_dtype),
        grid=(M // tm, N // tn),
        in_specs=[
            pl.BlockSpec((tm, D), lambda i, j: (i, 0)),
            pl.BlockSpec((1, D), lambda i, j: (0, 0)),
            pl.BlockSpec((1, D), lambda i, j: (0, 0)),
            pl.BlockSpec((D, tn), lambda i, j: (0, j)),
            pl.BlockSpec((1, tn), lambda i, j: (0, j)),
        ],
        out_specs=pl.BlockSpec((tm, tn), lambda i, j: (i, j)),
        scratch_shapes=[pltpu.VMEM((tm, D), MATMUL_DTYPE)],   # LN(x), bf16
        compiler_params=pltpu.CompilerParams(
            dimension_semantics=("parallel", "arbitrary"),
            vmem_limit_bytes=VMEM_LIMIT_BYTES),
    )(x2d, g, be, w, b)


def attention_block(qkv, res, wo, bo, num_heads):
    """res + MHA(qkv) @ wo + bo, grid over batch, lane-dense (1,S,*) blocks."""
    B, S, D3 = qkv.shape
    D = D3 // 3
    Dh = D // num_heads
    scale = 1.0 / float(Dh) ** 0.5
    return pl.pallas_call(
        functools.partial(_attn_block_kernel, num_heads=num_heads, scale=scale),
        out_shape=jax.ShapeDtypeStruct((B, S, D), res.dtype),
        grid=(B,),
        in_specs=[
            pl.BlockSpec((1, S, D3), lambda b: (b, 0, 0)),
            pl.BlockSpec((1, S, D), lambda b: (b, 0, 0)),
            pl.BlockSpec((D, D), lambda b: (0, 0)),
            pl.BlockSpec((1, D), lambda b: (0, 0)),
        ],
        out_specs=pl.BlockSpec((1, S, D), lambda b: (b, 0, 0)),
        scratch_shapes=[pltpu.VMEM((S, D), MATMUL_DTYPE)],    # concat head outs
        compiler_params=pltpu.CompilerParams(
            dimension_semantics=("parallel",),
            vmem_limit_bytes=VMEM_LIMIT_BYTES),
    )(qkv, res, wo, bo)


def ln_ffn_residual(x2d, g, be, w1, b1, w2, b2, lnf_g, lnf_b, *, final_ln,
                    tm_target=512, tf_target=512):
    """x2d + Linear2(ReLU(Linear1(LayerNorm(x2d)))) [+ final LayerNorm]."""
    M, D = x2d.shape
    F = w1.shape[1]
    tm = _divisor_tile(M, tm_target, 8)
    tf = _divisor_tile(F, tf_target, 128)
    return pl.pallas_call(
        functools.partial(_ln_ffn_kernel, final_ln=final_ln),
        out_shape=jax.ShapeDtypeStruct((M, D), x2d.dtype),
        grid=(M // tm, F // tf),
        in_specs=[
            pl.BlockSpec((tm, D), lambda i, f: (i, 0)),
            pl.BlockSpec((1, D), lambda i, f: (0, 0)),
            pl.BlockSpec((1, D), lambda i, f: (0, 0)),
            pl.BlockSpec((D, tf), lambda i, f: (0, f)),
            pl.BlockSpec((1, tf), lambda i, f: (0, f)),
            pl.BlockSpec((tf, D), lambda i, f: (f, 0)),
            pl.BlockSpec((1, D), lambda i, f: (0, 0)),
            pl.BlockSpec((1, D), lambda i, f: (0, 0)),
            pl.BlockSpec((1, D), lambda i, f: (0, 0)),
        ],
        out_specs=pl.BlockSpec((tm, D), lambda i, f: (i, 0)),
        scratch_shapes=[pltpu.VMEM((tm, D), MATMUL_DTYPE),    # LN(x), bf16
                        pltpu.VMEM((tm, D), jnp.float32)],    # f32 accumulator
        compiler_params=pltpu.CompilerParams(
            dimension_semantics=("parallel", "arbitrary"),
            vmem_limit_bytes=VMEM_LIMIT_BYTES),
    )(x2d, g, be, w1, b1, w2, b2, lnf_g, lnf_b)


# ---------------------------------------------------------- parameter init

def init_encoder_params(key, depth, token_dim):
    d, dff = token_dim, 4 * token_dim
    layers = []
    for _ in range(depth):
        keys = jax.random.split(key, 5)
        key = keys[-1]

        def w(k, shape):
            # weights streamed from HBM in bf16 (MXU operand dtype)
            return (jax.random.normal(k, shape, jnp.float32) * 0.02).astype(MATMUL_DTYPE)

        layers.append(dict(
            ln1_g=jnp.ones((1, d), jnp.float32), ln1_b=jnp.zeros((1, d), jnp.float32),
            # fused q|k|v projection weight / bias
            wqkv=w(keys[0], (d, 3 * d)), bqkv=jnp.zeros((1, 3 * d), jnp.float32),
            wo=w(keys[1], (d, d)), bo=jnp.zeros((1, d), jnp.float32),
            ln2_g=jnp.ones((1, d), jnp.float32), ln2_b=jnp.zeros((1, d), jnp.float32),
            w1=w(keys[2], (d, dff)), b1=jnp.zeros((1, dff), jnp.float32),
            w2=w(keys[3], (dff, d)), b2=jnp.zeros((1, d), jnp.float32),
        ))
    return dict(
        layers=layers,
        lnf_g=jnp.ones((1, token_dim), jnp.float32),
        lnf_b=jnp.zeros((1, token_dim), jnp.float32),
    )


# --------------------------------------------------------------- forward

def encoder_forward(x, params, num_heads, pos_embs=None):
    """Matches Encoder.forward with reg_tokens=0, padding_mask=None (eval mode)."""
    # TODO(synk): key-padding-mask / reg-token concatenation path not implemented
    #             (module defaults reg_tokens=0 and padding_mask=None).
    if pos_embs is not None:
        x = x + pos_embs
    B, S, D = x.shape
    assert D % num_heads == 0, "token_dim must be divisible by num_heads"

    layers = params["layers"]
    n_layers = len(layers)

    x2 = x.reshape(B * S, D)                       # f32 residual stream
    for idx, lp in enumerate(layers):
        # --- self-attention block (pre-norm): 2 fused pallas_calls ---
        qkv = ln_matmul(x2, lp["ln1_g"], lp["ln1_b"], lp["wqkv"], lp["bqkv"],
                        out_dtype=MATMUL_DTYPE)    # bf16 intermediate in HBM
        x3 = attention_block(qkv.reshape(B, S, 3 * D), x2.reshape(B, S, D),
                             lp["wo"], lp["bo"], num_heads)
        x2 = x3.reshape(B * S, D)
        # --- feed-forward block (pre-norm): 1 fused pallas_call ---
        # (final encoder LayerNorm fused into the last layer's epilogue)
        x2 = ln_ffn_residual(x2, lp["ln2_g"], lp["ln2_b"],
                             lp["w1"], lp["b1"], lp["w2"], lp["b2"],
                             params["lnf_g"], params["lnf_b"],
                             final_ln=(idx == n_layers - 1))

    return x2.reshape(B, S, D)


# ------------------------------------------------------------------ main

if __name__ == "__main__":
    # Small, module-consistent shapes: depth=2, token_dim=32, heads=4 -> Dh=8
    depth, token_dim, num_heads = 2, 32, 4
    B, S = 2, 8

    root = jax.random.PRNGKey(0)
    k_x, k_pos, k_params = jax.random.split(root, 3)

    x = jax.random.normal(k_x, (B, S, token_dim), jnp.float32)
    pos_embs = jax.random.normal(k_pos, (B, S, token_dim), jnp.float32)
    params = init_encoder_params(k_params, depth, token_dim)

    fwd = jax.jit(functools.partial(encoder_forward, num_heads=num_heads))
    feats = jax.block_until_ready(fwd(x, params, pos_embs=pos_embs))

    assert feats.shape == (B, S, token_dim) and feats.dtype == jnp.float32
    assert bool(jnp.all(jnp.isfinite(feats)))
    print("KERNEL_OK")
</pallas_src>

<mosaic_0001>
module attributes {stable_mosaic.version = 11 : i64} {
  func.func @_ln_mm_kernel(%arg0: i32, %arg1: i32, %arg2: memref<16x32xf32, #tpu.memory_space<vmem>>, %arg3: memref<1x32xf32, #tpu.memory_space<vmem>>, %arg4: memref<1x32xf32, #tpu.memory_space<vmem>>, %arg5: memref<32x96xbf16, #tpu.memory_space<vmem>>, %arg6: memref<1x96xf32, #tpu.memory_space<vmem>>, %arg7: memref<16x96xbf16, #tpu.memory_space<vmem>>, %arg8: memref<16x32xbf16, #tpu.memory_space<vmem>>) attributes {dimension_semantics = [#tpu.dimension_semantics<parallel>, #tpu.dimension_semantics<arbitrary>], iteration_bounds = array<i64: 1, 1>, scalar_prefetch = 0 : i64, scratch_operands = 1 : i64, tpu.core_type = #tpu.core_type<tc>, window_params = [{transform_indices = @transform_0, window_bounds = array<i64: 16, 32>}, {pipeline_mode = #tpu.pipeline_mode<synchronous>, transform_indices = @transform_1, window_bounds = array<i64: 1, 32>}, {pipeline_mode = #tpu.pipeline_mode<synchronous>, transform_indices = @transform_2, window_bounds = array<i64: 1, 32>}, {transform_indices = @transform_3, window_bounds = array<i64: 32, 96>}, {transform_indices = @transform_4, window_bounds = array<i64: 1, 96>}, {transform_indices = @transform_5, window_bounds = array<i64: 16, 96>}]} {
    %c0_i32 = arith.constant 0 : i32
    %0 = arith.cmpi eq, %arg1, %c0_i32 : i32
    %1 = arith.extui %0 : i1 to i32
    %c0_i32_0 = arith.constant 0 : i32
    %2 = arith.cmpi ne, %1, %c0_i32_0 : i32
    scf.if %2 {
      %c0_8 = arith.constant 0 : index
      %c0_9 = arith.constant 0 : index
      %11 = vector.load %arg2[%c0_8, %c0_9] : memref<16x32xf32, #tpu.memory_space<vmem>>, vector<16x32xf32>
      %c0_10 = arith.constant 0 : index
      %c0_11 = arith.constant 0 : index
      %12 = vector.load %arg3[%c0_10, %c0_11] : memref<1x32xf32, #tpu.memory_space<vmem>>, vector<1x32xf32>
      %c0_12 = arith.constant 0 : index
      %c0_13 = arith.constant 0 : index
      %13 = vector.load %arg4[%c0_12, %c0_13] : memref<1x32xf32, #tpu.memory_space<vmem>>, vector<1x32xf32>
      %cst_14 = arith.constant dense<0.000000e+00> : vector<16xf32>
      %14 = vector.multi_reduction <add>, %11, %cst_14 [1] : vector<16x32xf32> to vector<16xf32>
      %15 = vector.shape_cast %14 : vector<16xf32> to vector<16x1xf32>
      %cst_15 = arith.constant 3.200000e+01 : f32
      %16 = vector.broadcast %cst_15 : f32 to vector<16x1xf32>
      %17 = arith.divf %15, %16 : vector<16x1xf32>
      %18 = vector.broadcast %17 : vector<16x1xf32> to vector<16x32xf32>
      %19 = arith.subf %11, %18 : vector<16x32xf32>
      %20 = arith.mulf %19, %19 : vector<16x32xf32>
      %cst_16 = arith.constant dense<0.000000e+00> : vector<16xf32>
      %21 = vector.multi_reduction <add>, %20, %cst_16 [1] : vector<16x32xf32> to vector<16xf32>
      %22 = vector.shape_cast %21 : vector<16xf32> to vector<16x1xf32>
      %cst_17 = arith.constant 3.200000e+01 : f32
      %23 = vector.broadcast %cst_17 : f32 to vector<16x1xf32>
      %24 = arith.divf %22, %23 : vector<16x1xf32>
      %cst_18 = arith.constant 9.99999974E-6 : f32
      %25 = vector.broadcast %cst_18 : f32 to vector<16x1xf32>
      %26 = arith.addf %24, %25 : vector<16x1xf32>
      %27 = math.rsqrt %26 : vector<16x1xf32>
      %28 = vector.broadcast %27 : vector<16x1xf32> to vector<16x32xf32>
      %29 = arith.mulf %19, %28 : vector<16x32xf32>
      %30 = vector.broadcast %12 : vector<1x32xf32> to vector<16x32xf32>
      %31 = arith.mulf %29, %30 : vector<16x32xf32>
      %32 = vector.broadcast %13 : vector<1x32xf32> to vector<16x32xf32>
      %33 = arith.addf %31, %32 : vector<16x32xf32>
      %34 = arith.truncf %33 : vector<16x32xf32> to vector<16x32xbf16>
      %c0_19 = arith.constant 0 : index
      %c0_20 = arith.constant 0 : index
      %35 = vector.load %arg8[%c0_19, %c0_20] : memref<16x32xbf16, #tpu.memory_space<vmem>>, vector<16x32xbf16>
      tpu.vector_store %arg8[%c0_19, %c0_20], %34 {strides = array<i32>} : memref<16x32xbf16, #tpu.memory_space<vmem>>, vector<16x32xbf16>,
    } else {
    }
    %c0 = arith.constant 0 : index
    %c0_1 = arith.constant 0 : index
    %3 = vector.load %arg8[%c0, %c0_1] : memref<16x32xbf16, #tpu.memory_space<vmem>>, vector<16x32xbf16>
    %c0_2 = arith.constant 0 : index
    %c0_3 = arith.constant 0 : index
    %4 = vector.load %arg5[%c0_2, %c0_3] : memref<32x96xbf16, #tpu.memory_space<vmem>>, vector<32x96xbf16>
    %cst = arith.constant dense<0.000000e+00> : vector<16x96xf32>
    %5 = tpu.matmul %3, %4, %cst {dimension_numbers = #tpu.dot_dimension_numbers<[1], [0], [0], [1], [0, 0, 1, 1], [], []>} : vector<16x32xbf16>, vector<32x96xbf16>, vector<16x96xf32> -> vector<16x96xf32>
    %c0_4 = arith.constant 0 : index
    %c0_5 = arith.constant 0 : index
    %6 = vector.load %arg6[%c0_4, %c0_5] : memref<1x96xf32, #tpu.memory_space<vmem>>, vector<1x96xf32>
    %7 = vector.broadcast %6 : vector<1x96xf32> to vector<16x96xf32>
    %8 = arith.addf %5, %7 : vector<16x96xf32>
    %9 = arith.truncf %8 : vector<16x96xf32> to vector<16x96xbf16>
    %c0_6 = arith.constant 0 : index
    %c0_7 = arith.constant 0 : index
    %10 = vector.load %arg7[%c0_6, %c0_7] : memref<16x96xbf16, #tpu.memory_space<vmem>>, vector<16x96xbf16>
    tpu.vector_store %arg7[%c0_6, %c0_7], %9 {strides = array<i32>} : memref<16x96xbf16, #tpu.memory_space<vmem>>, vector<16x96xbf16>,
    return
  }
  func.func @transform_0(%arg0: i32, %arg1: i32) -> (i32, i32) {
    %c0_i32 = arith.constant 0 : i32
    %c0_i32_0 = arith.constant 0 : i32
    return %arg0, %c0_i32 : i32, i32
  }
  func.func @transform_1(%arg0: i32, %arg1: i32) -> (i32, i32) {
    %c0_i32 = arith.constant 0 : i32
    %c0_i32_0 = arith.constant 0 : i32
    %c0_i32_1 = arith.constant 0 : i32
    return %c0_i32, %c0_i32_0 : i32, i32
  }
  func.func @transform_2(%arg0: i32, %arg1: i32) -> (i32, i32) {
    %c0_i32 = arith.constant 0 : i32
    %c0_i32_0 = arith.constant 0 : i32
    %c0_i32_1 = arith.constant 0 : i32
    return %c0_i32, %c0_i32_0 : i32, i32
  }
  func.func @transform_3(%arg0: i32, %arg1: i32) -> (i32, i32) {
    %c0_i32 = arith.constant 0 : i32
    %c0_i32_0 = arith.constant 0 : i32
    return %c0_i32, %arg1 : i32, i32
  }
  func.func @transform_4(%arg0: i32, %arg1: i32) -> (i32, i32) {
    %c0_i32 = arith.constant 0 : i32
    %c0_i32_0 = arith.constant 0 : i32
    return %c0_i32, %arg1 : i32, i32
  }
  func.func @transform_5(%arg0: i32, %arg1: i32) -> (i32, i32) {
    %c0_i32 = arith.constant 0 : i32
    return %arg0, %arg1 : i32, i32
  }
}

module attributes {stable_mosaic.version = 11 : i64} {
  func.func @_attn_block_kernel(%arg0: i32, %arg1: memref<1x8x96xbf16, #tpu.memory_space<vmem>>, %arg2: memref<1x8x32xf32, #tpu.memory_space<vmem>>, %arg3: memref<32x32xbf16, #tpu.memory_space<vmem>>, %arg4: memref<1x32xf32, #tpu.memory_space<vmem>>, %arg5: memref<1x8x32xf32, #tpu.memory_space<vmem>>, %arg6: memref<8x32xbf16, #tpu.memory_space<vmem>>) attributes {dimension_semantics = [#tpu.dimension_semantics<parallel>], iteration_bounds = array<i64: 2>, scalar_prefetch = 0 : i64, scratch_operands = 1 : i64, tpu.core_type = #tpu.core_type<tc>, window_params = [{transform_indices = @transform_0, window_bounds = array<i64: 1, 8, 96>}, {transform_indices = @transform_1, window_bounds = array<i64: 1, 8, 32>}, {pipeline_mode = #tpu.pipeline_mode<synchronous>, transform_indices = @transform_2, window_bounds = array<i64: 32, 32>}, {pipeline_mode = #tpu.pipeline_mode<synchronous>, transform_indices = @transform_3, window_bounds = array<i64: 1, 32>}, {transform_indices = @transform_4, window_bounds = array<i64: 1, 8, 32>}]} {
    %c0 = arith.constant 0 : index
    %c0_0 = arith.constant 0 : index
    %c0_1 = arith.constant 0 : index
    %0 = vector.load %arg1[%c0, %c0_0, %c0_1] : memref<1x8x96xbf16, #tpu.memory_space<vmem>>, vector<1x8x8xbf16>
    %1 = vector.shape_cast %0 : vector<1x8x8xbf16> to vector<8x8xbf16>
    %c0_2 = arith.constant 0 : index
    %c0_3 = arith.constant 0 : index
    %c32 = arith.constant 32 : index
    %2 = vector.load %arg1[%c0_2, %c0_3, %c32] : memref<1x8x96xbf16, #tpu.memory_space<vmem>>, vector<1x8x8xbf16>
    %3 = vector.shape_cast %2 : vector<1x8x8xbf16> to vector<8x8xbf16>
    %c0_4 = arith.constant 0 : index
    %c0_5 = arith.constant 0 : index
    %c64 = arith.constant 64 : index
    %4 = vector.load %arg1[%c0_4, %c0_5, %c64] : memref<1x8x96xbf16, #tpu.memory_space<vmem>>, vector<1x8x8xbf16>
    %5 = vector.shape_cast %4 : vector<1x8x8xbf16> to vector<8x8xbf16>
    %6 = arith.extf %1 : vector<8x8xbf16> to vector<8x8xf32>
    %cst = arith.constant 0.353553385 : f32
    %7 = vector.broadcast %cst : f32 to vector<8x8xf32>
    %8 = arith.mulf %6, %7 : vector<8x8xf32>
    %9 = arith.truncf %8 : vector<8x8xf32> to vector<8x8xbf16>
    %cst_6 = arith.constant dense<0.000000e+00> : vector<8x8xf32>
    %10 = tpu.matmul %9, %3, %cst_6 {dimension_numbers = #tpu.dot_dimension_numbers<[1], [1], [0], [0], [0, 0, 1, 0], [], []>} : vector<8x8xbf16>, vector<8x8xbf16>, vector<8x8xf32> -> vector<8x8xf32>
    %cst_7 = arith.constant dense<0xFF800000> : vector<8xf32>
    %11 = vector.multi_reduction <maximumf>, %10, %cst_7 [1] : vector<8x8xf32> to vector<8xf32>
    %12 = vector.shape_cast %11 : vector<8xf32> to vector<8x1xf32>
    %13 = vector.broadcast %12 : vector<8x1xf32> to vector<8x8xf32>
    %14 = arith.subf %10, %13 : vector<8x8xf32>
    %15 = math.exp %14 : vector<8x8xf32>
    %cst_8 = arith.constant dense<0.000000e+00> : vector<8xf32>
    %16 = vector.multi_reduction <add>, %15, %cst_8 [1] : vector<8x8xf32> to vector<8xf32>
    %17 = vector.shape_cast %16 : vector<8xf32> to vector<8x1xf32>
    %18 = tpu.reciprocal %17 {approx = true} : vector<8x1xf32> -> vector<8x1xf32>
    %19 = vector.broadcast %18 : vector<8x1xf32> to vector<8x8xf32>
    %20 = arith.mulf %15, %19 : vector<8x8xf32>
    %21 = arith.truncf %20 : vector<8x8xf32> to vector<8x8xbf16>
    %cst_9 = arith.constant dense<0.000000e+00> : vector<8x8xf32>
    %22 = tpu.matmul %21, %5, %cst_9 {dimension_numbers = #tpu.dot_dimension_numbers<[1], [0], [0], [1], [0, 0, 1, 1], [], []>} : vector<8x8xbf16>, vector<8x8xbf16>, vector<8x8xf32> -> vector<8x8xf32>
    %23 = arith.truncf %22 : vector<8x8xf32> to vector<8x8xbf16>
    %c0_10 = arith.constant 0 : index
    %c0_11 = arith.constant 0 : index
    %24 = vector.load %arg6[%c0_10, %c0_11] : memref<8x32xbf16, #tpu.memory_space<vmem>>, vector<8x8xbf16>
    tpu.vector_store %arg6[%c0_10, %c0_11], %23 {strides = array<i32>} : memref<8x32xbf16, #tpu.memory_space<vmem>>, vector<8x8xbf16>,
    %c0_12 = arith.constant 0 : index
    %c0_13 = arith.constant 0 : index
    %c8 = arith.constant 8 : index
    %25 = vector.load %arg1[%c0_12, %c0_13, %c8] : memref<1x8x96xbf16, #tpu.memory_space<vmem>>, vector<1x8x8xbf16>
    %26 = vector.shape_cast %25 : vector<1x8x8xbf16> to vector<8x8xbf16>
    %c0_14 = arith.constant 0 : index
    %c0_15 = arith.constant 0 : index
    %c40 = arith.constant 40 : index
    %27 = vector.load %arg1[%c0_14, %c0_15, %c40] : memref<1x8x96xbf16, #tpu.memory_space<vmem>>, vector<1x8x8xbf16>
    %28 = vector.shape_cast %27 : vector<1x8x8xbf16> to vector<8x8xbf16>
    %c0_16 = arith.constant 0 : index
    %c0_17 = arith.constant 0 : index
    %c72 = arith.constant 72 : index
    %29 = vector.load %arg1[%c0_16, %c0_17, %c72] : memref<1x8x96xbf16, #tpu.memory_space<vmem>>, vector<1x8x8xbf16>
    %30 = vector.shape_cast %29 : vector<1x8x8xbf16> to vector<8x8xbf16>
    %31 = arith.extf %26 : vector<8x8xbf16> to vector<8x8xf32>
    %cst_18 = arith.constant 0.353553385 : f32
    %32 = vector.broadcast %cst_18 : f32 to vector<8x8xf32>
    %33 = arith.mulf %31, %32 : vector<8x8xf32>
    %34 = arith.truncf %33 : vector<8x8xf32> to vector<8x8xbf16>
    %cst_19 = arith.constant dense<0.000000e+00> : vector<8x8xf32>
    %35 = tpu.matmul %34, %28, %cst_19 {dimension_numbers = #tpu.dot_dimension_numbers<[1], [1], [0], [0], [0, 0, 1, 0], [], []>} : vector<8x8xbf16>, vector<8x8xbf16>, vector<8x8xf32> -> vector<8x8xf32>
    %cst_20 = arith.constant dense<0xFF800000> : vector<8xf32>
    %36 = vector.multi_reduction <maximumf>, %35, %cst_20 [1] : vector<8x8xf32> to vector<8xf32>
    %37 = vector.shape_cast %36 : vector<8xf32> to vector<8x1xf32>
    %38 = vector.broadcast %37 : vector<8x1xf32> to vector<8x8xf32>
    %39 = arith.subf %35, %38 : vector<8x8xf32>
    %40 = math.exp %39 : vector<8x8xf32>
    %cst_21 = arith.constant dense<0.000000e+00> : vector<8xf32>
    %41 = vector.multi_reduction <add>, %40, %cst_21 [1] : vector<8x8xf32> to vector<8xf32>
    %42 = vector.shape_cast %41 : vector<8xf32> to vector<8x1xf32>
    %43 = tpu.reciprocal %42 {approx = true} : vector<8x1xf32> -> vector<8x1xf32>
    %44 = vector.broadcast %43 : vector<8x1xf32> to vector<8x8xf32>
    %45 = arith.mulf %40, %44 : vector<8x8xf32>
    %46 = arith.truncf %45 : vector<8x8xf32> to vector<8x8xbf16>
    %cst_22 = arith.constant dense<0.000000e+00> : vector<8x8xf32>
    %47 = tpu.matmul %46, %30, %cst_22 {dimension_numbers = #tpu.dot_dimension_numbers<[1], [0], [0], [1], [0, 0, 1, 1], [], []>} : vector<8x8xbf16>, vector<8x8xbf16>, vector<8x8xf32> -> vector<8x8xf32>
    %48 = arith.truncf %47 : vector<8x8xf32> to vector<8x8xbf16>
    %c0_23 = arith.constant 0 : index
    %c8_24 = arith.constant 8 : index
    %49 = vector.load %arg6[%c0_23, %c8_24] : memref<8x32xbf16, #tpu.memory_space<vmem>>, vector<8x8xbf16>
    tpu.vector_store %arg6[%c0_23, %c8_24], %48 {strides = array<i32>} : memref<8x32xbf16, #tpu.memory_space<vmem>>, vector<8x8xbf16>,
    %c0_25 = arith.constant 0 : index
    %c0_26 = arith.constant 0 : index
    %c16 = arith.constant 16 : index
    %50 = vector.load %arg1[%c0_25, %c0_26, %c16] : memref<1x8x96xbf16, #tpu.memory_space<vmem>>, vector<1x8x8xbf16>
    %51 = vector.shape_cast %50 : vector<1x8x8xbf16> to vector<8x8xbf16>
    %c0_27 = arith.constant 0 : index
    %c0_28 = arith.constant 0 : index
    %c48 = arith.constant 48 : index
    %52 = vector.load %arg1[%c0_27, %c0_28, %c48] : memref<1x8x96xbf16, #tpu.memory_space<vmem>>, vector<1x8x8xbf16>
    %53 = vector.shape_cast %52 : vector<1x8x8xbf16> to vector<8x8xbf16>
    %c0_29 = arith.constant 0 : index
    %c0_30 = arith.constant 0 : index
    %c80 = arith.constant 80 : index
    %54 = vector.load %arg1[%c0_29, %c0_30, %c80] : memref<1x8x96xbf16, #tpu.memory_space<vmem>>, vector<1x8x8xbf16>
    %55 = vector.shape_cast %54 : vector<1x8x8xbf16> to vector<8x8xbf16>
    %56 = arith.extf %51 : vector<8x8xbf16> to vector<8x8xf32>
    %cst_31 = arith.constant 0.353553385 : f32
    %57 = vector.broadcast %cst_31 : f32 to vector<8x8xf32>
    %58 = arith.mulf %56, %57 : vector<8x8xf32>
    %59 = arith.truncf %58 : vector<8x8xf32> to vector<8x8xbf16>
    %cst_32 = arith.constant dense<0.000000e+00> : vector<8x8xf32>
    %60 = tpu.matmul %59, %53, %cst_32 {dimension_numbers = #tpu.dot_dimension_numbers<[1], [1], [0], [0], [0, 0, 1, 0], [], []>} : vector<8x8xbf16>, vector<8x8xbf16>, vector<8x8xf32> -> vector<8x8xf32>
    %cst_33 = arith.constant dense<0xFF800000> : vector<8xf32>
    %61 = vector.multi_reduction <maximumf>, %60, %cst_33 [1] : vector<8x8xf32> to vector<8xf32>
    %62 = vector.shape_cast %61 : vector<8xf32> to vector<8x1xf32>
    %63 = vector.broadcast %62 : vector<8x1xf32> to vector<8x8xf32>
    %64 = arith.subf %60, %63 : vector<8x8xf32>
    %65 = math.exp %64 : vector<8x8xf32>
    %cst_34 = arith.constant dense<0.000000e+00> : vector<8xf32>
    %66 = vector.multi_reduction <add>, %65, %cst_34 [1] : vector<8x8xf32> to vector<8xf32>
    %67 = vector.shape_cast %66 : vector<8xf32> to vector<8x1xf32>
    %68 = tpu.reciprocal %67 {approx = true} : vector<8x1xf32> -> vector<8x1xf32>
    %69 = vector.broadcast %68 : vector<8x1xf32> to vector<8x8xf32>
    %70 = arith.mulf %65, %69 : vector<8x8xf32>
    %71 = arith.truncf %70 : vector<8x8xf32> to vector<8x8xbf16>
    %cst_35 = arith.constant dense<0.000000e+00> : vector<8x8xf32>
    %72 = tpu.matmul %71, %55, %cst_35 {dimension_numbers = #tpu.dot_dimension_numbers<[1], [0], [0], [1], [0, 0, 1, 1], [], []>} : vector<8x8xbf16>, vector<8x8xbf16>, vector<8x8xf32> -> vector<8x8xf32>
    %73 = arith.truncf %72 : vector<8x8xf32> to vector<8x8xbf16>
    %c0_36 = arith.constant 0 : index
    %c16_37 = arith.constant 16 : index
    %74 = vector.load %arg6[%c0_36, %c16_37] : memref<8x32xbf16, #tpu.memory_space<vmem>>, vector<8x8xbf16>
    tpu.vector_store %arg6[%c0_36, %c16_37], %73 {strides = array<i32>} : memref<8x32xbf16, #tpu.memory_space<vmem>>, vector<8x8xbf16>,
    %c0_38 = arith.constant 0 : index
    %c0_39 = arith.constant 0 : index
    %c24 = arith.constant 24 : index
    %75 = vector.load %arg1[%c0_38, %c0_39, %c24] : memref<1x8x96xbf16, #tpu.memory_space<vmem>>, vector<1x8x8xbf16>
    %76 = vector.shape_cast %75 : vector<1x8x8xbf16> to vector<8x8xbf16>
    %c0_40 = arith.constant 0 : index
    %c0_41 = arith.constant 0 : index
    %c56 = arith.constant 56 : index
    %77 = vector.load %arg1[%c0_40, %c0_41, %c56] : memref<1x8x96xbf16, #tpu.memory_space<vmem>>, vector<1x8x8xbf16>
    %78 = vector.shape_cast %77 : vector<1x8x8xbf16> to vector<8x8xbf16>
    %c0_42 = arith.constant 0 : index
    %c0_43 = arith.constant 0 : index
    %c88 = arith.constant 88 : index
    %79 = vector.load %arg1[%c0_42, %c0_43, %c88] : memref<1x8x96xbf16, #tpu.memory_space<vmem>>, vector<1x8x8xbf16>
    %80 = vector.shape_cast %79 : vector<1x8x8xbf16> to vector<8x8xbf16>
    %81 = arith.extf %76 : vector<8x8xbf16> to vector<8x8xf32>
    %cst_44 = arith.constant 0.353553385 : f32
    %82 = vector.broadcast %cst_44 : f32 to vector<8x8xf32>
    %83 = arith.mulf %81, %82 : vector<8x8xf32>
    %84 = arith.truncf %83 : vector<8x8xf32> to vector<8x8xbf16>
    %cst_45 = arith.constant dense<0.000000e+00> : vector<8x8xf32>
    %85 = tpu.matmul %84, %78, %cst_45 {dimension_numbers = #tpu.dot_dimension_numbers<[1], [1], [0], [0], [0, 0, 1, 0], [], []>} : vector<8x8xbf16>, vector<8x8xbf16>, vector<8x8xf32> -> vector<8x8xf32>
    %cst_46 = arith.constant dense<0xFF800000> : vector<8xf32>
    %86 = vector.multi_reduction <maximumf>, %85, %cst_46 [1] : vector<8x8xf32> to vector<8xf32>
    %87 = vector.shape_cast %86 : vector<8xf32> to vector<8x1xf32>
    %88 = vector.broadcast %87 : vector<8x1xf32> to vector<8x8xf32>
    %89 = arith.subf %85, %88 : vector<8x8xf32>
    %90 = math.exp %89 : vector<8x8xf32>
    %cst_47 = arith.constant dense<0.000000e+00> : vector<8xf32>
    %91 = vector.multi_reduction <add>, %90, %cst_47 [1] : vector<8x8xf32> to vector<8xf32>
    %92 = vector.shape_cast %91 : vector<8xf32> to vector<8x1xf32>
    %93 = tpu.reciprocal %92 {approx = true} : vector<8x1xf32> -> vector<8x1xf32>
    %94 = vector.broadcast %93 : vector<8x1xf32> to vector<8x8xf32>
    %95 = arith.mulf %90, %94 : vector<8x8xf32>
    %96 = arith.truncf %95 : vector<8x8xf32> to vector<8x8xbf16>
    %cst_48 = arith.constant dense<0.000000e+00> : vector<8x8xf32>
    %97 = tpu.matmul %96, %80, %cst_48 {dimension_numbers = #tpu.dot_dimension_numbers<[1], [0], [0], [1], [0, 0, 1, 1], [], []>} : vector<8x8xbf16>, vector<8x8xbf16>, vector<8x8xf32> -> vector<8x8xf32>
    %98 = arith.truncf %97 : vector<8x8xf32> to vector<8x8xbf16>
    %c0_49 = arith.constant 0 : index
    %c24_50 = arith.constant 24 : index
    %99 = vector.load %arg6[%c0_49, %c24_50] : memref<8x32xbf16, #tpu.memory_space<vmem>>, vector<8x8xbf16>
    tpu.vector_store %arg6[%c0_49, %c24_50], %98 {strides = array<i32>} : memref<8x32xbf16, #tpu.memory_space<vmem>>, vector<8x8xbf16>,
    %c0_51 = arith.constant 0 : index
    %c0_52 = arith.constant 0 : index
    %c0_53 = arith.constant 0 : index
    %100 = vector.load %arg2[%c0_51, %c0_52, %c0_53] : memref<1x8x32xf32, #tpu.memory_space<vmem>>, vector<1x8x32xf32>
    %101 = vector.shape_cast %100 : vector<1x8x32xf32> to vector<8x32xf32>
    %c0_54 = arith.constant 0 : index
    %c0_55 = arith.constant 0 : index
    %102 = vector.load %arg4[%c0_54, %c0_55] : memref<1x32xf32, #tpu.memory_space<vmem>>, vector<1x32xf32>
    %103 = vector.broadcast %102 : vector<1x32xf32> to vector<8x32xf32>
    %104 = arith.addf %101, %103 : vector<8x32xf32>
    %c0_56 = arith.constant 0 : index
    %c0_57 = arith.constant 0 : index
    %105 = vector.load %arg6[%c0_56, %c0_57] : memref<8x32xbf16, #tpu.memory_space<vmem>>, vector<8x32xbf16>
    %c0_58 = arith.constant 0 : index
    %c0_59 = arith.constant 0 : index
    %106 = vector.load %arg3[%c0_58, %c0_59] : memref<32x32xbf16, #tpu.memory_space<vmem>>, vector<32x32xbf16>
    %cst_60 = arith.constant dense<0.000000e+00> : vector<8x32xf32>
    %107 = tpu.matmul %105, %106, %cst_60 {dimension_numbers = #tpu.dot_dimension_numbers<[1], [0], [0], [1], [0, 0, 1, 1], [], []>} : vector<8x32xbf16>, vector<32x32xbf16>, vector<8x32xf32> -> vector<8x32xf32>
    %108 = arith.addf %104, %107 : vector<8x32xf32>
    %c0_61 = arith.constant 0 : index
    %c0_62 = arith.constant 0 : index
    %c0_63 = arith.constant 0 : index
    %109 = vector.load %arg5[%c0_61, %c0_62, %c0_63] : memref<1x8x32xf32, #tpu.memory_space<vmem>>, vector<1x8x32xf32>
    %110 = vector.shape_cast %109 : vector<1x8x32xf32> to vector<8x32xf32>
    %111 = vector.shape_cast %108 : vector<8x32xf32> to vector<1x8x32xf32>
    tpu.vector_store %arg5[%c0_61, %c0_62, %c0_63], %111 {strides = array<i32>} : memref<1x8x32xf32, #tpu.memory_space<vmem>>, vector<1x8x32xf32>,
    return
  }
  func.func @transform_0(%arg0: i32) -> (i32, i32, i32) {
    %c0_i32 = arith.constant 0 : i32
    %c0_i32_0 = arith.constant 0 : i32
    %c0_i32_1 = arith.constant 0 : i32
    return %arg0, %c0_i32, %c0_i32_0 : i32, i32, i32
  }
  func.func @transform_1(%arg0: i32) -> (i32, i32, i32) {
    %c0_i32 = arith.constant 0 : i32
    %c0_i32_0 = arith.constant 0 : i32
    %c0_i32_1 = arith.constant 0 : i32
    return %arg0, %c0_i32, %c0_i32_0 : i32, i32, i32
  }
  func.func @transform_2(%arg0: i32) -> (i32, i32) {
    %c0_i32 = arith.constant 0 : i32
    %c0_i32_0 = arith.constant 0 : i32
    %c0_i32_1 = arith.constant 0 : i32
    return %c0_i32, %c0_i32_0 : i32, i32
  }
  func.func @transform_3(%arg0: i32) -> (i32, i32) {
    %c0_i32 = arith.constant 0 : i32
    %c0_i32_0 = arith.constant 0 : i32
    %c0_i32_1 = arith.constant 0 : i32
    return %c0_i32, %c0_i32_0 : i32, i32
  }
  func.func @transform_4(%arg0: i32) -> (i32, i32, i32) {
    %c0_i32 = arith.constant 0 : i32
    %c0_i32_0 = arith.constant 0 : i32
    %c0_i32_1 = arith.constant 0 : i32
    return %arg0, %c0_i32, %c0_i32_0 : i32, i32, i32
  }
}

module attributes {stable_mosaic.version = 11 : i64} {
  func.func @_ln_ffn_kernel(%arg0: i32, %arg1: i32, %arg2: memref<16x32xf32, #tpu.memory_space<vmem>>, %arg3: memref<1x32xf32, #tpu.memory_space<vmem>>, %arg4: memref<1x32xf32, #tpu.memory_space<vmem>>, %arg5: memref<32x128xbf16, #tpu.memory_space<vmem>>, %arg6: memref<1x128xf32, #tpu.memory_space<vmem>>, %arg7: memref<128x32xbf16, #tpu.memory_space<vmem>>, %arg8: memref<1x32xf32, #tpu.memory_space<vmem>>, %arg9: memref<1x32xf32, #tpu.memory_space<vmem>>, %arg10: memref<1x32xf32, #tpu.memory_space<vmem>>, %arg11: memref<16x32xf32, #tpu.memory_space<vmem>>, %arg12: memref<16x32xbf16, #tpu.memory_space<vmem>>, %arg13: memref<16x32xf32, #tpu.memory_space<vmem>>) attributes {dimension_semantics = [#tpu.dimension_semantics<parallel>, #tpu.dimension_semantics<arbitrary>], iteration_bounds = array<i64: 1, 1>, scalar_prefetch = 0 : i64, scratch_operands = 2 : i64, tpu.core_type = #tpu.core_type<tc>, window_params = [{transform_indices = @transform_0, window_bounds = array<i64: 16, 32>}, {pipeline_mode = #tpu.pipeline_mode<synchronous>, transform_indices = @transform_1, window_bounds = array<i64: 1, 32>}, {pipeline_mode = #tpu.pipeline_mode<synchronous>, transform_indices = @transform_2, window_bounds = array<i64: 1, 32>}, {transform_indices = @transform_3, window_bounds = array<i64: 32, 128>}, {transform_indices = @transform_4, window_bounds = array<i64: 1, 128>}, {transform_indices = @transform_5, window_bounds = array<i64: 128, 32>}, {pipeline_mode = #tpu.pipeline_mode<synchronous>, transform_indices = @transform_6, window_bounds = array<i64: 1, 32>}, {pipeline_mode = #tpu.pipeline_mode<synchronous>, transform_indices = @transform_7, window_bounds = array<i64: 1, 32>}, {pipeline_mode = #tpu.pipeline_mode<synchronous>, transform_indices = @transform_8, window_bounds = array<i64: 1, 32>}, {transform_indices = @transform_9, window_bounds = array<i64: 16, 32>}]} {
    %c0_i32 = arith.constant 0 : i32
    %0 = arith.cmpi eq, %arg1, %c0_i32 : i32
    %1 = arith.extui %0 : i1 to i32
    %c0_i32_0 = arith.constant 0 : i32
    %2 = arith.cmpi ne, %1, %c0_i32_0 : i32
    scf.if %2 {
      %c0_16 = arith.constant 0 : index
      %c0_17 = arith.constant 0 : index
      %20 = vector.load %arg2[%c0_16, %c0_17] : memref<16x32xf32, #tpu.memory_space<vmem>>, vector<16x32xf32>
      %c0_18 = arith.constant 0 : index
      %c0_19 = arith.constant 0 : index
      %21 = vector.load %arg3[%c0_18, %c0_19] : memref<1x32xf32, #tpu.memory_space<vmem>>, vector<1x32xf32>
      %c0_20 = arith.constant 0 : index
      %c0_21 = arith.constant 0 : index
      %22 = vector.load %arg4[%c0_20, %c0_21] : memref<1x32xf32, #tpu.memory_space<vmem>>, vector<1x32xf32>
      %cst_22 = arith.constant dense<0.000000e+00> : vector<16xf32>
      %23 = vector.multi_reduction <add>, %20, %cst_22 [1] : vector<16x32xf32> to vector<16xf32>
      %24 = vector.shape_cast %23 : vector<16xf32> to vector<16x1xf32>
      %cst_23 = arith.constant 3.200000e+01 : f32
      %25 = vector.broadcast %cst_23 : f32 to vector<16x1xf32>
      %26 = arith.divf %24, %25 : vector<16x1xf32>
      %27 = vector.broadcast %26 : vector<16x1xf32> to vector<16x32xf32>
      %28 = arith.subf %20, %27 : vector<16x32xf32>
      %29 = arith.mulf %28, %28 : vector<16x32xf32>
      %cst_24 = arith.constant dense<0.000000e+00> : vector<16xf32>
      %30 = vector.multi_reduction <add>, %29, %cst_24 [1] : vector<16x32xf32> to vector<16xf32>
      %31 = vector.shape_cast %30 : vector<16xf32> to vector<16x1xf32>
      %cst_25 = arith.constant 3.200000e+01 : f32
      %32 = vector.broadcast %cst_25 : f32 to vector<16x1xf32>
      %33 = arith.divf %31, %32 : vector<16x1xf32>
      %cst_26 = arith.constant 9.99999974E-6 : f32
      %34 = vector.broadcast %cst_26 : f32 to vector<16x1xf32>
      %35 = arith.addf %33, %34 : vector<16x1xf32>
      %36 = math.rsqrt %35 : vector<16x1xf32>
      %37 = vector.broadcast %36 : vector<16x1xf32> to vector<16x32xf32>
      %38 = arith.mulf %28, %37 : vector<16x32xf32>
      %39 = vector.broadcast %21 : vector<1x32xf32> to vector<16x32xf32>
      %40 = arith.mulf %38, %39 : vector<16x32xf32>
      %41 = vector.broadcast %22 : vector<1x32xf32> to vector<16x32xf32>
      %42 = arith.addf %40, %41 : vector<16x32xf32>
      %43 = arith.truncf %42 : vector<16x32xf32> to vector<16x32xbf16>
      %c0_27 = arith.constant 0 : index
      %c0_28 = arith.constant 0 : index
      %44 = vector.load %arg12[%c0_27, %c0_28] : memref<16x32xbf16, #tpu.memory_space<vmem>>, vector<16x32xbf16>
      tpu.vector_store %arg12[%c0_27, %c0_28], %43 {strides = array<i32>} : memref<16x32xbf16, #tpu.memory_space<vmem>>, vector<16x32xbf16>,
      %c0_29 = arith.constant 0 : index
      %c0_30 = arith.constant 0 : index
      %45 = vector.load %arg8[%c0_29, %c0_30] : memref<1x32xf32, #tpu.memory_space<vmem>>, vector<1x32xf32>
      %46 = vector.broadcast %45 : vector<1x32xf32> to vector<16x32xf32>
      %47 = arith.addf %20, %46 : vector<16x32xf32>
      %c0_31 = arith.constant 0 : index
      %c0_32 = arith.constant 0 : index
      %48 = vector.load %arg13[%c0_31, %c0_32] : memref<16x32xf32, #tpu.memory_space<vmem>>, vector<16x32xf32>
      tpu.vector_store %arg13[%c0_31, %c0_32], %47 {strides = array<i32>} : memref<16x32xf32, #tpu.memory_space<vmem>>, vector<16x32xf32>,
    } else {
    }
    %c0 = arith.constant 0 : index
    %c0_1 = arith.constant 0 : index
    %3 = vector.load %arg12[%c0, %c0_1] : memref<16x32xbf16, #tpu.memory_space<vmem>>, vector<16x32xbf16>
    %c0_2 = arith.constant 0 : index
    %c0_3 = arith.constant 0 : index
    %4 = vector.load %arg5[%c0_2, %c0_3] : memref<32x128xbf16, #tpu.memory_space<vmem>>, vector<32x128xbf16>
    %cst = arith.constant dense<0.000000e+00> : vector<16x128xf32>
    %5 = tpu.matmul %3, %4, %cst {dimension_numbers = #tpu.dot_dimension_numbers<[1], [0], [0], [1], [0, 0, 1, 1], [], []>} : vector<16x32xbf16>, vector<32x128xbf16>, vector<16x128xf32> -> vector<16x128xf32>
    %c0_4 = arith.constant 0 : index
    %c0_5 = arith.constant 0 : index
    %6 = vector.load %arg6[%c0_4, %c0_5] : memref<1x128xf32, #tpu.memory_space<vmem>>, vector<1x128xf32>
    %7 = vector.broadcast %6 : vector<1x128xf32> to vector<16x128xf32>
    %8 = arith.addf %5, %7 : vector<16x128xf32>
    %cst_6 = arith.constant 0.000000e+00 : f32
    %9 = vector.broadcast %cst_6 : f32 to vector<16x128xf32>
    %10 = arith.maximumf %8, %9 : vector<16x128xf32>
    %c0_7 = arith.constant 0 : index
    %c0_8 = arith.constant 0 : index
    %11 = vector.load %arg13[%c0_7, %c0_8] : memref<16x32xf32, #tpu.memory_space<vmem>>, vector<16x32xf32>
    %12 = arith.truncf %10 : vector<16x128xf32> to vector<16x128xbf16>
    %c0_9 = arith.constant 0 : index
    %c0_10 = arith.constant 0 : index
    %13 = vector.load %arg7[%c0_9, %c0_10] : memref<128x32xbf16, #tpu.memory_space<vmem>>, vector<128x32xbf16>
    %cst_11 = arith.constant dense<0.000000e+00> : vector<16x32xf32>
    %14 = tpu.matmul %12, %13, %cst_11 {dimension_numbers = #tpu.dot_dimension_numbers<[1], [0], [0], [1], [0, 0, 1, 1], [], []>} : vector<16x128xbf16>, vector<128x32xbf16>, vector<16x32xf32> -> vector<16x32xf32>
    %15 = arith.addf %11, %14 : vector<16x32xf32>
    %c0_12 = arith.constant 0 : index
    %c0_13 = arith.constant 0 : index
    %16 = vector.load %arg13[%c0_12, %c0_13] : memref<16x32xf32, #tpu.memory_space<vmem>>, vector<16x32xf32>
    tpu.vector_store %arg13[%c0_12, %c0_13], %15 {strides = array<i32>} : memref<16x32xf32, #tpu.memory_space<vmem>>, vector<16x32xf32>,
    %c0_i32_14 = arith.constant 0 : i32
    %17 = arith.cmpi eq, %arg1, %c0_i32_14 : i32
    %18 = arith.extui %17 : i1 to i32
    %c0_i32_15 = arith.constant 0 : i32
    %19 = arith.cmpi ne, %18, %c0_i32_15 : i32
    scf.if %19 {
      %c0_16 = arith.constant 0 : index
      %c0_17 = arith.constant 0 : index
      %20 = vector.load %arg13[%c0_16, %c0_17] : memref<16x32xf32, #tpu.memory_space<vmem>>, vector<16x32xf32>
      %c0_18 = arith.constant 0 : index
      %c0_19 = arith.constant 0 : index
      %21 = vector.load %arg9[%c0_18, %c0_19] : memref<1x32xf32, #tpu.memory_space<vmem>>, vector<1x32xf32>
      %c0_20 = arith.constant 0 : index
      %c0_21 = arith.constant 0 : index
      %22 = vector.load %arg10[%c0_20, %c0_21] : memref<1x32xf32, #tpu.memory_space<vmem>>, vector<1x32xf32>
      %cst_22 = arith.constant dense<0.000000e+00> : vector<16xf32>
      %23 = vector.multi_reduction <add>, %20, %cst_22 [1] : vector<16x32xf32> to vector<16xf32>
      %24 = vector.shape_cast %23 : vector<16xf32> to vector<16x1xf32>
      %cst_23 = arith.constant 3.200000e+01 : f32
      %25 = vector.broadcast %cst_23 : f32 to vector<16x1xf32>
      %26 = arith.divf %24, %25 : vector<16x1xf32>
      %27 = vector.broadcast %26 : vector<16x1xf32> to vector<16x32xf32>
      %28 = arith.subf %20, %27 : vector<16x32xf32>
      %29 = arith.mulf %28, %28 : vector<16x32xf32>
      %cst_24 = arith.constant dense<0.000000e+00> : vector<16xf32>
      %30 = vector.multi_reduction <add>, %29, %cst_24 [1] : vector<16x32xf32> to vector<16xf32>
      %31 = vector.shape_cast %30 : vector<16xf32> to vector<16x1xf32>
      %cst_25 = arith.constant 3.200000e+01 : f32
      %32 = vector.broadcast %cst_25 : f32 to vector<16x1xf32>
      %33 = arith.divf %31, %32 : vector<16x1xf32>
      %cst_26 = arith.constant 9.99999974E-6 : f32
      %34 = vector.broadcast %cst_26 : f32 to vector<16x1xf32>
      %35 = arith.addf %33, %34 : vector<16x1xf32>
      %36 = math.rsqrt %35 : vector<16x1xf32>
      %37 = vector.broadcast %36 : vector<16x1xf32> to vector<16x32xf32>
      %38 = arith.mulf %28, %37 : vector<16x32xf32>
      %39 = vector.broadcast %21 : vector<1x32xf32> to vector<16x32xf32>
      %40 = arith.mulf %38, %39 : vector<16x32xf32>
      %41 = vector.broadcast %22 : vector<1x32xf32> to vector<16x32xf32>
      %42 = arith.addf %40, %41 : vector<16x32xf32>
      %c0_27 = arith.constant 0 : index
      %c0_28 = arith.constant 0 : index
      %43 = vector.load %arg11[%c0_27, %c0_28] : memref<16x32xf32, #tpu.memory_space<vmem>>, vector<16x32xf32>
      tpu.vector_store %arg11[%c0_27, %c0_28], %42 {strides = array<i32>} : memref<16x32xf32, #tpu.memory_space<vmem>>, vector<16x32xf32>,
    } else {
    }
    return
  }
  func.func @transform_0(%arg0: i32, %arg1: i32) -> (i32, i32) {
    %c0_i32 = arith.constant 0 : i32
    %c0_i32_0 = arith.constant 0 : i32
    return %arg0, %c0_i32 : i32, i32
  }
  func.func @transform_1(%arg0: i32, %arg1: i32) -> (i32, i32) {
    %c0_i32 = arith.constant 0 : i32
    %c0_i32_0 = arith.constant 0 : i32
    %c0_i32_1 = arith.constant 0 : i32
    return %c0_i32, %c0_i32_0 : i32, i32
  }
  func.func @transform_2(%arg0: i32, %arg1: i32) -> (i32, i32) {
    %c0_i32 = arith.constant 0 : i32
    %c0_i32_0 = arith.constant 0 : i32
    %c0_i32_1 = arith.constant 0 : i32
    return %c0_i32, %c0_i32_0 : i32, i32
  }
  func.func @transform_3(%arg0: i32, %arg1: i32) -> (i32, i32) {
    %c0_i32 = arith.constant 0 : i32
    %c0_i32_0 = arith.constant 0 : i32
    return %c0_i32, %arg1 : i32, i32
  }
  func.func @transform_4(%arg0: i32, %arg1: i32) -> (i32, i32) {
    %c0_i32 = arith.constant 0 : i32
    %c0_i32_0 = arith.constant 0 : i32
    return %c0_i32, %arg1 : i32, i32
  }
  func.func @transform_5(%arg0: i32, %arg1: i32) -> (i32, i32) {
    %c0_i32 = arith.constant 0 : i32
    %c0_i32_0 = arith.constant 0 : i32
    return %arg1, %c0_i32 : i32, i32
  }
  func.func @transform_6(%arg0: i32, %arg1: i32) -> (i32, i32) {
    %c0_i32 = arith.constant 0 : i32
    %c0_i32_0 = arith.constant 0 : i32
    %c0_i32_1 = arith.constant 0 : i32
    return %c0_i32, %c0_i32_0 : i32, i32
  }
  func.func @transform_7(%arg0: i32, %arg1: i32) -> (i32, i32) {
    %c0_i32 = arith.constant 0 : i32
    %c0_i32_0 = arith.constant 0 : i32
    %c0_i32_1 = arith.constant 0 : i32
    return %c0_i32, %c0_i32_0 : i32, i32
  }
  func.func @transform_8(%arg0: i32, %arg1: i32) -> (i32, i32) {
    %c0_i32 = arith.constant 0 : i32
    %c0_i32_0 = arith.constant 0 : i32
    %c0_i32_1 = arith.constant 0 : i32
    return %c0_i32, %c0_i32_0 : i32, i32
  }
  func.func @transform_9(%arg0: i32, %arg1: i32) -> (i32, i32) {
    %c0_i32 = arith.constant 0 : i32
    %c0_i32_0 = arith.constant 0 : i32
    return %arg0, %c0_i32 : i32, i32
  }
}

module attributes {stable_mosaic.version = 11 : i64} {
  func.func @_ln_ffn_kernel(%arg0: i32, %arg1: i32, %arg2: memref<16x32xf32, #tpu.memory_space<vmem>>, %arg3: memref<1x32xf32, #tpu.memory_space<vmem>>, %arg4: memref<1x32xf32, #tpu.memory_space<vmem>>, %arg5: memref<32x128xbf16, #tpu.memory_space<vmem>>, %arg6: memref<1x128xf32, #tpu.memory_space<vmem>>, %arg7: memref<128x32xbf16, #tpu.memory_space<vmem>>, %arg8: memref<1x32xf32, #tpu.memory_space<vmem>>, %arg9: memref<1x32xf32, #tpu.memory_space<vmem>>, %arg10: memref<1x32xf32, #tpu.memory_space<vmem>>, %arg11: memref<16x32xf32, #tpu.memory_space<vmem>>, %arg12: memref<16x32xbf16, #tpu.memory_space<vmem>>, %arg13: memref<16x32xf32, #tpu.memory_space<vmem>>) attributes {dimension_semantics = [#tpu.dimension_semantics<parallel>, #tpu.dimension_semantics<arbitrary>], iteration_bounds = array<i64: 1, 1>, scalar_prefetch = 0 : i64, scratch_operands = 2 : i64, tpu.core_type = #tpu.core_type<tc>, window_params = [{transform_indices = @transform_0, window_bounds = array<i64: 16, 32>}, {pipeline_mode = #tpu.pipeline_mode<synchronous>, transform_indices = @transform_1, window_bounds = array<i64: 1, 32>}, {pipeline_mode = #tpu.pipeline_mode<synchronous>, transform_indices = @transform_2, window_bounds = array<i64: 1, 32>}, {transform_indices = @transform_3, window_bounds = array<i64: 32, 128>}, {transform_indices = @transform_4, window_bounds = array<i64: 1, 128>}, {transform_indices = @transform_5, window_bounds = array<i64: 128, 32>}, {pipeline_mode = #tpu.pipeline_mode<synchronous>, transform_indices = @transform_6, window_bounds = array<i64: 1, 32>}, {pipeline_mode = #tpu.pipeline_mode<synchronous>, transform_indices = @transform_7, window_bounds = array<i64: 1, 32>}, {pipeline_mode = #tpu.pipeline_mode<synchronous>, transform_indices = @transform_8, window_bounds = array<i64: 1, 32>}, {transform_indices = @transform_9, window_bounds = array<i64: 16, 32>}]} {
    %c0_i32 = arith.constant 0 : i32
    %0 = arith.cmpi eq, %arg1, %c0_i32 : i32
    %1 = arith.extui %0 : i1 to i32
    %c0_i32_0 = arith.constant 0 : i32
    %2 = arith.cmpi ne, %1, %c0_i32_0 : i32
    scf.if %2 {
      %c0_16 = arith.constant 0 : index
      %c0_17 = arith.constant 0 : index
      %20 = vector.load %arg2[%c0_16, %c0_17] : memref<16x32xf32, #tpu.memory_space<vmem>>, vector<16x32xf32>
      %c0_18 = arith.constant 0 : index
      %c0_19 = arith.constant 0 : index
      %21 = vector.load %arg3[%c0_18, %c0_19] : memref<1x32xf32, #tpu.memory_space<vmem>>, vector<1x32xf32>
      %c0_20 = arith.constant 0 : index
      %c0_21 = arith.constant 0 : index
      %22 = vector.load %arg4[%c0_20, %c0_21] : memref<1x32xf32, #tpu.memory_space<vmem>>, vector<1x32xf32>
      %cst_22 = arith.constant dense<0.000000e+00> : vector<16xf32>
      %23 = vector.multi_reduction <add>, %20, %cst_22 [1] : vector<16x32xf32> to vector<16xf32>
      %24 = vector.shape_cast %23 : vector<16xf32> to vector<16x1xf32>
      %cst_23 = arith.constant 3.200000e+01 : f32
      %25 = vector.broadcast %cst_23 : f32 to vector<16x1xf32>
      %26 = arith.divf %24, %25 : vector<16x1xf32>
      %27 = vector.broadcast %26 : vector<16x1xf32> to vector<16x32xf32>
      %28 = arith.subf %20, %27 : vector<16x32xf32>
      %29 = arith.mulf %28, %28 : vector<16x32xf32>
      %cst_24 = arith.constant dense<0.000000e+00> : vector<16xf32>
      %30 = vector.multi_reduction <add>, %29, %cst_24 [1] : vector<16x32xf32> to vector<16xf32>
      %31 = vector.shape_cast %30 : vector<16xf32> to vector<16x1xf32>
      %cst_25 = arith.constant 3.200000e+01 : f32
      %32 = vector.broadcast %cst_25 : f32 to vector<16x1xf32>
      %33 = arith.divf %31, %32 : vector<16x1xf32>
      %cst_26 = arith.constant 9.99999974E-6 : f32
      %34 = vector.broadcast %cst_26 : f32 to vector<16x1xf32>
      %35 = arith.addf %33, %34 : vector<16x1xf32>
      %36 = math.rsqrt %35 : vector<16x1xf32>
      %37 = vector.broadcast %36 : vector<16x1xf32> to vector<16x32xf32>
      %38 = arith.mulf %28, %37 : vector<16x32xf32>
      %39 = vector.broadcast %21 : vector<1x32xf32> to vector<16x32xf32>
      %40 = arith.mulf %38, %39 : vector<16x32xf32>
      %41 = vector.broadcast %22 : vector<1x32xf32> to vector<16x32xf32>
      %42 = arith.addf %40, %41 : vector<16x32xf32>
      %43 = arith.truncf %42 : vector<16x32xf32> to vector<16x32xbf16>
      %c0_27 = arith.constant 0 : index
      %c0_28 = arith.constant 0 : index
      %44 = vector.load %arg12[%c0_27, %c0_28] : memref<16x32xbf16, #tpu.memory_space<vmem>>, vector<16x32xbf16>
      tpu.vector_store %arg12[%c0_27, %c0_28], %43 {strides = array<i32>} : memref<16x32xbf16, #tpu.memory_space<vmem>>, vector<16x32xbf16>,
      %c0_29 = arith.constant 0 : index
      %c0_30 = arith.constant 0 : index
      %45 = vector.load %arg8[%c0_29, %c0_30] : memref<1x32xf32, #tpu.memory_space<vmem>>, vector<1x32xf32>
      %46 = vector.broadcast %45 : vector<1x32xf32> to vector<16x32xf32>
      %47 = arith.addf %20, %46 : vector<16x32xf32>
      %c0_31 = arith.constant 0 : index
      %c0_32 = arith.constant 0 : index
      %48 = vector.load %arg13[%c0_31, %c0_32] : memref<16x32xf32, #tpu.memory_space<vmem>>, vector<16x32xf32>
      tpu.vector_store %arg13[%c0_31, %c0_32], %47 {strides = array<i32>} : memref<16x32xf32, #tpu.memory_space<vmem>>, vector<16x32xf32>,
    } else {
    }
    %c0 = arith.constant 0 : index
    %c0_1 = arith.constant 0 : index
    %3 = vector.load %arg12[%c0, %c0_1] : memref<16x32xbf16, #tpu.memory_space<vmem>>, vector<16x32xbf16>
    %c0_2 = arith.constant 0 : index
    %c0_3 = arith.constant 0 : index
    %4 = vector.load %arg5[%c0_2, %c0_3] : memref<32x128xbf16, #tpu.memory_space<vmem>>, vector<32x128xbf16>
    %cst = arith.constant dense<0.000000e+00> : vector<16x128xf32>
    %5 = tpu.matmul %3, %4, %cst {dimension_numbers = #tpu.dot_dimension_numbers<[1], [0], [0], [1], [0, 0, 1, 1], [], []>} : vector<16x32xbf16>, vector<32x128xbf16>, vector<16x128xf32> -> vector<16x128xf32>
    %c0_4 = arith.constant 0 : index
    %c0_5 = arith.constant 0 : index
    %6 = vector.load %arg6[%c0_4, %c0_5] : memref<1x128xf32, #tpu.memory_space<vmem>>, vector<1x128xf32>
    %7 = vector.broadcast %6 : vector<1x128xf32> to vector<16x128xf32>
    %8 = arith.addf %5, %7 : vector<16x128xf32>
    %cst_6 = arith.constant 0.000000e+00 : f32
    %9 = vector.broadcast %cst_6 : f32 to vector<16x128xf32>
    %10 = arith.maximumf %8, %9 : vector<16x128xf32>
    %c0_7 = arith.constant 0 : index
    %c0_8 = arith.constant 0 : index
    %11 = vector.load %arg13[%c0_7, %c0_8] : memref<16x32xf32, #tpu.memory_space<vmem>>, vector<16x32xf32>
    %12 = arith.truncf %10 : vector<16x128xf32> to vector<16x128xbf16>
    %c0_9 = arith.constant 0 : index
    %c0_10 = arith.constant 0 : index
    %13 = vector.load %arg7[%c0_9, %c0_10] : memref<128x32xbf16, #tpu.memory_space<vmem>>, vector<128x32xbf16>
    %cst_11 = arith.constant dense<0.000000e+00> : vector<16x32xf32>
    %14 = tpu.matmul %12, %13, %cst_11 {dimension_numbers = #tpu.dot_dimension_numbers<[1], [0], [0], [1], [0, 0, 1, 1], [], []>} : vector<16x128xbf16>, vector<128x32xbf16>, vector<16x32xf32> -> vector<16x32xf32>
    %15 = arith.addf %11, %14 : vector<16x32xf32>
    %c0_12 = arith.constant 0 : index
    %c0_13 = arith.constant 0 : index
    %16 = vector.load %arg13[%c0_12, %c0_13] : memref<16x32xf32, #tpu.memory_space<vmem>>, vector<16x32xf32>
    tpu.vector_store %arg13[%c0_12, %c0_13], %15 {strides = array<i32>} : memref<16x32xf32, #tpu.memory_space<vmem>>, vector<16x32xf32>,
    %c0_i32_14 = arith.constant 0 : i32
    %17 = arith.cmpi eq, %arg1, %c0_i32_14 : i32
    %18 = arith.extui %17 : i1 to i32
    %c0_i32_15 = arith.constant 0 : i32
    %19 = arith.cmpi ne, %18, %c0_i32_15 : i32
    scf.if %19 {
      %c0_16 = arith.constant 0 : index
      %c0_17 = arith.constant 0 : index
      %20 = vector.load %arg13[%c0_16, %c0_17] : memref<16x32xf32, #tpu.memory_space<vmem>>, vector<16x32xf32>
      %c0_18 = arith.constant 0 : index
      %c0_19 = arith.constant 0 : index
      %21 = vector.load %arg11[%c0_18, %c0_19] : memref<16x32xf32, #tpu.memory_space<vmem>>, vector<16x32xf32>
      tpu.vector_store %arg11[%c0_18, %c0_19], %20 {strides = array<i32>} : memref<16x32xf32, #tpu.memory_space<vmem>>, vector<16x32xf32>,
    } else {
    }
    return
  }
  func.func @transform_0(%arg0: i32, %arg1: i32) -> (i32, i32) {
    %c0_i32 = arith.constant 0 : i32
    %c0_i32_0 = arith.constant 0 : i32
    return %arg0, %c0_i32 : i32, i32
  }
  func.func @transform_1(%arg0: i32, %arg1: i32) -> (i32, i32) {
    %c0_i32 = arith.constant 0 : i32
    %c0_i32_0 = arith.constant 0 : i32
    %c0_i32_1 = arith.constant 0 : i32
    return %c0_i32, %c0_i32_0 : i32, i32
  }
  func.func @transform_2(%arg0: i32, %arg1: i32) -> (i32, i32) {
    %c0_i32 = arith.constant 0 : i32
    %c0_i32_0 = arith.constant 0 : i32
    %c0_i32_1 = arith.constant 0 : i32
    return %c0_i32, %c0_i32_0 : i32, i32
  }
  func.func @transform_3(%arg0: i32, %arg1: i32) -> (i32, i32) {
    %c0_i32 = arith.constant 0 : i32
    %c0_i32_0 = arith.constant 0 : i32
    return %c0_i32, %arg1 : i32, i32
  }
  func.func @transform_4(%arg0: i32, %arg1: i32) -> (i32, i32) {
    %c0_i32 = arith.constant 0 : i32
    %c0_i32_0 = arith.constant 0 : i32
    return %c0_i32, %arg1 : i32, i32
  }
  func.func @transform_5(%arg0: i32, %arg1: i32) -> (i32, i32) {
    %c0_i32 = arith.constant 0 : i32
    %c0_i32_0 = arith.constant 0 : i32
    return %arg1, %c0_i32 : i32, i32
  }
  func.func @transform_6(%arg0: i32, %arg1: i32) -> (i32, i32) {
    %c0_i32 = arith.constant 0 : i32
    %c0_i32_0 = arith.constant 0 : i32
    %c0_i32_1 = arith.constant 0 : i32
    return %c0_i32, %c0_i32_0 : i32, i32
  }
  func.func @transform_7(%arg0: i32, %arg1: i32) -> (i32, i32) {
    %c0_i32 = arith.constant 0 : i32
    %c0_i32_0 = arith.constant 0 : i32
    %c0_i32_1 = arith.constant 0 : i32
    return %c0_i32, %c0_i32_0 : i32, i32
  }
  func.func @transform_8(%arg0: i32, %arg1: i32) -> (i32, i32) {
    %c0_i32 = arith.constant 0 : i32
    %c0_i32_0 = arith.constant 0 : i32
    %c0_i32_1 = arith.constant 0 : i32
    return %c0_i32, %c0_i32_0 : i32, i32
  }
  func.func @transform_9(%arg0: i32, %arg1: i32) -> (i32, i32) {
    %c0_i32 = arith.constant 0 : i32
    %c0_i32_0 = arith.constant 0 : i32
    return %arg0, %c0_i32 : i32, i32
  }
}

</mosaic_0001>

<llo_original>
// kernel: encoder_forward.6
$region0: #{encoder_forward.6}
  #allocation0 [shape = 'u32[]', space=smem, size = 0x4, offset = 0x4, fixed_abs, tag = 'smem constant byte address 0x4 - core index']
  #allocation1 [shape = 'u32[144,128]{1,0:T(1,128)}', space=vmem, size = 0x12000, scoped, tag = 'internal scratch']
  #allocation2 [shape = 'bf16[16,32]{1,0:T(16,128)(2,1)}', space=vmem, size = 0x1000, scoped, tag = 'scratch operand']
  %s0 = inlined_call_operand.hbm [shape: f32[16,32], index: 0, kind: input, shape index: {}]
  %s1 = inlined_call_operand.hbm [shape: f32[1,32], index: 1, kind: input, shape index: {}]
  %s2 = inlined_call_operand.hbm [shape: f32[1,32], index: 2, kind: input, shape index: {}]
  %s3 = inlined_call_operand.hbm [shape: bf16[32,96], index: 3, kind: input, shape index: {}]
  %s4 = inlined_call_operand.hbm [shape: f32[1,96], index: 4, kind: input, shape index: {}]
  %s5 = inlined_call_operand.hbm [shape: bf16[16,96], index: 5, kind: output, shape index: {}]
  %s6 = sld [smem:[#allocation0]]
  $region54: #{encoder_forward.6} parent=0
    _
  %s8 = ssub.s32 1, %s6
  %s9 = scalar_select 0, %s8, %s6
  $region1: #{encoder_forward.6} parent=0
    #allocation3 [shape = 'u8[8192]{0}', space=vmem, size = 0x2000, scoped, tag = 'input window, operand 0, single buffered']
    #allocation4 [shape = 's32[1]{0}', space=sflag, size = 0x4, scoped, tag = 'scoped memory for encoder_forward.6']
    #allocation5 [shape = 's32[1]{0}', space=sflag, size = 0x4, scoped, tag = 'scoped memory for encoder_forward.6']
    #allocation6 [shape = 'u8[512]{0}', space=vmem, size = 0x400, scoped, tag = 'input window, operand 1, single buffered']
    #allocation7 [shape = 's32[1]{0}', space=sflag, size = 0x4, scoped, tag = 'scoped memory for encoder_forward.6']
    #allocation8 [shape = 'u8[512]{0}', space=vmem, size = 0x400, scoped, tag = 'input window, operand 2, single buffered']
    #allocation9 [shape = 'u8[8192]{0}', space=vmem, size = 0x2000, scoped, tag = 'input window, operand 3, single buffered']
    #allocation10 [shape = 's32[1]{0}', space=sflag, size = 0x4, scoped, tag = 'scoped memory for encoder_forward.6']
    #allocation11 [shape = 'u8[512]{0}', space=vmem, size = 0x400, scoped, tag = 'input window, operand 4, single buffered']
    #allocation12 [shape = 'u8[4096]{0}', space=vmem, size = 0x1000, scoped, tag = 'output window, operand 0, single buffered']
    %10 = vsyncpa [#allocation4], 0
    %11 = vsyncpa [#allocation7], 0
    %12 = vsyncpa [#allocation10], 0
    %13 = vsyncpa [#allocation5], 0
    // Predicated region
    $region2: #{encoder_forward.6} parent=1 // pred_check
      _
    $region3: #{encoder_forward.6} parent=1 // pred_check_branch
      %15 = sbr.rel (0) target = $region5
    $region4: #{encoder_forward.6} parent=1 // pred_region
      %s17 = ssub.s32 256, 256
      %18 = vsyncadd [#allocation4], %s17
      %s19 = sshll.u32 [#allocation3], 4
      %s20 = int_to_ptr.vmem [resolvable:$true] %s19
      %25 = dma.hbm_to_vmem [thread:$0]  %s0, 256, %s20, [#allocation4], 128, 128, 8
    $region5: #{encoder_forward.6} parent=1 // pred_fallthru
      _
    // Predicated region
    $region6: #{encoder_forward.6} parent=1 // pred_check
      _
    $region7: #{encoder_forward.6} parent=1 // pred_check_branch
      %27 = sbr.rel (0) target = $region9
    $region8: #{encoder_forward.6} parent=1 // pred_region
      %s29 = ssub.s32 16, 16
      %30 = vsyncadd [#allocation7], %s29
      %s32 = sshll.u32 [#allocation6], 4
      %s33 = int_to_ptr.vmem [resolvable:$true] %s32
      %35 = dma.hbm_to_vmem [thread:$0]  %s1, 16, %s33, [#allocation7]
    $region9: #{encoder_forward.6} parent=1 // pred_fallthru
      _
    // Predicated region
    $region10: #{encoder_forward.6} parent=1 // pred_check
      _
    $region11: #{encoder_forward.6} parent=1 // pred_check_branch
      %37 = sbr.rel (0) target = $region13
    $region12: #{encoder_forward.6} parent=1 // pred_region
      %s39 = ssub.s32 16, 16
      %40 = vsyncadd [#allocation7], %s39
      %s42 = sshll.u32 [#allocation8], 4
      %s43 = int_to_ptr.vmem [resolvable:$true] %s42
      %45 = dma.hbm_to_vmem [thread:$0]  %s2, 16, %s43, [#allocation7]
    $region13: #{encoder_forward.6} parent=1 // pred_fallthru
      _
    // Predicated region
    $region14: #{encoder_forward.6} parent=1 // pred_check
      _
    $region15: #{encoder_forward.6} parent=1 // pred_check_branch
      %47 = sbr.rel (0) target = $region17
    $region16: #{encoder_forward.6} parent=1 // pred_region
      %s49 = ssub.s32 256, 256
      %50 = vsyncadd [#allocation10], %s49
      %s51 = sshll.u32 [#allocation9], 4
      %s52 = int_to_ptr.vmem [resolvable:$true] %s51
      %57 = dma.hbm_to_vmem [thread:$0]  %s3, 256, %s52, [#allocation10], 64, 64, 4
    $region17: #{encoder_forward.6} parent=1 // pred_fallthru
      _
    // Predicated region
    $region18: #{encoder_forward.6} parent=1 // pred_check
      _
    $region19: #{encoder_forward.6} parent=1 // pred_check_branch
      %59 = sbr.rel (0) target = $region21
    $region20: #{encoder_forward.6} parent=1 // pred_region
      %s61 = ssub.s32 16, 16
      %62 = vsyncadd [#allocation10], %s61
      %s64 = sshll.u32 [#allocation11], 4
      %s65 = int_to_ptr.vmem [resolvable:$true] %s64
      %67 = dma.hbm_to_vmem [thread:$0]  %s4, 16, %s65, [#allocation10]
    $region21: #{encoder_forward.6} parent=1 // pred_fallthru
      _
    // Predicated region
    $region22: #{encoder_forward.6} parent=1 // pred_check
      _
    $region23: #{encoder_forward.6} parent=1 // pred_check_branch
      %69 = sbr.rel (0) target = $region25
    $region24: #{encoder_forward.6} parent=1 // pred_region
      %70 = dma.done [#allocation4], 256
    $region25: #{encoder_forward.6} parent=1 // pred_fallthru
      _
    // Predicated region
    $region26: #{encoder_forward.6} parent=1 // pred_check
      _
    $region27: #{encoder_forward.6} parent=1 // pred_check_branch
      %72 = sbr.rel (0) target = $region29
    $region28: #{encoder_forward.6} parent=1 // pred_region
      %73 = dma.done [#allocation7], 16
    $region29: #{encoder_forward.6} parent=1 // pred_fallthru
      _
    // Predicated region
    $region30: #{encoder_forward.6} parent=1 // pred_check
      _
    $region31: #{encoder_forward.6} parent=1 // pred_check_branch
      %75 = sbr.rel (0) target = $region33
    $region32: #{encoder_forward.6} parent=1 // pred_region
      %76 = dma.done [#allocation7], 16
    $region33: #{encoder_forward.6} parent=1 // pred_fallthru
      _
    // Predicated region
    $region34: #{encoder_forward.6} parent=1 // pred_check
      _
    $region35: #{encoder_forward.6} parent=1 // pred_check_branch
      %78 = sbr.rel (0) target = $region37
    $region36: #{encoder_forward.6} parent=1 // pred_region
      %79 = dma.done [#allocation10], 256
    $region37: #{encoder_forward.6} parent=1 // pred_fallthru
      _
    // Predicated region
    $region38: #{encoder_forward.6} parent=1 // pred_check
      _
    $region39: #{encoder_forward.6} parent=1 // pred_check_branch
      %81 = sbr.rel (0) target = $region41
    $region40: #{encoder_forward.6} parent=1 // pred_region
      %82 = dma.done [#allocation10], 16
    $region41: #{encoder_forward.6} parent=1 // pred_fallthru
      _
    %p84 = scmp.eq.s32.totalorder 0, 0
    // Predicated region
    $region42: #{encoder_forward.6} parent=1 // pred_check
      %p85 = pneg %p84
    $region43: #{encoder_forward.6} parent=1 // pred_check_branch
      %87 = sbr.rel (%p85) target = $region45
    $region44: #{encoder_forward.6} parent=1 // pred_region
      %v88 = vld [vmem:[#allocation3] sm:$0xff]
      %v89 = vld [vmem:[#allocation3 + $0x8] sm:$0xff]
      %v90 = vld [vmem:[#allocation6] sm:$0x1]
      %v91 = vld [vmem:[#allocation8] sm:$0x1]
      %vm92 = vcmask 261120
      %v93 = vsel %vm92, %v88, 0.0
      %94 = vadd.xlane.f32.xlu0 %v93
      %v95 = vpop.xlane.xlu0 %94
      %v96 = vsel %vm92, %v89, 0.0
      %97 = vadd.xlane.f32.xlu0 %v96
      %v98 = vpop.xlane.xlu0 %97
      %v99 = vrcp.pop 32.0
      %v100 = vmul.f32 %v95, %v99
      %v101 = vmul.f32 %v98, %v99
      %v102 = vsub.f32 %v88, %v100
      %v103 = vsub.f32 %v89, %v101
      %v104 = vmul.f32 %v102, %v102
      %v105 = vmul.f32 %v103, %v103
      %v106 = vsel %vm92, %v104, 0.0
      %107 = vadd.xlane.f32.xlu0 %v106
      %v108 = vpop.xlane.xlu0 %107
      %v109 = vsel %vm92, %v105, 0.0
      %110 = vadd.xlane.f32.xlu0 %v109
      %v111 = vpop.xlane.xlu0 %110
      %v112 = vmul.f32 %v108, %v99
      %v113 = vmul.f32 %v111, %v99
      %v114 = vadd.f32 %v112, 1e-05
      %v115 = vadd.f32 %v113, 1e-05
      %v116 = vrsqrt.pop %v114
      %v117 = vrsqrt.pop %v115
      %v118 = vmul.f32 %v102, %v116
      %v119 = vmul.f32 %v103, %v117
      %v121 = vlaneseq
      %v122 = vshrl.u32 %v121, 7
      %v123 = vsub.s32 0, %v122
      %v124 = vrot.slane %v90, %v123
      %v126 = vmul.f32 %v118, %v124
      %v127 = vmul.f32 %v119, %v124
      %v129 = vlaneseq
      %v130 = vshrl.u32 %v129, 7
      %v131 = vsub.s32 0, %v130
      %v132 = vrot.slane %v91, %v131
      %v134 = vadd.f32 %v126, %v132
      %v135 = vadd.f32 %v127, %v132
      %v136 = vpack.c.bf16 %v135, %v134
      %137 = vst.msk [vmem:[#allocation2] sm:$0xff] %vm92, %v136
    $region45: #{encoder_forward.6} parent=1 // pred_fallthru
      _
    %v138 = vld [vmem:[#allocation2] sm:$0xff]
    %v139 = vld [vmem:[#allocation9] sm:$0xf]
    %v140 = vld [vmem:[#allocation9 + $0x4] sm:$0xf]
    %v141 = vld [vmem:[#allocation9 + $0x8] sm:$0xf]
    %v142 = vld [vmem:[#allocation9 + $0xc] sm:$0xf]
    %v143 = vld [vmem:[#allocation11] sm:$0x1]
    %v145 = vlaneseq
    %v146 = vshrl.u32 %v145, 7
    %v147 = vsub.s32 0, %v146
    %v148 = vrot.slane %v143, %v147
    %v154 = vunpack.c.l.b16 %v139
    %v155 = vunpack.c.l.b16 %v140
    %v156 = vunpack.c.l.b16 %v141
    %v157 = vunpack.c.l.b16 %v142
    %v158 = vpack.c.b16 %v155, %v154
    %v159 = vpack.c.b16 %v157, %v156
    %vm162 = vcmask 261120
    %v164 = vsel %vm162, %v138, 0
    %166 = vmatprep.subr.bf16.mxu0 0
    %167 = vmatpush1.bf16.msra.mxu0 %v158
    %168 = vmatprep.subr.bf16.mxu0 0
    %169 = vmatpush1.bf16.msra.mxu0 %v159
    %170 = vmatprep.subr.bf16.mxu0 0
    %171 = vmatpush1.bf16.msra.mxu0 0
    %172 = vmatprep.subr.bf16.mxu0 0
    %173 = vmatpush1.bf16.msra.mxu0 0
    %174 = vmatprep.subr.bf16.mxu0 0
    %175 = vmatpush1.bf16.msra.mxu0 0
    %176 = vmatprep.subr.bf16.mxu0 0
    %177 = vmatpush1.bf16.msra.mxu0 0
    %178 = vmatprep.subr.bf16.mxu0 0
    %179 = vmatpush1.bf16.msra.mxu0 0
    %180 = vmatprep.subr.bf16.mxu0 0
    %181 = vmatpush1.bf16.msra.mxu0 0
    %182 = vmatprep.subr.bf16.mxu0 0
    %183 = vmatpush1.bf16.msra.mxu0 0
    %184 = vmatprep.subr.bf16.mxu0 0
    %185 = vmatpush1.bf16.msra.mxu0 0
    %186 = vmatprep.subr.bf16.mxu0 0
    %187 = vmatpush1.bf16.msra.mxu0 0
    %188 = vmatprep.subr.bf16.mxu0 0
    %189 = vmatpush1.bf16.msra.mxu0 0
    %190 = vmatprep.subr.bf16.mxu0 0
    %191 = vmatpush1.bf16.msra.mxu0 0
    %192 = vmatprep.subr.bf16.mxu0 0
    %193 = vmatpush1.bf16.msra.mxu0 0
    %194 = vmatprep.subr.bf16.mxu0 0
    %195 = vmatpush1.bf16.msra.mxu0 0
    %196 = vmatprep.subr.bf16.mxu0 0
    %197 = vmatpush1.bf16.msra.mxu0 0
    %198 = vmatprep.mubr.bf16.mxu0 0
    %199 = vmatmul.mubr.bf16.gmra.mrb[0].mxu0 %v164
    %v200 = vpop.f32.mrb[0].mxu0
    %v201 = vadd.f32 %v148, %v200
    %v202 = vpop.f32.mrb[0].mxu0
    %v203 = vpop.f32.mrb[0].mxu0
    %v204 = vadd.f32 %v148, %v203
    %v205 = vpop.f32.mrb[0].mxu0
    %206 = vdwg.mxu0
    %v207 = vpack.c.bf16 %v204, %v201
    %v209 = vunpack.c.l.b16 %v207
    %v210 = vunpack.c.h.b16 %v207
    %v211 = vpack.c.b16 %v209, %v209
    %v212 = vpack.c.b16 %v210, %v210
    %vm215 = vcmask 781312
    %216 = vst.msk [vmem:[#allocation12] sm:$0xf] %vm215, %v211
    %217 = vst.msk [vmem:[#allocation12 + $0x4] sm:$0xf] %vm215, %v212
    // Predicated region
    $region46: #{encoder_forward.6} parent=1 // pred_check
      _
    $region47: #{encoder_forward.6} parent=1 // pred_check_branch
      %219 = sbr.rel (0) target = $region49
    $region48: #{encoder_forward.6} parent=1 // pred_region
      %s221 = ssub.s32 128, 128
      %222 = vsyncadd [#allocation5], %s221
      %s223 = sshll.u32 [#allocation12], 4
      %s224 = int_to_ptr.vmem [resolvable:$true] %s223
      %229 = dma.vmem_to_hbm [thread:$0]  %s224, 128, %s5, [#allocation5], 64, 64, 4
    $region49: #{encoder_forward.6} parent=1 // pred_fallthru
      _
    // Predicated region
    $region50: #{encoder_forward.6} parent=1 // pred_check
      _
    $region51: #{encoder_forward.6} parent=1 // pred_check_branch
      %231 = sbr.rel (0) target = $region53
    $region52: #{encoder_forward.6} parent=1 // pred_region
      %232 = dma.done [#allocation5], 128
    $region53: #{encoder_forward.6} parent=1 // pred_fallthru
      _
    %233 = vsyncpa [#allocation4], 1
    %234 = vsyncpa [#allocation7], 1
    %235 = vsyncpa [#allocation10], 1
    %236 = vsyncpa [#allocation5], 1

// kernel: encoder_forward.7
$region0: #{encoder_forward.7}
  #allocation0 [shape = 'u32[]', space=smem, size = 0x4, offset = 0x4, fixed_abs, tag = 'smem constant byte address 0x4 - core index']
  #allocation1 [shape = 'u32[144,128]{1,0:T(1,128)}', space=vmem, size = 0x12000, scoped, tag = 'internal scratch']
  #allocation2 [shape = 'bf16[8,32]{1,0:T(8,128)(2,1)}', space=vmem, size = 0x800, scoped, tag = 'scratch operand']
  %s0 = inlined_call_operand.hbm [shape: bf16[2,8,96], index: 0, kind: input, shape index: {}]
  %s1 = inlined_call_operand.hbm [shape: f32[2,8,32], index: 1, kind: input, shape index: {}]
  %s2 = inlined_call_operand.hbm [shape: bf16[32,32], index: 2, kind: input, shape index: {}]
  %s3 = inlined_call_operand.hbm [shape: f32[1,32], index: 3, kind: input, shape index: {}]
  %s4 = inlined_call_operand.hbm [shape: f32[2,8,32], index: 4, kind: output, shape index: {}]
  %s5 = sld [smem:[#allocation0]]
  $region65: #{encoder_forward.7} parent=0
    _
  %s7 = ssub.s32 1, %s5
  %s8 = scalar_select 0, %s7, %s5
  $region1: #{encoder_forward.7} parent=0
    #allocation3 [shape = 'u8[4096]{0}', space=vmem, size = 0x1000, scoped, tag = 'input window, operand 0']
    #allocation4 [shape = 's32[2]{0}', space=sflag, size = 0x8, scoped, tag = 'scoped memory for encoder_forward.7']
    #allocation5 [shape = 's32[2]{0}', space=sflag, size = 0x8, scoped, tag = 'scoped memory for encoder_forward.7']
    #allocation6 [shape = 'u8[8192]{0}', space=vmem, size = 0x2000, scoped, tag = 'input window, operand 1']
    #allocation7 [shape = 's32[2]{0}', space=sflag, size = 0x8, scoped, tag = 'scoped memory for encoder_forward.7']
    #allocation8 [shape = 'u8[8192]{0}', space=vmem, size = 0x2000, scoped, tag = 'input window, operand 2, single buffered']
    #allocation9 [shape = 'u8[512]{0}', space=vmem, size = 0x400, scoped, tag = 'input window, operand 3, single buffered']
    #allocation10 [shape = 's32[1]{0}', space=sflag, size = 0x4, scoped, tag = 'scoped memory for encoder_forward.7']
    #allocation11 [shape = 'u8[8192]{0}', space=vmem, size = 0x2000, scoped, tag = 'output window, operand 0']
    %9 = vsyncpa [#allocation4], 0
    %s10 = scalar_lea.sflag [#allocation4], 1
    %11 = vsyncpa %s10, 0
    %12 = vsyncpa [#allocation7], 0
    %s13 = scalar_lea.sflag [#allocation7], 1
    %14 = vsyncpa %s13, 0
    %15 = vsyncpa [#allocation10], 0
    %16 = vsyncpa [#allocation5], 0
    %s17 = scalar_lea.sflag [#allocation5], 1
    %18 = vsyncpa %s17, 0
    loop: start=0, step=1, limit=4
    $region2: #{encoder_forward.7} parent=1 // loop_pre_header
      _
    $region3: #{encoder_forward.7} parent=1 // loop_header
      %s20 = sphi 0, %s24
      %p21 = scmp.ge.s32.totalorder %s20, 4
      %s30 = sphi 0, %s32
      %s33 = sphi 0, %s30
      %s34 = sphi 0, %s33
      %s50 = sphi 0, %s34
      %s56 = sphi 0, %s58
      %s59 = sphi 0, %s56
      %s60 = sphi 0, %s59
      %s76 = sphi 0, %s60
      %s80 = sphi 0, %s80
      %s82 = sphi 0, %s80
      %s83 = sphi 0, %s82
      %s97 = sphi 0, %s83
      %s101 = sphi 0, %s101
      %s103 = sphi 0, %s101
      %s104 = sphi 0, %s103
      %s118 = sphi 0, %s104
      %s124 = sphi 0, %s126
      %s127 = sphi 0, %s124
      %s128 = sphi 0, %s127
      %s144 = sphi 0, %s128
    $region4: #{encoder_forward.7} parent=1 // loop_header_branch
      %23 = sbr.rel (%p21) target = $region8
    $region5: #{encoder_forward.7} parent=1 // loop_body
      %s25 = ssub.s32 %s20, 1
      %s26 = ssub.s32 %s20, 2
      %s27 = sadd.s32 %s20, 1
      %s28 = ssub.s32 %s20, %s27
      %p29 = scmp.eq.s32.totalorder %s28, 0
      %s31 = sadd.s32 %s30, 1
      %s32 = scalar_select %p29, %s30, %s31
      %p35 = pneg %p29
      %p36 = scmp.eq.s32.totalorder %s20, 1
      %p37 = por %p35, %p36
      %p38 = scmp.ne.s32.totalorder %s30, %s33
      %p39 = scmp.eq.s32.totalorder %s20, 0
      %p40 = por %p38, %p39
      %p41 = scmp.ne.s32.totalorder %s30, %s33
      %p42 = scmp.eq.s32.totalorder %s25, 1
      %p43 = por %p41, %p42
      %p44 = scmp.ne.s32.totalorder %s33, %s34
      %p45 = scmp.eq.s32.totalorder %s25, 0
      %p46 = por %p44, %p45
      %p47 = scmp.ne.s32.totalorder %s33, %s34
      %p48 = scmp.eq.s32.totalorder %s26, 1
      %p49 = por %p47, %p48
      %p51 = scmp.ne.s32.totalorder %s34, %s50
      %p52 = scmp.eq.s32.totalorder %s26, 0
      %p53 = por %p51, %p52
      %s54 = ssub.s32 %s20, %s27
      %p55 = scmp.eq.s32.totalorder %s54, 0
      %s57 = sadd.s32 %s56, 1
      %s58 = scalar_select %p55, %s56, %s57
      %p61 = pneg %p55
      %p62 = scmp.eq.s32.totalorder %s20, 1
      %p63 = por %p61, %p62
      %p64 = scmp.ne.s32.totalorder %s56, %s59
      %p65 = scmp.eq.s32.totalorder %s20, 0
      %p66 = por %p64, %p65
      %p67 = scmp.ne.s32.totalorder %s56, %s59
      %p68 = scmp.eq.s32.totalorder %s25, 1
      %p69 = por %p67, %p68
      %p70 = scmp.ne.s32.totalorder %s59, %s60
      %p71 = scmp.eq.s32.totalorder %s25, 0
      %p72 = por %p70, %p71
      %p73 = scmp.ne.s32.totalorder %s59, %s60
      %p74 = scmp.eq.s32.totalorder %s26, 1
      %p75 = por %p73, %p74
      %p77 = scmp.ne.s32.totalorder %s60, %s76
      %p78 = scmp.eq.s32.totalorder %s26, 0
      %p79 = por %p77, %p78
      %s81 = sadd.s32 %s80, 1
      %p84 = scmp.eq.s32.totalorder %s20, 1
      %p85 = scmp.ne.s32.totalorder %s80, %s82
      %p86 = scmp.eq.s32.totalorder %s20, 0
      %p87 = por %p85, %p86
      %p88 = scmp.ne.s32.totalorder %s80, %s82
      %p89 = scmp.eq.s32.totalorder %s25, 1
      %p90 = por %p88, %p89
      %p91 = scmp.ne.s32.totalorder %s82, %s83
      %p92 = scmp.eq.s32.totalorder %s25, 0
      %p93 = por %p91, %p92
      %p94 = scmp.ne.s32.totalorder %s82, %s83
      %p95 = scmp.eq.s32.totalorder %s26, 1
      %p96 = por %p94, %p95
      %p98 = scmp.ne.s32.totalorder %s83, %s97
      %p99 = scmp.eq.s32.totalorder %s26, 0
      %p100 = por %p98, %p99
      %s102 = sadd.s32 %s101, 1
      %p105 = scmp.eq.s32.totalorder %s20, 1
      %p106 = scmp.ne.s32.totalorder %s101, %s103
      %p107 = scmp.eq.s32.totalorder %s20, 0
      %p108 = por %p106, %p107
      %p109 = scmp.ne.s32.totalorder %s101, %s103
      %p110 = scmp.eq.s32.totalorder %s25, 1
      %p111 = por %p109, %p110
      %p112 = scmp.ne.s32.totalorder %s103, %s104
      %p113 = scmp.eq.s32.totalorder %s25, 0
      %p114 = por %p112, %p113
      %p115 = scmp.ne.s32.totalorder %s103, %s104
      %p116 = scmp.eq.s32.totalorder %s26, 1
      %p117 = por %p115, %p116
      %p119 = scmp.ne.s32.totalorder %s104, %s118
      %p120 = scmp.eq.s32.totalorder %s26, 0
      %p121 = por %p119, %p120
      %s122 = ssub.s32 %s20, %s27
      %p123 = scmp.eq.s32.totalorder %s122, 0
      %s125 = sadd.s32 %s124, 1
      %s126 = scalar_select %p123, %s124, %s125
      %p129 = pneg %p123
      %p130 = scmp.eq.s32.totalorder %s20, 1
      %p131 = por %p129, %p130
      %p132 = scmp.ne.s32.totalorder %s124, %s127
      %p133 = scmp.eq.s32.totalorder %s20, 0
      %p134 = por %p132, %p133
      %p135 = scmp.ne.s32.totalorder %s124, %s127
      %p136 = scmp.eq.s32.totalorder %s25, 1
      %p137 = por %p135, %p136
      %p138 = scmp.ne.s32.totalorder %s127, %s128
      %p139 = scmp.eq.s32.totalorder %s25, 0
      %p140 = por %p138, %p139
      %p141 = scmp.ne.s32.totalorder %s127, %s128
      %p142 = scmp.eq.s32.totalorder %s26, 1
      %p143 = por %p141, %p142
      %p145 = scmp.ne.s32.totalorder %s128, %s144
      %p146 = scmp.eq.s32.totalorder %s26, 0
      %p147 = por %p145, %p146
      %p148 = scmp.le.s32.totalorder 1, %s20
      %p149 = scmp.lt.s32.totalorder %s20, 3
      %p150 = pnand %p148, %p149
      %p151 = pneg %p150
      // Predicated region
      $region9: #{encoder_forward.7} parent=5 // pred_check
        _
      $region10: #{encoder_forward.7} parent=5 // pred_check_branch
        %153 = sbr.rel (%p150) target = $region12
      $region11: #{encoder_forward.7} parent=5 // pred_region
        %s154 = ssub.s32 %s20, 1
        // Predicated region
        $region13: #{encoder_forward.7} parent=11 // pred_check
          %p155 = pneg %p93
        $region14: #{encoder_forward.7} parent=11 // pred_check_branch
          %157 = sbr.rel (%p155) target = $region16
        $region15: #{encoder_forward.7} parent=11 // pred_region
          %s159 = ssub.s32 256, 256
          %160 = vsyncadd [#allocation7], %s159
          %s161 = sshll.u32 [#allocation8], 4
          %s162 = int_to_ptr.vmem [resolvable:$true] %s161
          %167 = dma.hbm_to_vmem [thread:$0]  %s2, 256, %s162, [#allocation7], 64, 64, 4
        $region16: #{encoder_forward.7} parent=11 // pred_fallthru
          _
        // Predicated region
        $region17: #{encoder_forward.7} parent=11 // pred_check
          %p168 = pneg %p114
        $region18: #{encoder_forward.7} parent=11 // pred_check_branch
          %170 = sbr.rel (%p168) target = $region20
        $region19: #{encoder_forward.7} parent=11 // pred_region
          %s172 = ssub.s32 16, 16
          %173 = vsyncadd [#allocation10], %s172
          %s175 = sshll.u32 [#allocation9], 4
          %s176 = int_to_ptr.vmem [resolvable:$true] %s175
          %178 = dma.hbm_to_vmem [thread:$0]  %s3, 16, %s176, [#allocation10]
        $region20: #{encoder_forward.7} parent=11 // pred_fallthru
          _
      $region12: #{encoder_forward.7} parent=5 // pred_fallthru
        _
      %p179 = scmp.lt.s32.totalorder %s20, 2
      // Predicated region
      $region21: #{encoder_forward.7} parent=5 // pred_check
        %p180 = pneg %p179
      $region22: #{encoder_forward.7} parent=5 // pred_check_branch
        %182 = sbr.rel (%p180) target = $region24
      $region23: #{encoder_forward.7} parent=5 // pred_region
        // Predicated region
        $region25: #{encoder_forward.7} parent=23 // pred_check
          %p183 = pneg %p40
        $region26: #{encoder_forward.7} parent=23 // pred_check_branch
          %185 = sbr.rel (%p183) target = $region28
        $region27: #{encoder_forward.7} parent=23 // pred_region
          %s186 = sand.u32 %s30, 1
          %s187 = scalar_lea.sflag [#allocation4], %s186
          %s188 = sand.u32 %s30, 1
          %s189 = smul.addr %s188, 4
          %s190 = scalar_lea.vmem [#allocation3], %s189
          %s192 = ssub.s32 64, 64
          %193 = vsyncadd %s187, %s192
          %s194 = smul.addr %s20, 64
          %s195 = scalar_lea.hbm %s0, %s194
          %s197 = sshll.u32 %s190, 4
          %s198 = int_to_ptr.vmem [resolvable:$true] %s197
          %200 = dma.hbm_to_vmem [thread:$0]  %s195, 64, %s198, %s187
        $region28: #{encoder_forward.7} parent=23 // pred_fallthru
          _
        // Predicated region
        $region29: #{encoder_forward.7} parent=23 // pred_check
          %p201 = pneg %p66
        $region30: #{encoder_forward.7} parent=23 // pred_check_branch
          %203 = sbr.rel (%p201) target = $region32
        $region31: #{encoder_forward.7} parent=23 // pred_region
          %s204 = sand.u32 %s20, 1
          %s205 = scalar_lea.sflag [#allocation7], %s204
          %s206 = sand.u32 %s56, 1
          %s207 = smul.addr %s206, 8
          %s208 = scalar_lea.vmem [#allocation6], %s207
          %s210 = ssub.s32 128, 128
          %211 = vsyncadd %s205, %s210
          %s212 = smul.addr %s20, 128
          %s213 = scalar_lea.hbm %s1, %s212
          %s215 = sshll.u32 %s208, 4
          %s216 = int_to_ptr.vmem [resolvable:$true] %s215
          %218 = dma.hbm_to_vmem [thread:$0]  %s213, 128, %s216, %s205
        $region32: #{encoder_forward.7} parent=23 // pred_fallthru
          _
      $region24: #{encoder_forward.7} parent=5 // pred_fallthru
        _
      %p219 = scmp.le.s32.totalorder 1, %s20
      %p220 = scmp.lt.s32.totalorder %s20, 3
      %p221 = pnand %p219, %p220
      %p222 = pneg %p221
      // Predicated region
      $region33: #{encoder_forward.7} parent=5 // pred_check
        _
      $region34: #{encoder_forward.7} parent=5 // pred_check_branch
        %224 = sbr.rel (%p221) target = $region36
      $region35: #{encoder_forward.7} parent=5 // pred_region
        %s225 = ssub.s32 %s20, 1
        %s226 = sand.u32 %s33, 1
        %s227 = scalar_lea.sflag [#allocation4], %s226
        %s228 = sand.u32 %s33, 1
        %s229 = smul.addr %s228, 4
        %s230 = scalar_lea.vmem [#allocation3], %s229
        // Predicated region
        $region37: #{encoder_forward.7} parent=35 // pred_check
          %p231 = pneg %p46
        $region38: #{encoder_forward.7} parent=35 // pred_check_branch
          %233 = sbr.rel (%p231) target = $region40
        $region39: #{encoder_forward.7} parent=35 // pred_region
          %234 = dma.done %s227, 64
        $region40: #{encoder_forward.7} parent=35 // pred_fallthru
          _
        %s235 = sand.u32 %s25, 1
        %s236 = scalar_lea.sflag [#allocation7], %s235
        %s237 = sand.u32 %s59, 1
        %s238 = smul.addr %s237, 8
        %s239 = scalar_lea.vmem [#allocation6], %s238
        // Predicated region
        $region41: #{encoder_forward.7} parent=35 // pred_check
          %p240 = pneg %p72
        $region42: #{encoder_forward.7} parent=35 // pred_check_branch
          %242 = sbr.rel (%p240) target = $region44
        $region43: #{encoder_forward.7} parent=35 // pred_region
          %243 = dma.done %s236, 128
        $region44: #{encoder_forward.7} parent=35 // pred_fallthru
          _
        // Predicated region
        $region45: #{encoder_forward.7} parent=35 // pred_check
          %p244 = pneg %p93
        $region46: #{encoder_forward.7} parent=35 // pred_check_branch
          %246 = sbr.rel (%p244) target = $region48
        $region47: #{encoder_forward.7} parent=35 // pred_region
          %247 = dma.done [#allocation7], 256
        $region48: #{encoder_forward.7} parent=35 // pred_fallthru
          _
        // Predicated region
        $region49: #{encoder_forward.7} parent=35 // pred_check
          %p248 = pneg %p114
        $region50: #{encoder_forward.7} parent=35 // pred_check_branch
          %250 = sbr.rel (%p248) target = $region52
        $region51: #{encoder_forward.7} parent=35 // pred_region
          %251 = dma.done [#allocation10], 16
        $region52: #{encoder_forward.7} parent=35 // pred_fallthru
          _
        %s252 = sand.u32 %s33, 1
        %s253 = scalar_lea.sflag [#allocation4], %s252
        %s254 = sand.u32 %s33, 1
        %s255 = smul.addr %s254, 4
        %s256 = scalar_lea.vmem [#allocation3], %s255
        %p257 = pneg %p46
        %p258 = pneg %p43
        %s259 = sand.u32 %s25, 1
        %s260 = scalar_lea.sflag [#allocation7], %s259
        %s261 = sand.u32 %s59, 1
        %s262 = smul.addr %s261, 8
        %s263 = scalar_lea.vmem [#allocation6], %s262
        %p264 = pneg %p72
        %p265 = pneg %p69
        %p266 = pneg %p93
        %p267 = pneg %p90
        %p268 = pneg %p114
        %p269 = pneg %p111
        %p270 = pneg %p140
        %p271 = pneg %p137
        %s272 = sand.u32 %s127, 1
        %s273 = scalar_lea.sflag [#allocation5], %s272
        %s274 = sand.u32 %s127, 1
        %s275 = smul.addr %s274, 8
        %s276 = scalar_lea.vmem [#allocation11], %s275
        %v278 = vld [vmem:[%s230] sm:$0xf]
        %v279 = vunpack.c.l.bf16 %v278
        %v280 = vmul.f32 %v279, 0.35355338
        %v281 = vpack.c.bf16 %v280, %v280
        %v283 = vunpack.c.l.b16 %v278
        %v284 = vpack.c.b16 %v283, %v283
        %285 = vrot.lane.b32.xlu0 %v284, 96
        %v286 = vpop.permute.xlu0 %285
        %vm287 = vcmask 64512
        %v289 = vsel %vm287, %v281, 0
        %v292 = vsel %vm287, %v286, 0
        %294 = vmatprep.subr.bf16.mxu0 0
        %295 = vmatpush1.bf16.xpose.msra.mxu0 %v292
        %296 = vmatprep.subr.bf16.mxu0 0
        %297 = vmatpush1.bf16.xpose.msra.mxu0 0
        %298 = vmatprep.subr.bf16.mxu0 0
        %299 = vmatpush1.bf16.xpose.msra.mxu0 0
        %300 = vmatprep.subr.bf16.mxu0 0
        %301 = vmatpush1.bf16.xpose.msra.mxu0 0
        %302 = vmatprep.subr.bf16.mxu0 0
        %303 = vmatpush1.bf16.xpose.msra.mxu0 0
        %304 = vmatprep.subr.bf16.mxu0 0
        %305 = vmatpush1.bf16.xpose.msra.mxu0 0
        %306 = vmatprep.subr.bf16.mxu0 0
        %307 = vmatpush1.bf16.xpose.msra.mxu0 0
        %308 = vmatprep.subr.bf16.mxu0 0
        %309 = vmatpush1.bf16.xpose.msra.mxu0 0
        %310 = vmatprep.subr.bf16.mxu0 0
        %311 = vmatpush1.bf16.xpose.msra.mxu0 0
        %312 = vmatprep.subr.bf16.mxu0 0
        %313 = vmatpush1.bf16.xpose.msra.mxu0 0
        %314 = vmatprep.subr.bf16.mxu0 0
        %315 = vmatpush1.bf16.xpose.msra.mxu0 0
        %316 = vmatprep.subr.bf16.mxu0 0
        %317 = vmatpush1.bf16.xpose.msra.mxu0 0
        %318 = vmatprep.subr.bf16.mxu0 0
        %319 = vmatpush1.bf16.xpose.msra.mxu0 0
        %320 = vmatprep.subr.bf16.mxu0 0
        %321 = vmatpush1.bf16.xpose.msra.mxu0 0
        %322 = vmatprep.subr.bf16.mxu0 0
        %323 = vmatpush1.bf16.xpose.msra.mxu0 0
        %324 = vmatprep.subr.bf16.mxu0 0
        %325 = vmatpush1.bf16.xpose.msra.mxu0 0
        %326 = vmatprep.mubr.bf16.mxu0 0
        %327 = vmatmul.mubr.bf16.gmra.mrb[0].mxu0 %v289
        %v328 = vpop.f32.mrb[0].mxu0
        %v329 = vadd.f32 0.0, %v328
        %v330 = vpop.f32.mrb[0].mxu0
        %v331 = vpop.f32.mrb[0].mxu0
        %v332 = vpop.f32.mrb[0].mxu0
        %333 = vdwg.mxu0
        %v334 = vsel %vm287, %v329, -inf
        %335 = vmax.xlane.f32.xlu0 %v334
        %v336 = vpop.xlane.xlu0 %335
        %v337 = vsub.f32 %v329, %v336
        %v338 = vmul.f32 %v337, 1.442695
        %v339 = vpow.pop %v338
        %v340 = vsel %vm287, %v339, 0.0
        %341 = vadd.xlane.f32.xlu0 %v340
        %v342 = vpop.xlane.xlu0 %341
        %v343 = vrcp.pop %v342
        %v344 = vmul.f32 %v339, %v343
        %v345 = vpack.c.bf16 %v344, %v344
        %346 = vrot.lane.b32.xlu0 %v284, 64
        %v347 = vpop.permute.xlu0 %346
        %v349 = vsel %vm287, %v345, 0
        %vm351 = vcmask 1043456
        %v353 = vsel %vm351, %v347, 0
        %355 = vmatprep.subr.bf16.mxu0 0
        %356 = vmatpush1.bf16.msra.mxu0 %v353
        %357 = vmatprep.subr.bf16.mxu0 0
        %358 = vmatpush1.bf16.msra.mxu0 0
        %359 = vmatprep.subr.bf16.mxu0 0
        %360 = vmatpush1.bf16.msra.mxu0 0
        %361 = vmatprep.subr.bf16.mxu0 0
        %362 = vmatpush1.bf16.msra.mxu0 0
        %363 = vmatprep.subr.bf16.mxu0 0
        %364 = vmatpush1.bf16.msra.mxu0 0
        %365 = vmatprep.subr.bf16.mxu0 0
        %366 = vmatpush1.bf16.msra.mxu0 0
        %367 = vmatprep.subr.bf16.mxu0 0
        %368 = vmatpush1.bf16.msra.mxu0 0
        %369 = vmatprep.subr.bf16.mxu0 0
        %370 = vmatpush1.bf16.msra.mxu0 0
        %371 = vmatprep.subr.bf16.mxu0 0
        %372 = vmatpush1.bf16.msra.mxu0 0
        %373 = vmatprep.subr.bf16.mxu0 0
        %374 = vmatpush1.bf16.msra.mxu0 0
        %375 = vmatprep.subr.bf16.mxu0 0
        %376 = vmatpush1.bf16.msra.mxu0 0
        %377 = vmatprep.subr.bf16.mxu0 0
        %378 = vmatpush1.bf16.msra.mxu0 0
        %379 = vmatprep.subr.bf16.mxu0 0
        %380 = vmatpush1.bf16.msra.mxu0 0
        %381 = vmatprep.subr.bf16.mxu0 0
        %382 = vmatpush1.bf16.msra.mxu0 0
        %383 = vmatprep.subr.bf16.mxu0 0
        %384 = vmatpush1.bf16.msra.mxu0 0
        %385 = vmatprep.subr.bf16.mxu0 0
        %386 = vmatpush1.bf16.msra.mxu0 0
        %387 = vmatprep.mubr.bf16.mxu0 0
        %388 = vmatmul.mubr.bf16.gmra.mrb[0].mxu0 %v349
        %v389 = vpop.f32.mrb[0].mxu0
        %v390 = vadd.f32 0.0, %v389
        %v391 = vpop.f32.mrb[0].mxu0
        %v392 = vpop.f32.mrb[0].mxu0
        %v393 = vpop.f32.mrb[0].mxu0
        %394 = vdwg.mxu0
        %v395 = vpack.c.bf16 %v390, %v390
        %vm396 = vcmask 60416
        %397 = vst.msk [vmem:[#allocation2] sm:$0xf] %vm396, %v395
        %v398 = vld [vmem:[%s230] sm:$0xf]
        %v399 = vunpack.c.l.bf16 %v398
        %v400 = vmul.f32 %v399, 0.35355338
        %v401 = vpack.c.bf16 %v400, %v400
        %403 = vrot.lane.b32.xlu0 %v401, 120
        %v404 = vpop.permute.xlu0 %403
        %v406 = vunpack.c.l.b16 %v398
        %v407 = vpack.c.b16 %v406, %v406
        %408 = vrot.lane.b32.xlu0 %v407, 88
        %v409 = vpop.permute.xlu0 %408
        %v411 = vsel %vm287, %v404, 0
        %v414 = vsel %vm287, %v409, 0
        %416 = vmatprep.subr.bf16.mxu0 0
        %417 = vmatpush1.bf16.xpose.msra.mxu0 %v414
        %418 = vmatprep.subr.bf16.mxu0 0
        %419 = vmatpush1.bf16.xpose.msra.mxu0 0
        %420 = vmatprep.subr.bf16.mxu0 0
        %421 = vmatpush1.bf16.xpose.msra.mxu0 0
        %422 = vmatprep.subr.bf16.mxu0 0
        %423 = vmatpush1.bf16.xpose.msra.mxu0 0
        %424 = vmatprep.subr.bf16.mxu0 0
        %425 = vmatpush1.bf16.xpose.msra.mxu0 0
        %426 = vmatprep.subr.bf16.mxu0 0
        %427 = vmatpush1.bf16.xpose.msra.mxu0 0
        %428 = vmatprep.subr.bf16.mxu0 0
        %429 = vmatpush1.bf16.xpose.msra.mxu0 0
        %430 = vmatprep.subr.bf16.mxu0 0
        %431 = vmatpush1.bf16.xpose.msra.mxu0 0
        %432 = vmatprep.subr.bf16.mxu0 0
        %433 = vmatpush1.bf16.xpose.msra.mxu0 0
        %434 = vmatprep.subr.bf16.mxu0 0
        %435 = vmatpush1.bf16.xpose.msra.mxu0 0
        %436 = vmatprep.subr.bf16.mxu0 0
        %437 = vmatpush1.bf16.xpose.msra.mxu0 0
        %438 = vmatprep.subr.bf16.mxu0 0
        %439 = vmatpush1.bf16.xpose.msra.mxu0 0
        %440 = vmatprep.subr.bf16.mxu0 0
        %441 = vmatpush1.bf16.xpose.msra.mxu0 0
        %442 = vmatprep.subr.bf16.mxu0 0
        %443 = vmatpush1.bf16.xpose.msra.mxu0 0
        %444 = vmatprep.subr.bf16.mxu0 0
        %445 = vmatpush1.bf16.xpose.msra.mxu0 0
        %446 = vmatprep.subr.bf16.mxu0 0
        %447 = vmatpush1.bf16.xpose.msra.mxu0 0
        %448 = vmatprep.mubr.bf16.mxu0 0
        %449 = vmatmul.mubr.bf16.gmra.mrb[0].mxu0 %v411
        %v450 = vpop.f32.mrb[0].mxu0
        %v451 = vadd.f32 0.0, %v450
        %v452 = vpop.f32.mrb[0].mxu0
        %v453 = vpop.f32.mrb[0].mxu0
        %v454 = vpop.f32.mrb[0].mxu0
        %455 = vdwg.mxu0
        %v456 = vsel %vm287, %v451, -inf
        %457 = vmax.xlane.f32.xlu0 %v456
        %v458 = vpop.xlane.xlu0 %457
        %v459 = vsub.f32 %v451, %v458
        %v460 = vmul.f32 %v459, 1.442695
        %v461 = vpow.pop %v460
        %v462 = vsel %vm287, %v461, 0.0
        %463 = vadd.xlane.f32.xlu0 %v462
        %v464 = vpop.xlane.xlu0 %463
        %v465 = vrcp.pop %v464
        %v466 = vmul.f32 %v461, %v465
        %v467 = vpack.c.bf16 %v466, %v466
        %468 = vrot.lane.b32.xlu0 %v407, 56
        %v469 = vpop.permute.xlu0 %468
        %v471 = vsel %vm287, %v467, 0
        %v474 = vsel %vm351, %v469, 0
        %476 = vmatprep.subr.bf16.mxu0 0
        %477 = vmatpush1.bf16.msra.mxu0 %v474
        %478 = vmatprep.subr.bf16.mxu0 0
        %479 = vmatpush1.bf16.msra.mxu0 0
        %480 = vmatprep.subr.bf16.mxu0 0
        %481 = vmatpush1.bf16.msra.mxu0 0
        %482 = vmatprep.subr.bf16.mxu0 0
        %483 = vmatpush1.bf16.msra.mxu0 0
        %484 = vmatprep.subr.bf16.mxu0 0
        %485 = vmatpush1.bf16.msra.mxu0 0
        %486 = vmatprep.subr.bf16.mxu0 0
        %487 = vmatpush1.bf16.msra.mxu0 0
        %488 = vmatprep.subr.bf16.mxu0 0
        %489 = vmatpush1.bf16.msra.mxu0 0
        %490 = vmatprep.subr.bf16.mxu0 0
        %491 = vmatpush1.bf16.msra.mxu0 0
        %492 = vmatprep.subr.bf16.mxu0 0
        %493 = vmatpush1.bf16.msra.mxu0 0
        %494 = vmatprep.subr.bf16.mxu0 0
        %495 = vmatpush1.bf16.msra.mxu0 0
        %496 = vmatprep.subr.bf16.mxu0 0
        %497 = vmatpush1.bf16.msra.mxu0 0
        %498 = vmatprep.subr.bf16.mxu0 0
        %499 = vmatpush1.bf16.msra.mxu0 0
        %500 = vmatprep.subr.bf16.mxu0 0
        %501 = vmatpush1.bf16.msra.mxu0 0
        %502 = vmatprep.subr.bf16.mxu0 0
        %503 = vmatpush1.bf16.msra.mxu0 0
        %504 = vmatprep.subr.bf16.mxu0 0
        %505 = vmatpush1.bf16.msra.mxu0 0
        %506 = vmatprep.subr.bf16.mxu0 0
        %507 = vmatpush1.bf16.msra.mxu0 0
        %508 = vmatprep.mubr.bf16.mxu0 0
        %509 = vmatmul.mubr.bf16.gmra.mrb[0].mxu0 %v471
        %v510 = vpop.f32.mrb[0].mxu0
        %v511 = vadd.f32 0.0, %v510
        %v512 = vpop.f32.mrb[0].mxu0
        %v513 = vpop.f32.mrb[0].mxu0
        %v514 = vpop.f32.mrb[0].mxu0
        %515 = vdwg.mxu0
        %v516 = vpack.c.bf16 %v511, %v511
        %v518 = vunpack.c.l.b16 %v516
        %v519 = vpack.c.b16 %v518, %v518
        %520 = vrot.lane.b32.xlu0 %v519, 8
        %v521 = vpop.permute.xlu0 %520
        %vm523 = vcmask 126016
        %524 = vst.msk [vmem:[#allocation2] sm:$0xf] %vm523, %v521
        %v525 = vld [vmem:[%s230] sm:$0xf]
        %v526 = vunpack.c.l.bf16 %v525
        %v527 = vmul.f32 %v526, 0.35355338
        %v528 = vpack.c.bf16 %v527, %v527
        %530 = vrot.lane.b32.xlu0 %v528, 112
        %v531 = vpop.permute.xlu0 %530
        %v533 = vunpack.c.l.b16 %v525
        %v534 = vpack.c.b16 %v533, %v533
        %535 = vrot.lane.b32.xlu0 %v534, 80
        %v536 = vpop.permute.xlu0 %535
        %v538 = vsel %vm287, %v531, 0
        %v541 = vsel %vm287, %v536, 0
        %543 = vmatprep.subr.bf16.mxu0 0
        %544 = vmatpush1.bf16.xpose.msra.mxu0 %v541
        %545 = vmatprep.subr.bf16.mxu0 0
        %546 = vmatpush1.bf16.xpose.msra.mxu0 0
        %547 = vmatprep.subr.bf16.mxu0 0
        %548 = vmatpush1.bf16.xpose.msra.mxu0 0
        %549 = vmatprep.subr.bf16.mxu0 0
        %550 = vmatpush1.bf16.xpose.msra.mxu0 0
        %551 = vmatprep.subr.bf16.mxu0 0
        %552 = vmatpush1.bf16.xpose.msra.mxu0 0
        %553 = vmatprep.subr.bf16.mxu0 0
        %554 = vmatpush1.bf16.xpose.msra.mxu0 0
        %555 = vmatprep.subr.bf16.mxu0 0
        %556 = vmatpush1.bf16.xpose.msra.mxu0 0
        %557 = vmatprep.subr.bf16.mxu0 0
        %558 = vmatpush1.bf16.xpose.msra.mxu0 0
        %559 = vmatprep.subr.bf16.mxu0 0
        %560 = vmatpush1.bf16.xpose.msra.mxu0 0
        %561 = vmatprep.subr.bf16.mxu0 0
        %562 = vmatpush1.bf16.xpose.msra.mxu0 0
        %563 = vmatprep.subr.bf16.mxu0 0
        %564 = vmatpush1.bf16.xpose.msra.mxu0 0
        %565 = vmatprep.subr.bf16.mxu0 0
        %566 = vmatpush1.bf16.xpose.msra.mxu0 0
        %567 = vmatprep.subr.bf16.mxu0 0
        %568 = vmatpush1.bf16.xpose.msra.mxu0 0
        %569 = vmatprep.subr.bf16.mxu0 0
        %570 = vmatpush1.bf16.xpose.msra.mxu0 0
        %571 = vmatprep.subr.bf16.mxu0 0
        %572 = vmatpush1.bf16.xpose.msra.mxu0 0
        %573 = vmatprep.subr.bf16.mxu0 0
        %574 = vmatpush1.bf16.xpose.msra.mxu0 0
        %575 = vmatprep.mubr.bf16.mxu0 0
        %576 = vmatmul.mubr.bf16.gmra.mrb[0].mxu0 %v538
        %v577 = vpop.f32.mrb[0].mxu0
        %v578 = vadd.f32 0.0, %v577
        %v579 = vpop.f32.mrb[0].mxu0
        %v580 = vpop.f32.mrb[0].mxu0
        %v581 = vpop.f32.mrb[0].mxu0
        %582 = vdwg.mxu0
        %v583 = vsel %vm287, %v578, -inf
        %584 = vmax.xlane.f32.xlu0 %v583
        %v585 = vpop.xlane.xlu0 %584
        %v586 = vsub.f32 %v578, %v585
        %v587 = vmul.f32 %v586, 1.442695
        %v588 = vpow.pop %v587
        %v589 = vsel %vm287, %v588, 0.0
        %590 = vadd.xlane.f32.xlu0 %v589
        %v591 = vpop.xlane.xlu0 %590
        %v592 = vrcp.pop %v591
        %v593 = vmul.f32 %v588, %v592
        %v594 = vpack.c.bf16 %v593, %v593
        %595 = vrot.lane.b32.xlu0 %v534, 48
        %v596 = vpop.permute.xlu0 %595
        %v598 = vsel %vm287, %v594, 0
        %v601 = vsel %vm351, %v596, 0
        %603 = vmatprep.subr.bf16.mxu0 0
        %604 = vmatpush1.bf16.msra.mxu0 %v601
        %605 = vmatprep.subr.bf16.mxu0 0
        %606 = vmatpush1.bf16.msra.mxu0 0
        %607 = vmatprep.subr.bf16.mxu0 0
        %608 = vmatpush1.bf16.msra.mxu0 0
        %609 = vmatprep.subr.bf16.mxu0 0
        %610 = vmatpush1.bf16.msra.mxu0 0
        %611 = vmatprep.subr.bf16.mxu0 0
        %612 = vmatpush1.bf16.msra.mxu0 0
        %613 = vmatprep.subr.bf16.mxu0 0
        %614 = vmatpush1.bf16.msra.mxu0 0
        %615 = vmatprep.subr.bf16.mxu0 0
        %616 = vmatpush1.bf16.msra.mxu0 0
        %617 = vmatprep.subr.bf16.mxu0 0
        %618 = vmatpush1.bf16.msra.mxu0 0
        %619 = vmatprep.subr.bf16.mxu0 0
        %620 = vmatpush1.bf16.msra.mxu0 0
        %621 = vmatprep.subr.bf16.mxu0 0
        %622 = vmatpush1.bf16.msra.mxu0 0
        %623 = vmatprep.subr.bf16.mxu0 0
        %624 = vmatpush1.bf16.msra.mxu0 0
        %625 = vmatprep.subr.bf16.mxu0 0
        %626 = vmatpush1.bf16.msra.mxu0 0
        %627 = vmatprep.subr.bf16.mxu0 0
        %628 = vmatpush1.bf16.msra.mxu0 0
        %629 = vmatprep.subr.bf16.mxu0 0
        %630 = vmatpush1.bf16.msra.mxu0 0
        %631 = vmatprep.subr.bf16.mxu0 0
        %632 = vmatpush1.bf16.msra.mxu0 0
        %633 = vmatprep.subr.bf16.mxu0 0
        %634 = vmatpush1.bf16.msra.mxu0 0
        %635 = vmatprep.mubr.bf16.mxu0 0
        %636 = vmatmul.mubr.bf16.gmra.mrb[0].mxu0 %v598
        %v637 = vpop.f32.mrb[0].mxu0
        %v638 = vadd.f32 0.0, %v637
        %v639 = vpop.f32.mrb[0].mxu0
        %v640 = vpop.f32.mrb[0].mxu0
        %v641 = vpop.f32.mrb[0].mxu0
        %642 = vdwg.mxu0
        %v643 = vpack.c.bf16 %v638, %v638
        %v645 = vunpack.c.l.b16 %v643
        %v646 = vpack.c.b16 %v645, %v645
        %647 = vrot.lane.b32.xlu0 %v646, 16
        %v648 = vpop.permute.xlu0 %647
        %vm650 = vcmask 191616
        %651 = vst.msk [vmem:[#allocation2] sm:$0xf] %vm650, %v648
        %v652 = vld [vmem:[%s230] sm:$0xf]
        %v653 = vunpack.c.l.bf16 %v652
        %v654 = vmul.f32 %v653, 0.35355338
        %v655 = vpack.c.bf16 %v654, %v654
        %657 = vrot.lane.b32.xlu0 %v655, 104
        %v658 = vpop.permute.xlu0 %657
        %v660 = vunpack.c.l.b16 %v652
        %v661 = vpack.c.b16 %v660, %v660
        %662 = vrot.lane.b32.xlu0 %v661, 72
        %v663 = vpop.permute.xlu0 %662
        %v665 = vsel %vm287, %v658, 0
        %v668 = vsel %vm287, %v663, 0
        %670 = vmatprep.subr.bf16.mxu0 0
        %671 = vmatpush1.bf16.xpose.msra.mxu0 %v668
        %672 = vmatprep.subr.bf16.mxu0 0
        %673 = vmatpush1.bf16.xpose.msra.mxu0 0
        %674 = vmatprep.subr.bf16.mxu0 0
        %675 = vmatpush1.bf16.xpose.msra.mxu0 0
        %676 = vmatprep.subr.bf16.mxu0 0
        %677 = vmatpush1.bf16.xpose.msra.mxu0 0
        %678 = vmatprep.subr.bf16.mxu0 0
        %679 = vmatpush1.bf16.xpose.msra.mxu0 0
        %680 = vmatprep.subr.bf16.mxu0 0
        %681 = vmatpush1.bf16.xpose.msra.mxu0 0
        %682 = vmatprep.subr.bf16.mxu0 0
        %683 = vmatpush1.bf16.xpose.msra.mxu0 0
        %684 = vmatprep.subr.bf16.mxu0 0
        %685 = vmatpush1.bf16.xpose.msra.mxu0 0
        %686 = vmatprep.subr.bf16.mxu0 0
        %687 = vmatpush1.bf16.xpose.msra.mxu0 0
        %688 = vmatprep.subr.bf16.mxu0 0
        %689 = vmatpush1.bf16.xpose.msra.mxu0 0
        %690 = vmatprep.subr.bf16.mxu0 0
        %691 = vmatpush1.bf16.xpose.msra.mxu0 0
        %692 = vmatprep.subr.bf16.mxu0 0
        %693 = vmatpush1.bf16.xpose.msra.mxu0 0
        %694 = vmatprep.subr.bf16.mxu0 0
        %695 = vmatpush1.bf16.xpose.msra.mxu0 0
        %696 = vmatprep.subr.bf16.mxu0 0
        %697 = vmatpush1.bf16.xpose.msra.mxu0 0
        %698 = vmatprep.subr.bf16.mxu0 0
        %699 = vmatpush1.bf16.xpose.msra.mxu0 0
        %700 = vmatprep.subr.bf16.mxu0 0
        %701 = vmatpush1.bf16.xpose.msra.mxu0 0
        %702 = vmatprep.mubr.bf16.mxu0 0
        %703 = vmatmul.mubr.bf16.gmra.mrb[0].mxu0 %v665
        %v704 = vpop.f32.mrb[0].mxu0
        %v705 = vadd.f32 0.0, %v704
        %v706 = vpop.f32.mrb[0].mxu0
        %v707 = vpop.f32.mrb[0].mxu0
        %v708 = vpop.f32.mrb[0].mxu0
        %709 = vdwg.mxu0
        %v710 = vsel %vm287, %v705, -inf
        %711 = vmax.xlane.f32.xlu0 %v710
        %v712 = vpop.xlane.xlu0 %711
        %v713 = vsub.f32 %v705, %v712
        %v714 = vmul.f32 %v713, 1.442695
        %v715 = vpow.pop %v714
        %v716 = vsel %vm287, %v715, 0.0
        %717 = vadd.xlane.f32.xlu0 %v716
        %v718 = vpop.xlane.xlu0 %717
        %v719 = vrcp.pop %v718
        %v720 = vmul.f32 %v715, %v719
        %v721 = vpack.c.bf16 %v720, %v720
        %722 = vrot.lane.b32.xlu0 %v661, 40
        %v723 = vpop.permute.xlu0 %722
        %v725 = vsel %vm287, %v721, 0
        %v728 = vsel %vm351, %v723, 0
        %730 = vmatprep.subr.bf16.mxu0 0
        %731 = vmatpush1.bf16.msra.mxu0 %v728
        %732 = vmatprep.subr.bf16.mxu0 0
        %733 = vmatpush1.bf16.msra.mxu0 0
        %734 = vmatprep.subr.bf16.mxu0 0
        %735 = vmatpush1.bf16.msra.mxu0 0
        %736 = vmatprep.subr.bf16.mxu0 0
        %737 = vmatpush1.bf16.msra.mxu0 0
        %738 = vmatprep.subr.bf16.mxu0 0
        %739 = vmatpush1.bf16.msra.mxu0 0
        %740 = vmatprep.subr.bf16.mxu0 0
        %741 = vmatpush1.bf16.msra.mxu0 0
        %742 = vmatprep.subr.bf16.mxu0 0
        %743 = vmatpush1.bf16.msra.mxu0 0
        %744 = vmatprep.subr.bf16.mxu0 0
        %745 = vmatpush1.bf16.msra.mxu0 0
        %746 = vmatprep.subr.bf16.mxu0 0
        %747 = vmatpush1.bf16.msra.mxu0 0
        %748 = vmatprep.subr.bf16.mxu0 0
        %749 = vmatpush1.bf16.msra.mxu0 0
        %750 = vmatprep.subr.bf16.mxu0 0
        %751 = vmatpush1.bf16.msra.mxu0 0
        %752 = vmatprep.subr.bf16.mxu0 0
        %753 = vmatpush1.bf16.msra.mxu0 0
        %754 = vmatprep.subr.bf16.mxu0 0
        %755 = vmatpush1.bf16.msra.mxu0 0
        %756 = vmatprep.subr.bf16.mxu0 0
        %757 = vmatpush1.bf16.msra.mxu0 0
        %758 = vmatprep.subr.bf16.mxu0 0
        %759 = vmatpush1.bf16.msra.mxu0 0
        %760 = vmatprep.subr.bf16.mxu0 0
        %761 = vmatpush1.bf16.msra.mxu0 0
        %762 = vmatprep.mubr.bf16.mxu0 0
        %763 = vmatmul.mubr.bf16.gmra.mrb[0].mxu0 %v725
        %v764 = vpop.f32.mrb[0].mxu0
        %v765 = vadd.f32 0.0, %v764
        %v766 = vpop.f32.mrb[0].mxu0
        %v767 = vpop.f32.mrb[0].mxu0
        %v768 = vpop.f32.mrb[0].mxu0
        %769 = vdwg.mxu0
        %v770 = vpack.c.bf16 %v765, %v765
        %v772 = vunpack.c.l.b16 %v770
        %v773 = vpack.c.b16 %v772, %v772
        %774 = vrot.lane.b32.xlu0 %v773, 24
        %v775 = vpop.permute.xlu0 %774
        %vm777 = vcmask 257216
        %778 = vst.msk [vmem:[#allocation2] sm:$0xf] %vm777, %v775
        %v779 = vld [vmem:[%s239] sm:$0xff]
        %v780 = vld [vmem:[#allocation9] sm:$0x1]
        %v782 = vlaneseq
        %v783 = vshrl.u32 %v782, 7
        %v784 = vsub.s32 0, %v783
        %v785 = vrot.slane %v780, %v784
        %v787 = vadd.f32 %v779, %v785
        %v788 = vld [vmem:[#allocation2] sm:$0xf]
        %v789 = vld [vmem:[#allocation8] sm:$0xf]
        %v790 = vld [vmem:[#allocation8 + $0x4] sm:$0xf]
        %v791 = vld [vmem:[#allocation8 + $0x8] sm:$0xf]
        %v792 = vld [vmem:[#allocation8 + $0xc] sm:$0xf]
        %v797 = vunpack.c.l.b16 %v789
        %v798 = vunpack.c.l.b16 %v790
        %v799 = vunpack.c.l.b16 %v791
        %v800 = vunpack.c.l.b16 %v792
        %v801 = vpack.c.b16 %v798, %v797
        %v802 = vpack.c.b16 %v800, %v799
        %vm805 = vcmask 261120
        %v807 = vsel %vm805, %v788, 0
        %809 = vmatprep.subr.bf16.mxu0 0
        %810 = vmatpush1.bf16.msra.mxu0 %v801
        %811 = vmatprep.subr.bf16.mxu0 0
        %812 = vmatpush1.bf16.msra.mxu0 %v802
        %813 = vmatprep.subr.bf16.mxu0 0
        %814 = vmatpush1.bf16.msra.mxu0 0
        %815 = vmatprep.subr.bf16.mxu0 0
        %816 = vmatpush1.bf16.msra.mxu0 0
        %817 = vmatprep.subr.bf16.mxu0 0
        %818 = vmatpush1.bf16.msra.mxu0 0
        %819 = vmatprep.subr.bf16.mxu0 0
        %820 = vmatpush1.bf16.msra.mxu0 0
        %821 = vmatprep.subr.bf16.mxu0 0
        %822 = vmatpush1.bf16.msra.mxu0 0
        %823 = vmatprep.subr.bf16.mxu0 0
        %824 = vmatpush1.bf16.msra.mxu0 0
        %825 = vmatprep.subr.bf16.mxu0 0
        %826 = vmatpush1.bf16.msra.mxu0 0
        %827 = vmatprep.subr.bf16.mxu0 0
        %828 = vmatpush1.bf16.msra.mxu0 0
        %829 = vmatprep.subr.bf16.mxu0 0
        %830 = vmatpush1.bf16.msra.mxu0 0
        %831 = vmatprep.subr.bf16.mxu0 0
        %832 = vmatpush1.bf16.msra.mxu0 0
        %833 = vmatprep.subr.bf16.mxu0 0
        %834 = vmatpush1.bf16.msra.mxu0 0
        %835 = vmatprep.subr.bf16.mxu0 0
        %836 = vmatpush1.bf16.msra.mxu0 0
        %837 = vmatprep.subr.bf16.mxu0 0
        %838 = vmatpush1.bf16.msra.mxu0 0
        %839 = vmatprep.subr.bf16.mxu0 0
        %840 = vmatpush1.bf16.msra.mxu0 0
        %841 = vmatprep.mubr.bf16.mxu0 0
        %842 = vmatmul.mubr.bf16.gmra.mrb[0].mxu0 %v807
        %v843 = vpop.f32.mrb[0].mxu0
        %v844 = vadd.f32 0.0, %v843
        %v845 = vpop.f32.mrb[0].mxu0
        %v846 = vpop.f32.mrb[0].mxu0
        %v847 = vpop.f32.mrb[0].mxu0
        %848 = vdwg.mxu0
        %v849 = vadd.f32 %v787, %v844
        %850 = vst.msk [vmem:[%s276] sm:$0xff] %vm805, %v849
        %s851 = sand.u32 %s127, 1
        %s852 = scalar_lea.sflag [#allocation5], %s851
        %s853 = sand.u32 %s127, 1
        %s854 = smul.addr %s853, 8
        %s855 = scalar_lea.vmem [#allocation11], %s854
        // Predicated region
        $region53: #{encoder_forward.7} parent=35 // pred_check
          %p856 = pneg %p137
        $region54: #{encoder_forward.7} parent=35 // pred_check_branch
          %858 = sbr.rel (%p856) target = $region56
        $region55: #{encoder_forward.7} parent=35 // pred_region
          %s860 = ssub.s32 128, 128
          %861 = vsyncadd %s852, %s860
          %s862 = smul.addr %s25, 128
          %s863 = scalar_lea.hbm %s4, %s862
          %s865 = sshll.u32 %s855, 4
          %s866 = int_to_ptr.vmem [resolvable:$true] %s865
          %868 = dma.vmem_to_hbm [thread:$0]  %s866, 128, %s863, %s852
        $region56: #{encoder_forward.7} parent=35 // pred_fallthru
          _
      $region36: #{encoder_forward.7} parent=5 // pred_fallthru
        _
      %p869 = scmp.le.s32.totalorder 2, %s20
      // Predicated region
      $region57: #{encoder_forward.7} parent=5 // pred_check
        %p870 = pneg %p869
      $region58: #{encoder_forward.7} parent=5 // pred_check_branch
        %872 = sbr.rel (%p870) target = $region60
      $region59: #{encoder_forward.7} parent=5 // pred_region
        %s873 = ssub.s32 %s20, 2
        // Predicated region
        $region61: #{encoder_forward.7} parent=59 // pred_check
          %p874 = pneg %p143
        $region62: #{encoder_forward.7} parent=59 // pred_check_branch
          %876 = sbr.rel (%p874) target = $region64
        $region63: #{encoder_forward.7} parent=59 // pred_region
          %s877 = sand.u32 %s128, 1
          %s878 = scalar_lea.sflag [#allocation5], %s877
          %s879 = sand.u32 %s128, 1
          %s880 = smul.addr %s879, 8
          %s881 = scalar_lea.vmem [#allocation11], %s880
          %882 = dma.done %s878, 128
        $region64: #{encoder_forward.7} parent=59 // pred_fallthru
          _
      $region60: #{encoder_forward.7} parent=5 // pred_fallthru
        _
    $region6: #{encoder_forward.7} parent=1 // loop_footer
      %s24 = sadd.s32 1, %s20
    $region7: #{encoder_forward.7} parent=1 // loop_footer_branch
      %19 = sbr.rel target = $region3
    $region8: #{encoder_forward.7} parent=1 // loop_exit
      _
    %883 = vsyncpa [#allocation4], 1
    %s884 = scalar_lea.sflag [#allocation4], 1
    %885 = vsyncpa %s884, 1
    %886 = vsyncpa [#allocation7], 1
    %s887 = scalar_lea.sflag [#allocation7], 1
    %888 = vsyncpa %s887, 1
    %889 = vsyncpa [#allocation10], 1
    %890 = vsyncpa [#allocation5], 1
    %s891 = scalar_lea.sflag [#allocation5], 1
    %892 = vsyncpa %s891, 1

// kernel: encoder_forward.8
$region0: #{encoder_forward.8}
  #allocation0 [shape = 'u32[]', space=smem, size = 0x4, offset = 0x4, fixed_abs, tag = 'smem constant byte address 0x4 - core index']
  #allocation1 [shape = 'u32[144,128]{1,0:T(1,128)}', space=vmem, size = 0x12000, scoped, tag = 'internal scratch']
  #allocation2 [shape = 'bf16[16,32]{1,0:T(16,128)(2,1)}', space=vmem, size = 0x1000, scoped, tag = 'scratch operand']
  #allocation3 [shape = 'f32[16,32]{1,0:T(8,128)}', space=vmem, size = 0x2000, scoped, tag = 'scratch operand']
  %s0 = inlined_call_operand.hbm [shape: f32[16,32], index: 0, kind: input, shape index: {}]
  %s1 = inlined_call_operand.hbm [shape: f32[1,32], index: 1, kind: input, shape index: {}]
  %s2 = inlined_call_operand.hbm [shape: f32[1,32], index: 2, kind: input, shape index: {}]
  %s3 = inlined_call_operand.hbm [shape: bf16[32,128], index: 3, kind: input, shape index: {}]
  %s4 = inlined_call_operand.hbm [shape: f32[1,128], index: 4, kind: input, shape index: {}]
  %s5 = inlined_call_operand.hbm [shape: bf16[128,32], index: 5, kind: input, shape index: {}]
  %s6 = inlined_call_operand.hbm [shape: f32[1,32], index: 6, kind: input, shape index: {}]
  %s7 = inlined_call_operand.hbm [shape: f32[1,32], index: 7, kind: input, shape index: {}]
  %s8 = inlined_call_operand.hbm [shape: f32[1,32], index: 8, kind: input, shape index: {}]
  %s9 = inlined_call_operand.hbm [shape: f32[16,32], index: 9, kind: output, shape index: {}]
  %s10 = sld [smem:[#allocation0]]
  $region90: #{encoder_forward.8} parent=0
    _
  %s12 = ssub.s32 1, %s10
  %s13 = scalar_select 0, %s12, %s10
  $region1: #{encoder_forward.8} parent=0
    #allocation4 [shape = 'u8[8192]{0}', space=vmem, size = 0x2000, scoped, tag = 'input window, operand 0, single buffered']
    #allocation5 [shape = 's32[1]{0}', space=sflag, size = 0x4, scoped, tag = 'scoped memory for encoder_forward.8']
    #allocation6 [shape = 's32[1]{0}', space=sflag, size = 0x4, scoped, tag = 'scoped memory for encoder_forward.8']
    #allocation7 [shape = 'u8[512]{0}', space=vmem, size = 0x400, scoped, tag = 'input window, operand 1, single buffered']
    #allocation8 [shape = 's32[1]{0}', space=sflag, size = 0x4, scoped, tag = 'scoped memory for encoder_forward.8']
    #allocation9 [shape = 'u8[512]{0}', space=vmem, size = 0x400, scoped, tag = 'input window, operand 2, single buffered']
    #allocation10 [shape = 'u8[8192]{0}', space=vmem, size = 0x2000, scoped, tag = 'input window, operand 3, single buffered']
    #allocation11 [shape = 's32[1]{0}', space=sflag, size = 0x4, scoped, tag = 'scoped memory for encoder_forward.8']
    #allocation12 [shape = 'u8[512]{0}', space=vmem, size = 0x400, scoped, tag = 'input window, operand 4, single buffered']
    #allocation13 [shape = 'u8[32768]{0}', space=vmem, size = 0x8000, scoped, tag = 'input window, operand 5, single buffered']
    #allocation14 [shape = 's32[1]{0}', space=sflag, size = 0x4, scoped, tag = 'scoped memory for encoder_forward.8']
    #allocation15 [shape = 'u8[512]{0}', space=vmem, size = 0x400, scoped, tag = 'input window, operand 6, single buffered']
    #allocation16 [shape = 'u8[512]{0}', space=vmem, size = 0x400, scoped, tag = 'input window, operand 7, single buffered']
    #allocation17 [shape = 's32[1]{0}', space=sflag, size = 0x4, scoped, tag = 'scoped memory for encoder_forward.8']
    #allocation18 [shape = 'u8[512]{0}', space=vmem, size = 0x400, scoped, tag = 'input window, operand 8, single buffered']
    #allocation19 [shape = 'u8[8192]{0}', space=vmem, size = 0x2000, scoped, tag = 'output window, operand 0, single buffered']
    %14 = vsyncpa [#allocation5], 0
    %15 = vsyncpa [#allocation8], 0
    %16 = vsyncpa [#allocation11], 0
    %17 = vsyncpa [#allocation14], 0
    %18 = vsyncpa [#allocation17], 0
    %19 = vsyncpa [#allocation6], 0
    // Predicated region
    $region2: #{encoder_forward.8} parent=1 // pred_check
      _
    $region3: #{encoder_forward.8} parent=1 // pred_check_branch
      %21 = sbr.rel (0) target = $region5
    $region4: #{encoder_forward.8} parent=1 // pred_region
      %s23 = ssub.s32 256, 256
      %24 = vsyncadd [#allocation5], %s23
      %s25 = sshll.u32 [#allocation4], 4
      %s26 = int_to_ptr.vmem [resolvable:$true] %s25
      %31 = dma.hbm_to_vmem [thread:$0]  %s0, 256, %s26, [#allocation5], 128, 128, 8
    $region5: #{encoder_forward.8} parent=1 // pred_fallthru
      _
    // Predicated region
    $region6: #{encoder_forward.8} parent=1 // pred_check
      _
    $region7: #{encoder_forward.8} parent=1 // pred_check_branch
      %33 = sbr.rel (0) target = $region9
    $region8: #{encoder_forward.8} parent=1 // pred_region
      %s35 = ssub.s32 16, 16
      %36 = vsyncadd [#allocation8], %s35
      %s38 = sshll.u32 [#allocation7], 4
      %s39 = int_to_ptr.vmem [resolvable:$true] %s38
      %41 = dma.hbm_to_vmem [thread:$0]  %s1, 16, %s39, [#allocation8]
    $region9: #{encoder_forward.8} parent=1 // pred_fallthru
      _
    // Predicated region
    $region10: #{encoder_forward.8} parent=1 // pred_check
      _
    $region11: #{encoder_forward.8} parent=1 // pred_check_branch
      %43 = sbr.rel (0) target = $region13
    $region12: #{encoder_forward.8} parent=1 // pred_region
      %s45 = ssub.s32 16, 16
      %46 = vsyncadd [#allocation8], %s45
      %s48 = sshll.u32 [#allocation9], 4
      %s49 = int_to_ptr.vmem [resolvable:$true] %s48
      %51 = dma.hbm_to_vmem [thread:$0]  %s2, 16, %s49, [#allocation8]
    $region13: #{encoder_forward.8} parent=1 // pred_fallthru
      _
    // Predicated region
    $region14: #{encoder_forward.8} parent=1 // pred_check
      _
    $region15: #{encoder_forward.8} parent=1 // pred_check_branch
      %53 = sbr.rel (0) target = $region17
    $region16: #{encoder_forward.8} parent=1 // pred_region
      %s55 = ssub.s32 256, 256
      %56 = vsyncadd [#allocation11], %s55
      %s57 = sshll.u32 [#allocation10], 4
      %s58 = int_to_ptr.vmem [resolvable:$true] %s57
      %63 = dma.hbm_to_vmem [thread:$0]  %s3, 256, %s58, [#allocation11], 64, 64, 4
    $region17: #{encoder_forward.8} parent=1 // pred_fallthru
      _
    // Predicated region
    $region18: #{encoder_forward.8} parent=1 // pred_check
      _
    $region19: #{encoder_forward.8} parent=1 // pred_check_branch
      %65 = sbr.rel (0) target = $region21
    $region20: #{encoder_forward.8} parent=1 // pred_region
      %s67 = ssub.s32 16, 16
      %68 = vsyncadd [#allocation11], %s67
      %s70 = sshll.u32 [#allocation12], 4
      %s71 = int_to_ptr.vmem [resolvable:$true] %s70
      %73 = dma.hbm_to_vmem [thread:$0]  %s4, 16, %s71, [#allocation11]
    $region21: #{encoder_forward.8} parent=1 // pred_fallthru
      _
    // Predicated region
    $region22: #{encoder_forward.8} parent=1 // pred_check
      _
    $region23: #{encoder_forward.8} parent=1 // pred_check_branch
      %75 = sbr.rel (0) target = $region25
    $region24: #{encoder_forward.8} parent=1 // pred_region
      %s77 = ssub.s32 1024, 1024
      %78 = vsyncadd [#allocation14], %s77
      %s79 = sshll.u32 [#allocation13], 4
      %s80 = int_to_ptr.vmem [resolvable:$true] %s79
      %85 = dma.hbm_to_vmem [thread:$0]  %s5, 1024, %s80, [#allocation14], 64, 64, 4
    $region25: #{encoder_forward.8} parent=1 // pred_fallthru
      _
    // Predicated region
    $region26: #{encoder_forward.8} parent=1 // pred_check
      _
    $region27: #{encoder_forward.8} parent=1 // pred_check_branch
      %87 = sbr.rel (0) target = $region29
    $region28: #{encoder_forward.8} parent=1 // pred_region
      %s89 = ssub.s32 16, 16
      %90 = vsyncadd [#allocation14], %s89
      %s92 = sshll.u32 [#allocation15], 4
      %s93 = int_to_ptr.vmem [resolvable:$true] %s92
      %95 = dma.hbm_to_vmem [thread:$0]  %s6, 16, %s93, [#allocation14]
    $region29: #{encoder_forward.8} parent=1 // pred_fallthru
      _
    // Predicated region
    $region30: #{encoder_forward.8} parent=1 // pred_check
      _
    $region31: #{encoder_forward.8} parent=1 // pred_check_branch
      %97 = sbr.rel (0) target = $region33
    $region32: #{encoder_forward.8} parent=1 // pred_region
      %s99 = ssub.s32 16, 16
      %100 = vsyncadd [#allocation17], %s99
      %s102 = sshll.u32 [#allocation16], 4
      %s103 = int_to_ptr.vmem [resolvable:$true] %s102
      %105 = dma.hbm_to_vmem [thread:$0]  %s7, 16, %s103, [#allocation17]
    $region33: #{encoder_forward.8} parent=1 // pred_fallthru
      _
    // Predicated region
    $region34: #{encoder_forward.8} parent=1 // pred_check
      _
    $region35: #{encoder_forward.8} parent=1 // pred_check_branch
      %107 = sbr.rel (0) target = $region37
    $region36: #{encoder_forward.8} parent=1 // pred_region
      %s109 = ssub.s32 16, 16
      %110 = vsyncadd [#allocation17], %s109
      %s112 = sshll.u32 [#allocation18], 4
      %s113 = int_to_ptr.vmem [resolvable:$true] %s112
      %115 = dma.hbm_to_vmem [thread:$0]  %s8, 16, %s113, [#allocation17]
    $region37: #{encoder_forward.8} parent=1 // pred_fallthru
      _
    // Predicated region
    $region38: #{encoder_forward.8} parent=1 // pred_check
      _
    $region39: #{encoder_forward.8} parent=1 // pred_check_branch
      %117 = sbr.rel (0) target = $region41
    $region40: #{encoder_forward.8} parent=1 // pred_region
      %118 = dma.done [#allocation5], 256
    $region41: #{encoder_forward.8} parent=1 // pred_fallthru
      _
    // Predicated region
    $region42: #{encoder_forward.8} parent=1 // pred_check
      _
    $region43: #{encoder_forward.8} parent=1 // pred_check_branch
      %120 = sbr.rel (0) target = $region45
    $region44: #{encoder_forward.8} parent=1 // pred_region
      %121 = dma.done [#allocation8], 16
    $region45: #{encoder_forward.8} parent=1 // pred_fallthru
      _
    // Predicated region
    $region46: #{encoder_forward.8} parent=1 // pred_check
      _
    $region47: #{encoder_forward.8} parent=1 // pred_check_branch
      %123 = sbr.rel (0) target = $region49
    $region48: #{encoder_forward.8} parent=1 // pred_region
      %124 = dma.done [#allocation8], 16
    $region49: #{encoder_forward.8} parent=1 // pred_fallthru
      _
    // Predicated region
    $region50: #{encoder_forward.8} parent=1 // pred_check
      _
    $region51: #{encoder_forward.8} parent=1 // pred_check_branch
      %126 = sbr.rel (0) target = $region53
    $region52: #{encoder_forward.8} parent=1 // pred_region
      %127 = dma.done [#allocation11], 256
    $region53: #{encoder_forward.8} parent=1 // pred_fallthru
      _
    // Predicated region
    $region54: #{encoder_forward.8} parent=1 // pred_check
      _
    $region55: #{encoder_forward.8} parent=1 // pred_check_branch
      %129 = sbr.rel (0) target = $region57
    $region56: #{encoder_forward.8} parent=1 // pred_region
      %130 = dma.done [#allocation11], 16
    $region57: #{encoder_forward.8} parent=1 // pred_fallthru
      _
    // Predicated region
    $region58: #{encoder_forward.8} parent=1 // pred_check
      _
    $region59: #{encoder_forward.8} parent=1 // pred_check_branch
      %132 = sbr.rel (0) target = $region61
    $region60: #{encoder_forward.8} parent=1 // pred_region
      %133 = dma.done [#allocation14], 1024
    $region61: #{encoder_forward.8} parent=1 // pred_fallthru
      _
    // Predicated region
    $region62: #{encoder_forward.8} parent=1 // pred_check
      _
    $region63: #{encoder_forward.8} parent=1 // pred_check_branch
      %135 = sbr.rel (0) target = $region65
    $region64: #{encoder_forward.8} parent=1 // pred_region
      %136 = dma.done [#allocation14], 16
    $region65: #{encoder_forward.8} parent=1 // pred_fallthru
      _
    // Predicated region
    $region66: #{encoder_forward.8} parent=1 // pred_check
      _
    $region67: #{encoder_forward.8} parent=1 // pred_check_branch
      %138 = sbr.rel (0) target = $region69
    $region68: #{encoder_forward.8} parent=1 // pred_region
      %139 = dma.done [#allocation17], 16
    $region69: #{encoder_forward.8} parent=1 // pred_fallthru
      _
    // Predicated region
    $region70: #{encoder_forward.8} parent=1 // pred_check
      _
    $region71: #{encoder_forward.8} parent=1 // pred_check_branch
      %141 = sbr.rel (0) target = $region73
    $region72: #{encoder_forward.8} parent=1 // pred_region
      %142 = dma.done [#allocation17], 16
    $region73: #{encoder_forward.8} parent=1 // pred_fallthru
      _
    %p144 = scmp.eq.s32.totalorder 0, 0
    // Predicated region
    $region74: #{encoder_forward.8} parent=1 // pred_check
      %p145 = pneg %p144
    $region75: #{encoder_forward.8} parent=1 // pred_check_branch
      %147 = sbr.rel (%p145) target = $region77
    $region76: #{encoder_forward.8} parent=1 // pred_region
      %v148 = vld [vmem:[#allocation4] sm:$0xff]
      %v149 = vld [vmem:[#allocation4 + $0x8] sm:$0xff]
      %v150 = vld [vmem:[#allocation7] sm:$0x1]
      %v151 = vld [vmem:[#allocation9] sm:$0x1]
      %vm152 = vcmask 261120
      %v153 = vsel %vm152, %v148, 0.0
      %154 = vadd.xlane.f32.xlu0 %v153
      %v155 = vpop.xlane.xlu0 %154
      %v156 = vsel %vm152, %v149, 0.0
      %157 = vadd.xlane.f32.xlu0 %v156
      %v158 = vpop.xlane.xlu0 %157
      %v159 = vrcp.pop 32.0
      %v160 = vmul.f32 %v155, %v159
      %v161 = vmul.f32 %v158, %v159
      %v162 = vsub.f32 %v148, %v160
      %v163 = vsub.f32 %v149, %v161
      %v164 = vmul.f32 %v162, %v162
      %v165 = vmul.f32 %v163, %v163
      %v166 = vsel %vm152, %v164, 0.0
      %167 = vadd.xlane.f32.xlu0 %v166
      %v168 = vpop.xlane.xlu0 %167
      %v169 = vsel %vm152, %v165, 0.0
      %170 = vadd.xlane.f32.xlu0 %v169
      %v171 = vpop.xlane.xlu0 %170
      %v172 = vmul.f32 %v168, %v159
      %v173 = vmul.f32 %v171, %v159
      %v174 = vadd.f32 %v172, 1e-05
      %v175 = vadd.f32 %v173, 1e-05
      %v176 = vrsqrt.pop %v174
      %v177 = vrsqrt.pop %v175
      %v178 = vmul.f32 %v162, %v176
      %v179 = vmul.f32 %v163, %v177
      %v181 = vlaneseq
      %v182 = vshrl.u32 %v181, 7
      %v183 = vsub.s32 0, %v182
      %v184 = vrot.slane %v150, %v183
      %v186 = vmul.f32 %v178, %v184
      %v187 = vmul.f32 %v179, %v184
      %v189 = vlaneseq
      %v190 = vshrl.u32 %v189, 7
      %v191 = vsub.s32 0, %v190
      %v192 = vrot.slane %v151, %v191
      %v194 = vadd.f32 %v186, %v192
      %v195 = vadd.f32 %v187, %v192
      %v196 = vpack.c.bf16 %v195, %v194
      %197 = vst.msk [vmem:[#allocation2] sm:$0xff] %vm152, %v196
      %v198 = vld [vmem:[#allocation15] sm:$0x1]
      %v200 = vlaneseq
      %v201 = vshrl.u32 %v200, 7
      %v202 = vsub.s32 0, %v201
      %v203 = vrot.slane %v198, %v202
      %v205 = vadd.f32 %v148, %v203
      %v206 = vadd.f32 %v149, %v203
      %207 = vst.msk [vmem:[#allocation3] sm:$0xff] %vm152, %v205
      %208 = vst.msk [vmem:[#allocation3 + $0x8] sm:$0xff] %vm152, %v206
    $region77: #{encoder_forward.8} parent=1 // pred_fallthru
      _
    %v209 = vld [vmem:[#allocation2] sm:$0xff]
    %v210 = vld [vmem:[#allocation10] sm:$0xf]
    %v211 = vld [vmem:[#allocation10 + $0x4] sm:$0xf]
    %v212 = vld [vmem:[#allocation10 + $0x8] sm:$0xf]
    %v213 = vld [vmem:[#allocation10 + $0xc] sm:$0xf]
    %v214 = vld [vmem:[#allocation12] sm:$0x1]
    %v216 = vlaneseq
    %v217 = vshrl.u32 %v216, 7
    %v218 = vsub.s32 0, %v217
    %v219 = vrot.slane %v214, %v218
    %v225 = vunpack.c.l.b16 %v210
    %v226 = vunpack.c.l.b16 %v211
    %v227 = vunpack.c.l.b16 %v212
    %v228 = vunpack.c.l.b16 %v213
    %v229 = vpack.c.b16 %v226, %v225
    %v230 = vpack.c.b16 %v228, %v227
    %vm233 = vcmask 261120
    %v235 = vsel %vm233, %v209, 0
    %237 = vmatprep.subr.bf16.mxu0 0
    %238 = vmatpush1.bf16.msra.mxu0 %v229
    %239 = vmatprep.subr.bf16.mxu0 0
    %240 = vmatpush1.bf16.msra.mxu0 %v230
    %241 = vmatprep.subr.bf16.mxu0 0
    %242 = vmatpush1.bf16.msra.mxu0 0
    %243 = vmatprep.subr.bf16.mxu0 0
    %244 = vmatpush1.bf16.msra.mxu0 0
    %245 = vmatprep.subr.bf16.mxu0 0
    %246 = vmatpush1.bf16.msra.mxu0 0
    %247 = vmatprep.subr.bf16.mxu0 0
    %248 = vmatpush1.bf16.msra.mxu0 0
    %249 = vmatprep.subr.bf16.mxu0 0
    %250 = vmatpush1.bf16.msra.mxu0 0
    %251 = vmatprep.subr.bf16.mxu0 0
    %252 = vmatpush1.bf16.msra.mxu0 0
    %253 = vmatprep.subr.bf16.mxu0 0
    %254 = vmatpush1.bf16.msra.mxu0 0
    %255 = vmatprep.subr.bf16.mxu0 0
    %256 = vmatpush1.bf16.msra.mxu0 0
    %257 = vmatprep.subr.bf16.mxu0 0
    %258 = vmatpush1.bf16.msra.mxu0 0
    %259 = vmatprep.subr.bf16.mxu0 0
    %260 = vmatpush1.bf16.msra.mxu0 0
    %261 = vmatprep.subr.bf16.mxu0 0
    %262 = vmatpush1.bf16.msra.mxu0 0
    %263 = vmatprep.subr.bf16.mxu0 0
    %264 = vmatpush1.bf16.msra.mxu0 0
    %265 = vmatprep.subr.bf16.mxu0 0
    %266 = vmatpush1.bf16.msra.mxu0 0
    %267 = vmatprep.subr.bf16.mxu0 0
    %268 = vmatpush1.bf16.msra.mxu0 0
    %269 = vmatprep.mubr.bf16.mxu0 0
    %270 = vmatmul.mubr.bf16.gmra.mrb[0].mxu0 %v235
    %v271 = vpop.f32.mrb[0].mxu0
    %v272 = vadd.f32 %v219, %v271
    %v273 = vpop.f32.mrb[0].mxu0
    %v274 = vpop.f32.mrb[0].mxu0
    %v275 = vadd.f32 %v219, %v274
    %v276 = vpop.f32.mrb[0].mxu0
    %277 = vdwg.mxu0
    %v278 = vmax.f32 %v272, 0.0
    %v279 = vmax.f32 %v275, 0.0
    %v280 = vld [vmem:[#allocation3] sm:$0xff]
    %v281 = vld [vmem:[#allocation3 + $0x8] sm:$0xff]
    %v282 = vpack.c.bf16 %v279, %v278
    %v283 = vld [vmem:[#allocation13] sm:$0xf]
    %v284 = vld [vmem:[#allocation13 + $0x4] sm:$0xf]
    %v285 = vld [vmem:[#allocation13 + $0x8] sm:$0xf]
    %v286 = vld [vmem:[#allocation13 + $0xc] sm:$0xf]
    %v287 = vld [vmem:[#allocation13 + $0x10] sm:$0xf]
    %v288 = vld [vmem:[#allocation13 + $0x14] sm:$0xf]
    %v289 = vld [vmem:[#allocation13 + $0x18] sm:$0xf]
    %v290 = vld [vmem:[#allocation13 + $0x1c] sm:$0xf]
    %v291 = vld [vmem:[#allocation13 + $0x20] sm:$0xf]
    %v292 = vld [vmem:[#allocation13 + $0x24] sm:$0xf]
    %v293 = vld [vmem:[#allocation13 + $0x28] sm:$0xf]
    %v294 = vld [vmem:[#allocation13 + $0x2c] sm:$0xf]
    %v295 = vld [vmem:[#allocation13 + $0x30] sm:$0xf]
    %v296 = vld [vmem:[#allocation13 + $0x34] sm:$0xf]
    %v297 = vld [vmem:[#allocation13 + $0x38] sm:$0xf]
    %v298 = vld [vmem:[#allocation13 + $0x3c] sm:$0xf]
    %v315 = vunpack.c.l.b16 %v283
    %v316 = vunpack.c.l.b16 %v284
    %v317 = vunpack.c.l.b16 %v285
    %v318 = vunpack.c.l.b16 %v286
    %v319 = vunpack.c.l.b16 %v287
    %v320 = vunpack.c.l.b16 %v288
    %v321 = vunpack.c.l.b16 %v289
    %v322 = vunpack.c.l.b16 %v290
    %v323 = vunpack.c.l.b16 %v291
    %v324 = vunpack.c.l.b16 %v292
    %v325 = vunpack.c.l.b16 %v293
    %v326 = vunpack.c.l.b16 %v294
    %v327 = vunpack.c.l.b16 %v295
    %v328 = vunpack.c.l.b16 %v296
    %v329 = vunpack.c.l.b16 %v297
    %v330 = vunpack.c.l.b16 %v298
    %v331 = vpack.c.b16 %v316, %v315
    %v332 = vpack.c.b16 %v318, %v317
    %v333 = vpack.c.b16 %v320, %v319
    %v334 = vpack.c.b16 %v322, %v321
    %v335 = vpack.c.b16 %v324, %v323
    %v336 = vpack.c.b16 %v326, %v325
    %v337 = vpack.c.b16 %v328, %v327
    %v338 = vpack.c.b16 %v330, %v329
    %347 = vmatprep.subr.bf16.mxu0 0
    %348 = vmatpush1.bf16.msra.mxu0 %v331
    %349 = vmatprep.subr.bf16.mxu0 0
    %350 = vmatpush1.bf16.msra.mxu0 %v332
    %351 = vmatprep.subr.bf16.mxu0 0
    %352 = vmatpush1.bf16.msra.mxu0 %v333
    %353 = vmatprep.subr.bf16.mxu0 0
    %354 = vmatpush1.bf16.msra.mxu0 %v334
    %355 = vmatprep.subr.bf16.mxu0 0
    %356 = vmatpush1.bf16.msra.mxu0 %v335
    %357 = vmatprep.subr.bf16.mxu0 0
    %358 = vmatpush1.bf16.msra.mxu0 %v336
    %359 = vmatprep.subr.bf16.mxu0 0
    %360 = vmatpush1.bf16.msra.mxu0 %v337
    %361 = vmatprep.subr.bf16.mxu0 0
    %362 = vmatpush1.bf16.msra.mxu0 %v338
    %363 = vmatprep.subr.bf16.mxu0 0
    %364 = vmatpush1.bf16.msra.mxu0 0
    %365 = vmatprep.subr.bf16.mxu0 0
    %366 = vmatpush1.bf16.msra.mxu0 0
    %367 = vmatprep.subr.bf16.mxu0 0
    %368 = vmatpush1.bf16.msra.mxu0 0
    %369 = vmatprep.subr.bf16.mxu0 0
    %370 = vmatpush1.bf16.msra.mxu0 0
    %371 = vmatprep.subr.bf16.mxu0 0
    %372 = vmatpush1.bf16.msra.mxu0 0
    %373 = vmatprep.subr.bf16.mxu0 0
    %374 = vmatpush1.bf16.msra.mxu0 0
    %375 = vmatprep.subr.bf16.mxu0 0
    %376 = vmatpush1.bf16.msra.mxu0 0
    %377 = vmatprep.subr.bf16.mxu0 0
    %378 = vmatpush1.bf16.msra.mxu0 0
    %379 = vmatprep.mubr.bf16.mxu0 0
    %380 = vmatmul.mubr.bf16.gmra.mrb[0].mxu0 %v282
    %v381 = vpop.f32.mrb[0].mxu0
    %v382 = vadd.f32 0.0, %v381
    %v383 = vpop.f32.mrb[0].mxu0
    %v384 = vpop.f32.mrb[0].mxu0
    %v385 = vadd.f32 0.0, %v384
    %v386 = vpop.f32.mrb[0].mxu0
    %387 = vdwg.mxu0
    %v388 = vadd.f32 %v280, %v382
    %v389 = vadd.f32 %v281, %v385
    %390 = vst.msk [vmem:[#allocation3] sm:$0xff] %vm233, %v388
    %391 = vst.msk [vmem:[#allocation3 + $0x8] sm:$0xff] %vm233, %v389
    // Predicated region
    $region78: #{encoder_forward.8} parent=1 // pred_check
      %p392 = pneg %p144
    $region79: #{encoder_forward.8} parent=1 // pred_check_branch
      %394 = sbr.rel (%p392) target = $region81
    $region80: #{encoder_forward.8} parent=1 // pred_region
      %v395 = vld [vmem:[#allocation3] sm:$0xff]
      %v396 = vld [vmem:[#allocation3 + $0x8] sm:$0xff]
      %397 = vst.msk [vmem:[#allocation19] sm:$0xff] %vm233, %v395
      %398 = vst.msk [vmem:[#allocation19 + $0x8] sm:$0xff] %vm233, %v396
    $region81: #{encoder_forward.8} parent=1 // pred_fallthru
      _
    // Predicated region
    $region82: #{encoder_forward.8} parent=1 // pred_check
      _
    $region83: #{encoder_forward.8} parent=1 // pred_check_branch
      %400 = sbr.rel (0) target = $region85
    $region84: #{encoder_forward.8} parent=1 // pred_region
      %s402 = ssub.s32 256, 256
      %403 = vsyncadd [#allocation6], %s402
      %s404 = sshll.u32 [#allocation19], 4
      %s405 = int_to_ptr.vmem [resolvable:$true] %s404
      %410 = dma.vmem_to_hbm [thread:$0]  %s405, 256, %s9, [#allocation6], 128, 128, 8
    $region85: #{encoder_forward.8} parent=1 // pred_fallthru
      _
    // Predicated region
    $region86: #{encoder_forward.8} parent=1 // pred_check
      _
    $region87: #{encoder_forward.8} parent=1 // pred_check_branch
      %412 = sbr.rel (0) target = $region89
    $region88: #{encoder_forward.8} parent=1 // pred_region
      %413 = dma.done [#allocation6], 256
    $region89: #{encoder_forward.8} parent=1 // pred_fallthru
      _
    %414 = vsyncpa [#allocation5], 1
    %415 = vsyncpa [#allocation8], 1
    %416 = vsyncpa [#allocation11], 1
    %417 = vsyncpa [#allocation14], 1
    %418 = vsyncpa [#allocation17], 1
    %419 = vsyncpa [#allocation6], 1

// kernel: encoder_forward.11
$region0: #{encoder_forward.11}
  #allocation0 [shape = 'u32[]', space=smem, size = 0x4, offset = 0x4, fixed_abs, tag = 'smem constant byte address 0x4 - core index']
  #allocation1 [shape = 'u32[144,128]{1,0:T(1,128)}', space=vmem, size = 0x12000, scoped, tag = 'internal scratch']
  #allocation2 [shape = 'bf16[16,32]{1,0:T(16,128)(2,1)}', space=vmem, size = 0x1000, scoped, tag = 'scratch operand']
  #allocation3 [shape = 'f32[16,32]{1,0:T(8,128)}', space=vmem, size = 0x2000, scoped, tag = 'scratch operand']
  %s0 = inlined_call_operand.hbm [shape: f32[16,32], index: 0, kind: input, shape index: {}]
  %s1 = inlined_call_operand.hbm [shape: f32[1,32], index: 1, kind: input, shape index: {}]
  %s2 = inlined_call_operand.hbm [shape: f32[1,32], index: 2, kind: input, shape index: {}]
  %s3 = inlined_call_operand.hbm [shape: bf16[32,128], index: 3, kind: input, shape index: {}]
  %s4 = inlined_call_operand.hbm [shape: f32[1,128], index: 4, kind: input, shape index: {}]
  %s5 = inlined_call_operand.hbm [shape: bf16[128,32], index: 5, kind: input, shape index: {}]
  %s6 = inlined_call_operand.hbm [shape: f32[1,32], index: 6, kind: input, shape index: {}]
  %s7 = inlined_call_operand.hbm [shape: f32[1,32], index: 7, kind: input, shape index: {}]
  %s8 = inlined_call_operand.hbm [shape: f32[1,32], index: 8, kind: input, shape index: {}]
  %s9 = inlined_call_operand.hbm [shape: f32[16,32], index: 9, kind: output, shape index: {}]
  %s10 = sld [smem:[#allocation0]]
  $region90: #{encoder_forward.11} parent=0
    _
  %s12 = ssub.s32 1, %s10
  %s13 = scalar_select 0, %s12, %s10
  $region1: #{encoder_forward.11} parent=0
    #allocation4 [shape = 'u8[8192]{0}', space=vmem, size = 0x2000, scoped, tag = 'input window, operand 0, single buffered']
    #allocation5 [shape = 's32[1]{0}', space=sflag, size = 0x4, scoped, tag = 'scoped memory for encoder_forward.11']
    #allocation6 [shape = 's32[1]{0}', space=sflag, size = 0x4, scoped, tag = 'scoped memory for encoder_forward.11']
    #allocation7 [shape = 'u8[512]{0}', space=vmem, size = 0x400, scoped, tag = 'input window, operand 1, single buffered']
    #allocation8 [shape = 's32[1]{0}', space=sflag, size = 0x4, scoped, tag = 'scoped memory for encoder_forward.11']
    #allocation9 [shape = 'u8[512]{0}', space=vmem, size = 0x400, scoped, tag = 'input window, operand 2, single buffered']
    #allocation10 [shape = 'u8[8192]{0}', space=vmem, size = 0x2000, scoped, tag = 'input window, operand 3, single buffered']
    #allocation11 [shape = 's32[1]{0}', space=sflag, size = 0x4, scoped, tag = 'scoped memory for encoder_forward.11']
    #allocation12 [shape = 'u8[512]{0}', space=vmem, size = 0x400, scoped, tag = 'input window, operand 4, single buffered']
    #allocation13 [shape = 'u8[32768]{0}', space=vmem, size = 0x8000, scoped, tag = 'input window, operand 5, single buffered']
    #allocation14 [shape = 's32[1]{0}', space=sflag, size = 0x4, scoped, tag = 'scoped memory for encoder_forward.11']
    #allocation15 [shape = 'u8[512]{0}', space=vmem, size = 0x400, scoped, tag = 'input window, operand 6, single buffered']
    #allocation16 [shape = 'u8[512]{0}', space=vmem, size = 0x400, scoped, tag = 'input window, operand 7, single buffered']
    #allocation17 [shape = 's32[1]{0}', space=sflag, size = 0x4, scoped, tag = 'scoped memory for encoder_forward.11']
    #allocation18 [shape = 'u8[512]{0}', space=vmem, size = 0x400, scoped, tag = 'input window, operand 8, single buffered']
    #allocation19 [shape = 'u8[8192]{0}', space=vmem, size = 0x2000, scoped, tag = 'output window, operand 0, single buffered']
    %14 = vsyncpa [#allocation5], 0
    %15 = vsyncpa [#allocation8], 0
    %16 = vsyncpa [#allocation11], 0
    %17 = vsyncpa [#allocation14], 0
    %18 = vsyncpa [#allocation17], 0
    %19 = vsyncpa [#allocation6], 0
    // Predicated region
    $region2: #{encoder_forward.11} parent=1 // pred_check
      _
    $region3: #{encoder_forward.11} parent=1 // pred_check_branch
      %21 = sbr.rel (0) target = $region5
    $region4: #{encoder_forward.11} parent=1 // pred_region
      %s23 = ssub.s32 256, 256
      %24 = vsyncadd [#allocation5], %s23
      %s25 = sshll.u32 [#allocation4], 4
      %s26 = int_to_ptr.vmem [resolvable:$true] %s25
      %31 = dma.hbm_to_vmem [thread:$0]  %s0, 256, %s26, [#allocation5], 128, 128, 8
    $region5: #{encoder_forward.11} parent=1 // pred_fallthru
      _
    // Predicated region
    $region6: #{encoder_forward.11} parent=1 // pred_check
      _
    $region7: #{encoder_forward.11} parent=1 // pred_check_branch
      %33 = sbr.rel (0) target = $region9
    $region8: #{encoder_forward.11} parent=1 // pred_region
      %s35 = ssub.s32 16, 16
      %36 = vsyncadd [#allocation8], %s35
      %s38 = sshll.u32 [#allocation7], 4
      %s39 = int_to_ptr.vmem [resolvable:$true] %s38
      %41 = dma.hbm_to_vmem [thread:$0]  %s1, 16, %s39, [#allocation8]
    $region9: #{encoder_forward.11} parent=1 // pred_fallthru
      _
    // Predicated region
    $region10: #{encoder_forward.11} parent=1 // pred_check
      _
    $region11: #{encoder_forward.11} parent=1 // pred_check_branch
      %43 = sbr.rel (0) target = $region13
    $region12: #{encoder_forward.11} parent=1 // pred_region
      %s45 = ssub.s32 16, 16
      %46 = vsyncadd [#allocation8], %s45
      %s48 = sshll.u32 [#allocation9], 4
      %s49 = int_to_ptr.vmem [resolvable:$true] %s48
      %51 = dma.hbm_to_vmem [thread:$0]  %s2, 16, %s49, [#allocation8]
    $region13: #{encoder_forward.11} parent=1 // pred_fallthru
      _
    // Predicated region
    $region14: #{encoder_forward.11} parent=1 // pred_check
      _
    $region15: #{encoder_forward.11} parent=1 // pred_check_branch
      %53 = sbr.rel (0) target = $region17
    $region16: #{encoder_forward.11} parent=1 // pred_region
      %s55 = ssub.s32 256, 256
      %56 = vsyncadd [#allocation11], %s55
      %s57 = sshll.u32 [#allocation10], 4
      %s58 = int_to_ptr.vmem [resolvable:$true] %s57
      %63 = dma.hbm_to_vmem [thread:$0]  %s3, 256, %s58, [#allocation11], 64, 64, 4
    $region17: #{encoder_forward.11} parent=1 // pred_fallthru
      _
    // Predicated region
    $region18: #{encoder_forward.11} parent=1 // pred_check
      _
    $region19: #{encoder_forward.11} parent=1 // pred_check_branch
      %65 = sbr.rel (0) target = $region21
    $region20: #{encoder_forward.11} parent=1 // pred_region
      %s67 = ssub.s32 16, 16
      %68 = vsyncadd [#allocation11], %s67
      %s70 = sshll.u32 [#allocation12], 4
      %s71 = int_to_ptr.vmem [resolvable:$true] %s70
      %73 = dma.hbm_to_vmem [thread:$0]  %s4, 16, %s71, [#allocation11]
    $region21: #{encoder_forward.11} parent=1 // pred_fallthru
      _
    // Predicated region
    $region22: #{encoder_forward.11} parent=1 // pred_check
      _
    $region23: #{encoder_forward.11} parent=1 // pred_check_branch
      %75 = sbr.rel (0) target = $region25
    $region24: #{encoder_forward.11} parent=1 // pred_region
      %s77 = ssub.s32 1024, 1024
      %78 = vsyncadd [#allocation14], %s77
      %s79 = sshll.u32 [#allocation13], 4
      %s80 = int_to_ptr.vmem [resolvable:$true] %s79
      %85 = dma.hbm_to_vmem [thread:$0]  %s5, 1024, %s80, [#allocation14], 64, 64, 4
    $region25: #{encoder_forward.11} parent=1 // pred_fallthru
      _
    // Predicated region
    $region26: #{encoder_forward.11} parent=1 // pred_check
      _
    $region27: #{encoder_forward.11} parent=1 // pred_check_branch
      %87 = sbr.rel (0) target = $region29
    $region28: #{encoder_forward.11} parent=1 // pred_region
      %s89 = ssub.s32 16, 16
      %90 = vsyncadd [#allocation14], %s89
      %s92 = sshll.u32 [#allocation15], 4
      %s93 = int_to_ptr.vmem [resolvable:$true] %s92
      %95 = dma.hbm_to_vmem [thread:$0]  %s6, 16, %s93, [#allocation14]
    $region29: #{encoder_forward.11} parent=1 // pred_fallthru
      _
    // Predicated region
    $region30: #{encoder_forward.11} parent=1 // pred_check
      _
    $region31: #{encoder_forward.11} parent=1 // pred_check_branch
      %97 = sbr.rel (0) target = $region33
    $region32: #{encoder_forward.11} parent=1 // pred_region
      %s99 = ssub.s32 16, 16
      %100 = vsyncadd [#allocation17], %s99
      %s102 = sshll.u32 [#allocation16], 4
      %s103 = int_to_ptr.vmem [resolvable:$true] %s102
      %105 = dma.hbm_to_vmem [thread:$0]  %s7, 16, %s103, [#allocation17]
    $region33: #{encoder_forward.11} parent=1 // pred_fallthru
      _
    // Predicated region
    $region34: #{encoder_forward.11} parent=1 // pred_check
      _
    $region35: #{encoder_forward.11} parent=1 // pred_check_branch
      %107 = sbr.rel (0) target = $region37
    $region36: #{encoder_forward.11} parent=1 // pred_region
      %s109 = ssub.s32 16, 16
      %110 = vsyncadd [#allocation17], %s109
      %s112 = sshll.u32 [#allocation18], 4
      %s113 = int_to_ptr.vmem [resolvable:$true] %s112
      %115 = dma.hbm_to_vmem [thread:$0]  %s8, 16, %s113, [#allocation17]
    $region37: #{encoder_forward.11} parent=1 // pred_fallthru
      _
    // Predicated region
    $region38: #{encoder_forward.11} parent=1 // pred_check
      _
    $region39: #{encoder_forward.11} parent=1 // pred_check_branch
      %117 = sbr.rel (0) target = $region41
    $region40: #{encoder_forward.11} parent=1 // pred_region
      %118 = dma.done [#allocation5], 256
    $region41: #{encoder_forward.11} parent=1 // pred_fallthru
      _
    // Predicated region
    $region42: #{encoder_forward.11} parent=1 // pred_check
      _
    $region43: #{encoder_forward.11} parent=1 // pred_check_branch
      %120 = sbr.rel (0) target = $region45
    $region44: #{encoder_forward.11} parent=1 // pred_region
      %121 = dma.done [#allocation8], 16
    $region45: #{encoder_forward.11} parent=1 // pred_fallthru
      _
    // Predicated region
    $region46: #{encoder_forward.11} parent=1 // pred_check
      _
    $region47: #{encoder_forward.11} parent=1 // pred_check_branch
      %123 = sbr.rel (0) target = $region49
    $region48: #{encoder_forward.11} parent=1 // pred_region
      %124 = dma.done [#allocation8], 16
    $region49: #{encoder_forward.11} parent=1 // pred_fallthru
      _
    // Predicated region
    $region50: #{encoder_forward.11} parent=1 // pred_check
      _
    $region51: #{encoder_forward.11} parent=1 // pred_check_branch
      %126 = sbr.rel (0) target = $region53
    $region52: #{encoder_forward.11} parent=1 // pred_region
      %127 = dma.done [#allocation11], 256
    $region53: #{encoder_forward.11} parent=1 // pred_fallthru
      _
    // Predicated region
    $region54: #{encoder_forward.11} parent=1 // pred_check
      _
    $region55: #{encoder_forward.11} parent=1 // pred_check_branch
      %129 = sbr.rel (0) target = $region57
    $region56: #{encoder_forward.11} parent=1 // pred_region
      %130 = dma.done [#allocation11], 16
    $region57: #{encoder_forward.11} parent=1 // pred_fallthru
      _
    // Predicated region
    $region58: #{encoder_forward.11} parent=1 // pred_check
      _
    $region59: #{encoder_forward.11} parent=1 // pred_check_branch
      %132 = sbr.rel (0) target = $region61
    $region60: #{encoder_forward.11} parent=1 // pred_region
      %133 = dma.done [#allocation14], 1024
    $region61: #{encoder_forward.11} parent=1 // pred_fallthru
      _
    // Predicated region
    $region62: #{encoder_forward.11} parent=1 // pred_check
      _
    $region63: #{encoder_forward.11} parent=1 // pred_check_branch
      %135 = sbr.rel (0) target = $region65
    $region64: #{encoder_forward.11} parent=1 // pred_region
      %136 = dma.done [#allocation14], 16
    $region65: #{encoder_forward.11} parent=1 // pred_fallthru
      _
    // Predicated region
    $region66: #{encoder_forward.11} parent=1 // pred_check
      _
    $region67: #{encoder_forward.11} parent=1 // pred_check_branch
      %138 = sbr.rel (0) target = $region69
    $region68: #{encoder_forward.11} parent=1 // pred_region
      %139 = dma.done [#allocation17], 16
    $region69: #{encoder_forward.11} parent=1 // pred_fallthru
      _
    // Predicated region
    $region70: #{encoder_forward.11} parent=1 // pred_check
      _
    $region71: #{encoder_forward.11} parent=1 // pred_check_branch
      %141 = sbr.rel (0) target = $region73
    $region72: #{encoder_forward.11} parent=1 // pred_region
      %142 = dma.done [#allocation17], 16
    $region73: #{encoder_forward.11} parent=1 // pred_fallthru
      _
    %p144 = scmp.eq.s32.totalorder 0, 0
    // Predicated region
    $region74: #{encoder_forward.11} parent=1 // pred_check
      %p145 = pneg %p144
    $region75: #{encoder_forward.11} parent=1 // pred_check_branch
      %147 = sbr.rel (%p145) target = $region77
    $region76: #{encoder_forward.11} parent=1 // pred_region
      %v148 = vld [vmem:[#allocation4] sm:$0xff]
      %v149 = vld [vmem:[#allocation4 + $0x8] sm:$0xff]
      %v150 = vld [vmem:[#allocation7] sm:$0x1]
      %v151 = vld [vmem:[#allocation9] sm:$0x1]
      %vm152 = vcmask 261120
      %v153 = vsel %vm152, %v148, 0.0
      %154 = vadd.xlane.f32.xlu0 %v153
      %v155 = vpop.xlane.xlu0 %154
      %v156 = vsel %vm152, %v149, 0.0
      %157 = vadd.xlane.f32.xlu0 %v156
      %v158 = vpop.xlane.xlu0 %157
      %v159 = vrcp.pop 32.0
      %v160 = vmul.f32 %v155, %v159
      %v161 = vmul.f32 %v158, %v159
      %v162 = vsub.f32 %v148, %v160
      %v163 = vsub.f32 %v149, %v161
      %v164 = vmul.f32 %v162, %v162
      %v165 = vmul.f32 %v163, %v163
      %v166 = vsel %vm152, %v164, 0.0
      %167 = vadd.xlane.f32.xlu0 %v166
      %v168 = vpop.xlane.xlu0 %167
      %v169 = vsel %vm152, %v165, 0.0
      %170 = vadd.xlane.f32.xlu0 %v169
      %v171 = vpop.xlane.xlu0 %170
      %v172 = vmul.f32 %v168, %v159
      %v173 = vmul.f32 %v171, %v159
      %v174 = vadd.f32 %v172, 1e-05
      %v175 = vadd.f32 %v173, 1e-05
      %v176 = vrsqrt.pop %v174
      %v177 = vrsqrt.pop %v175
      %v178 = vmul.f32 %v162, %v176
      %v179 = vmul.f32 %v163, %v177
      %v181 = vlaneseq
      %v182 = vshrl.u32 %v181, 7
      %v183 = vsub.s32 0, %v182
      %v184 = vrot.slane %v150, %v183
      %v186 = vmul.f32 %v178, %v184
      %v187 = vmul.f32 %v179, %v184
      %v189 = vlaneseq
      %v190 = vshrl.u32 %v189, 7
      %v191 = vsub.s32 0, %v190
      %v192 = vrot.slane %v151, %v191
      %v194 = vadd.f32 %v186, %v192
      %v195 = vadd.f32 %v187, %v192
      %v196 = vpack.c.bf16 %v195, %v194
      %197 = vst.msk [vmem:[#allocation2] sm:$0xff] %vm152, %v196
      %v198 = vld [vmem:[#allocation15] sm:$0x1]
      %v200 = vlaneseq
      %v201 = vshrl.u32 %v200, 7
      %v202 = vsub.s32 0, %v201
      %v203 = vrot.slane %v198, %v202
      %v205 = vadd.f32 %v148, %v203
      %v206 = vadd.f32 %v149, %v203
      %207 = vst.msk [vmem:[#allocation3] sm:$0xff] %vm152, %v205
      %208 = vst.msk [vmem:[#allocation3 + $0x8] sm:$0xff] %vm152, %v206
    $region77: #{encoder_forward.11} parent=1 // pred_fallthru
      _
    %v209 = vld [vmem:[#allocation2] sm:$0xff]
    %v210 = vld [vmem:[#allocation10] sm:$0xf]
    %v211 = vld [vmem:[#allocation10 + $0x4] sm:$0xf]
    %v212 = vld [vmem:[#allocation10 + $0x8] sm:$0xf]
    %v213 = vld [vmem:[#allocation10 + $0xc] sm:$0xf]
    %v214 = vld [vmem:[#allocation12] sm:$0x1]
    %v216 = vlaneseq
    %v217 = vshrl.u32 %v216, 7
    %v218 = vsub.s32 0, %v217
    %v219 = vrot.slane %v214, %v218
    %v225 = vunpack.c.l.b16 %v210
    %v226 = vunpack.c.l.b16 %v211
    %v227 = vunpack.c.l.b16 %v212
    %v228 = vunpack.c.l.b16 %v213
    %v229 = vpack.c.b16 %v226, %v225
    %v230 = vpack.c.b16 %v228, %v227
    %vm233 = vcmask 261120
    %v235 = vsel %vm233, %v209, 0
    %237 = vmatprep.subr.bf16.mxu0 0
    %238 = vmatpush1.bf16.msra.mxu0 %v229
    %239 = vmatprep.subr.bf16.mxu0 0
    %240 = vmatpush1.bf16.msra.mxu0 %v230
    %241 = vmatprep.subr.bf16.mxu0 0
    %242 = vmatpush1.bf16.msra.mxu0 0
    %243 = vmatprep.subr.bf16.mxu0 0
    %244 = vmatpush1.bf16.msra.mxu0 0
    %245 = vmatprep.subr.bf16.mxu0 0
    %246 = vmatpush1.bf16.msra.mxu0 0
    %247 = vmatprep.subr.bf16.mxu0 0
    %248 = vmatpush1.bf16.msra.mxu0 0
    %249 = vmatprep.subr.bf16.mxu0 0
    %250 = vmatpush1.bf16.msra.mxu0 0
    %251 = vmatprep.subr.bf16.mxu0 0
    %252 = vmatpush1.bf16.msra.mxu0 0
    %253 = vmatprep.subr.bf16.mxu0 0
    %254 = vmatpush1.bf16.msra.mxu0 0
    %255 = vmatprep.subr.bf16.mxu0 0
    %256 = vmatpush1.bf16.msra.mxu0 0
    %257 = vmatprep.subr.bf16.mxu0 0
    %258 = vmatpush1.bf16.msra.mxu0 0
    %259 = vmatprep.subr.bf16.mxu0 0
    %260 = vmatpush1.bf16.msra.mxu0 0
    %261 = vmatprep.subr.bf16.mxu0 0
    %262 = vmatpush1.bf16.msra.mxu0 0
    %263 = vmatprep.subr.bf16.mxu0 0
    %264 = vmatpush1.bf16.msra.mxu0 0
    %265 = vmatprep.subr.bf16.mxu0 0
    %266 = vmatpush1.bf16.msra.mxu0 0
    %267 = vmatprep.subr.bf16.mxu0 0
    %268 = vmatpush1.bf16.msra.mxu0 0
    %269 = vmatprep.mubr.bf16.mxu0 0
    %270 = vmatmul.mubr.bf16.gmra.mrb[0].mxu0 %v235
    %v271 = vpop.f32.mrb[0].mxu0
    %v272 = vadd.f32 %v219, %v271
    %v273 = vpop.f32.mrb[0].mxu0
    %v274 = vpop.f32.mrb[0].mxu0
    %v275 = vadd.f32 %v219, %v274
    %v276 = vpop.f32.mrb[0].mxu0
    %277 = vdwg.mxu0
    %v278 = vmax.f32 %v272, 0.0
    %v279 = vmax.f32 %v275, 0.0
    %v280 = vld [vmem:[#allocation3] sm:$0xff]
    %v281 = vld [vmem:[#allocation3 + $0x8] sm:$0xff]
    %v282 = vpack.c.bf16 %v279, %v278
    %v283 = vld [vmem:[#allocation13] sm:$0xf]
    %v284 = vld [vmem:[#allocation13 + $0x4] sm:$0xf]
    %v285 = vld [vmem:[#allocation13 + $0x8] sm:$0xf]
    %v286 = vld [vmem:[#allocation13 + $0xc] sm:$0xf]
    %v287 = vld [vmem:[#allocation13 + $0x10] sm:$0xf]
    %v288 = vld [vmem:[#allocation13 + $0x14] sm:$0xf]
    %v289 = vld [vmem:[#allocation13 + $0x18] sm:$0xf]
    %v290 = vld [vmem:[#allocation13 + $0x1c] sm:$0xf]
    %v291 = vld [vmem:[#allocation13 + $0x20] sm:$0xf]
    %v292 = vld [vmem:[#allocation13 + $0x24] sm:$0xf]
    %v293 = vld [vmem:[#allocation13 + $0x28] sm:$0xf]
    %v294 = vld [vmem:[#allocation13 + $0x2c] sm:$0xf]
    %v295 = vld [vmem:[#allocation13 + $0x30] sm:$0xf]
    %v296 = vld [vmem:[#allocation13 + $0x34] sm:$0xf]
    %v297 = vld [vmem:[#allocation13 + $0x38] sm:$0xf]
    %v298 = vld [vmem:[#allocation13 + $0x3c] sm:$0xf]
    %v315 = vunpack.c.l.b16 %v283
    %v316 = vunpack.c.l.b16 %v284
    %v317 = vunpack.c.l.b16 %v285
    %v318 = vunpack.c.l.b16 %v286
    %v319 = vunpack.c.l.b16 %v287
    %v320 = vunpack.c.l.b16 %v288
    %v321 = vunpack.c.l.b16 %v289
    %v322 = vunpack.c.l.b16 %v290
    %v323 = vunpack.c.l.b16 %v291
    %v324 = vunpack.c.l.b16 %v292
    %v325 = vunpack.c.l.b16 %v293
    %v326 = vunpack.c.l.b16 %v294
    %v327 = vunpack.c.l.b16 %v295
    %v328 = vunpack.c.l.b16 %v296
    %v329 = vunpack.c.l.b16 %v297
    %v330 = vunpack.c.l.b16 %v298
    %v331 = vpack.c.b16 %v316, %v315
    %v332 = vpack.c.b16 %v318, %v317
    %v333 = vpack.c.b16 %v320, %v319
    %v334 = vpack.c.b16 %v322, %v321
    %v335 = vpack.c.b16 %v324, %v323
    %v336 = vpack.c.b16 %v326, %v325
    %v337 = vpack.c.b16 %v328, %v327
    %v338 = vpack.c.b16 %v330, %v329
    %347 = vmatprep.subr.bf16.mxu0 0
    %348 = vmatpush1.bf16.msra.mxu0 %v331
    %349 = vmatprep.subr.bf16.mxu0 0
    %350 = vmatpush1.bf16.msra.mxu0 %v332
    %351 = vmatprep.subr.bf16.mxu0 0
    %352 = vmatpush1.bf16.msra.mxu0 %v333
    %353 = vmatprep.subr.bf16.mxu0 0
    %354 = vmatpush1.bf16.msra.mxu0 %v334
    %355 = vmatprep.subr.bf16.mxu0 0
    %356 = vmatpush1.bf16.msra.mxu0 %v335
    %357 = vmatprep.subr.bf16.mxu0 0
    %358 = vmatpush1.bf16.msra.mxu0 %v336
    %359 = vmatprep.subr.bf16.mxu0 0
    %360 = vmatpush1.bf16.msra.mxu0 %v337
    %361 = vmatprep.subr.bf16.mxu0 0
    %362 = vmatpush1.bf16.msra.mxu0 %v338
    %363 = vmatprep.subr.bf16.mxu0 0
    %364 = vmatpush1.bf16.msra.mxu0 0
    %365 = vmatprep.subr.bf16.mxu0 0
    %366 = vmatpush1.bf16.msra.mxu0 0
    %367 = vmatprep.subr.bf16.mxu0 0
    %368 = vmatpush1.bf16.msra.mxu0 0
    %369 = vmatprep.subr.bf16.mxu0 0
    %370 = vmatpush1.bf16.msra.mxu0 0
    %371 = vmatprep.subr.bf16.mxu0 0
    %372 = vmatpush1.bf16.msra.mxu0 0
    %373 = vmatprep.subr.bf16.mxu0 0
    %374 = vmatpush1.bf16.msra.mxu0 0
    %375 = vmatprep.subr.bf16.mxu0 0
    %376 = vmatpush1.bf16.msra.mxu0 0
    %377 = vmatprep.subr.bf16.mxu0 0
    %378 = vmatpush1.bf16.msra.mxu0 0
    %379 = vmatprep.mubr.bf16.mxu0 0
    %380 = vmatmul.mubr.bf16.gmra.mrb[0].mxu0 %v282
    %v381 = vpop.f32.mrb[0].mxu0
    %v382 = vadd.f32 0.0, %v381
    %v383 = vpop.f32.mrb[0].mxu0
    %v384 = vpop.f32.mrb[0].mxu0
    %v385 = vadd.f32 0.0, %v384
    %v386 = vpop.f32.mrb[0].mxu0
    %387 = vdwg.mxu0
    %v388 = vadd.f32 %v280, %v382
    %v389 = vadd.f32 %v281, %v385
    %390 = vst.msk [vmem:[#allocation3] sm:$0xff] %vm233, %v388
    %391 = vst.msk [vmem:[#allocation3 + $0x8] sm:$0xff] %vm233, %v389
    // Predicated region
    $region78: #{encoder_forward.11} parent=1 // pred_check
      %p392 = pneg %p144
    $region79: #{encoder_forward.11} parent=1 // pred_check_branch
      %394 = sbr.rel (%p392) target = $region81
    $region80: #{encoder_forward.11} parent=1 // pred_region
      %v395 = vld [vmem:[#allocation3] sm:$0xff]
      %v396 = vld [vmem:[#allocation3 + $0x8] sm:$0xff]
      %v397 = vld [vmem:[#allocation16] sm:$0x1]
      %v398 = vld [vmem:[#allocation18] sm:$0x1]
      %v399 = vsel %vm233, %v395, 0.0
      %400 = vadd.xlane.f32.xlu0 %v399
      %v401 = vpop.xlane.xlu0 %400
      %v402 = vsel %vm233, %v396, 0.0
      %403 = vadd.xlane.f32.xlu0 %v402
      %v404 = vpop.xlane.xlu0 %403
      %v405 = vrcp.pop 32.0
      %v406 = vmul.f32 %v401, %v405
      %v407 = vmul.f32 %v404, %v405
      %v408 = vsub.f32 %v395, %v406
      %v409 = vsub.f32 %v396, %v407
      %v410 = vmul.f32 %v408, %v408
      %v411 = vmul.f32 %v409, %v409
      %v412 = vsel %vm233, %v410, 0.0
      %413 = vadd.xlane.f32.xlu0 %v412
      %v414 = vpop.xlane.xlu0 %413
      %v415 = vsel %vm233, %v411, 0.0
      %416 = vadd.xlane.f32.xlu0 %v415
      %v417 = vpop.xlane.xlu0 %416
      %v418 = vmul.f32 %v414, %v405
      %v419 = vmul.f32 %v417, %v405
      %v420 = vadd.f32 %v418, 1e-05
      %v421 = vadd.f32 %v419, 1e-05
      %v422 = vrsqrt.pop %v420
      %v423 = vrsqrt.pop %v421
      %v424 = vmul.f32 %v408, %v422
      %v425 = vmul.f32 %v409, %v423
      %v427 = vlaneseq
      %v428 = vshrl.u32 %v427, 7
      %v429 = vsub.s32 0, %v428
      %v430 = vrot.slane %v397, %v429
      %v432 = vmul.f32 %v424, %v430
      %v433 = vmul.f32 %v425, %v430
      %v435 = vlaneseq
      %v436 = vshrl.u32 %v435, 7
      %v437 = vsub.s32 0, %v436
      %v438 = vrot.slane %v398, %v437
      %v440 = vadd.f32 %v432, %v438
      %v441 = vadd.f32 %v433, %v438
      %442 = vst.msk [vmem:[#allocation19] sm:$0xff] %vm233, %v440
      %443 = vst.msk [vmem:[#allocation19 + $0x8] sm:$0xff] %vm233, %v441
    $region81: #{encoder_forward.11} parent=1 // pred_fallthru
      _
    // Predicated region
    $region82: #{encoder_forward.11} parent=1 // pred_check
      _
    $region83: #{encoder_forward.11} parent=1 // pred_check_branch
      %445 = sbr.rel (0) target = $region85
    $region84: #{encoder_forward.11} parent=1 // pred_region
      %s447 = ssub.s32 256, 256
      %448 = vsyncadd [#allocation6], %s447
      %s449 = sshll.u32 [#allocation19], 4
      %s450 = int_to_ptr.vmem [resolvable:$true] %s449
      %455 = dma.vmem_to_hbm [thread:$0]  %s450, 256, %s9, [#allocation6], 128, 128, 8
    $region85: #{encoder_forward.11} parent=1 // pred_fallthru
      _
    // Predicated region
    $region86: #{encoder_forward.11} parent=1 // pred_check
      _
    $region87: #{encoder_forward.11} parent=1 // pred_check_branch
      %457 = sbr.rel (0) target = $region89
    $region88: #{encoder_forward.11} parent=1 // pred_region
      %458 = dma.done [#allocation6], 256
    $region89: #{encoder_forward.11} parent=1 // pred_fallthru
      _
    %459 = vsyncpa [#allocation5], 1
    %460 = vsyncpa [#allocation8], 1
    %461 = vsyncpa [#allocation11], 1
    %462 = vsyncpa [#allocation14], 1
    %463 = vsyncpa [#allocation17], 1
    %464 = vsyncpa [#allocation6], 1

</llo_original>
